<compile_context>
chip_gen: v5e
topology: v5e:2x2
jax: 0.10.0
libtpu: 0.0.40
codegen_flags: <defaults>
</compile_context>

<pallas_src>
import functools

import numpy as np
import jax
import jax.numpy as jnp
from jax.experimental import pallas as pl
from jax.experimental.pallas import tpu as pltpu


# ----------------------------- helpers -----------------------------

def _round_up(x: int, m: int) -> int:
    return ((x + m - 1) // m) * m


def _hann_window(n_fft: int) -> np.ndarray:
    # torch.hann_window(n_fft, periodic=True)
    n = np.arange(n_fft, dtype=np.float64)
    return 0.5 * (1.0 - np.cos(2.0 * np.pi * n / n_fft))


def _dft_matrices(n_fft: int) -> tuple[np.ndarray, np.ndarray]:
    """Window-folded real/imag DFT matrices, shape (n_fft, n_freqs), float32."""
    n_freqs = n_fft // 2 + 1
    n = np.arange(n_fft, dtype=np.float64)[:, None]
    f = np.arange(n_freqs, dtype=np.float64)[None, :]
    ang = 2.0 * np.pi * n * f / n_fft
    w = _hann_window(n_fft)[:, None]
    cos_mat = (np.cos(ang) * w).astype(np.float32)
    sin_mat = (-np.sin(ang) * w).astype(np.float32)
    return cos_mat, sin_mat


def _mel_filterbank(sample_rate: int, n_fft: int, n_mels: int) -> np.ndarray:
    """torchaudio melscale_fbanks, mel_scale='htk', norm=None. Shape (n_freqs, n_mels)."""
    n_freqs = n_fft // 2 + 1
    f_min, f_max = 0.0, sample_rate / 2.0

    def hz_to_mel(f):
        return 2595.0 * np.log10(1.0 + np.asarray(f, dtype=np.float64) / 700.0)

    def mel_to_hz(m):
        return 700.0 * (10.0 ** (np.asarray(m, dtype=np.float64) / 2595.0) - 1.0)

    all_freqs = np.linspace(0.0, sample_rate / 2.0, n_freqs)
    m_pts = np.linspace(hz_to_mel(f_min), hz_to_mel(f_max), n_mels + 2)
    f_pts = mel_to_hz(m_pts)
    f_diff = f_pts[1:] - f_pts[:-1]                      # (n_mels + 1,)
    slopes = f_pts[None, :] - all_freqs[:, None]         # (n_freqs, n_mels + 2)
    down = -slopes[:, :-2] / f_diff[:-1]
    up = slopes[:, 2:] / f_diff[1:]
    fb = np.maximum(0.0, np.minimum(down, up))
    return fb.astype(np.float32)


# ----------------------------- framing glue (plain JAX) -----------------------------

def _frame_signal(y: jax.Array, n_fft: int, hop: int) -> tuple[jax.Array, int]:
    """Reflect-pad (center=True) and extract STFT frames -> (B*num_frames, n_fft)."""
    B, T = y.shape
    pad = n_fft // 2
    y_pad = jnp.pad(y, ((0, 0), (pad, pad)), mode="reflect")
    num_frames = (T + 2 * pad - n_fft) // hop + 1
    idx = np.arange(num_frames)[:, None] * hop + np.arange(n_fft)[None, :]
    frames = y_pad[:, idx]                                # (B, F, n_fft)
    return frames.reshape(B * num_frames, n_fft), num_frames


# ----------------------------- Pallas kernel -----------------------------

def _mel_l1_kernel(frames_ref, dft_ref, fb_ref, out_ref, *,
                   row_tile, n_fft, n_freq_pad):
    """One (2, row_tile, n_fft) frame tile (y_hat slab + y slab) ->
    partial per-(sublane, mel) L1 sums accumulated into a resident (8, Mp) block."""

    @pl.when(pl.program_id(1) == 0)
    def _init():
        out_ref[...] = jnp.zeros_like(out_ref)

    # (2, R, n_fft) bf16 -> (2R, n_fft); one fused DFT matmul for both signals.
    frames = frames_ref[...].reshape(2 * row_tile, n_fft)
    spec = jnp.dot(frames, dft_ref[...],
                   preferred_element_type=jnp.float32)          # (2R, 2*Fp) f32
    re = spec[:, :n_freq_pad]
    im = spec[:, n_freq_pad:]
    mag = jnp.sqrt(re * re + im * im)                           # power=1 spectrogram (f32)

    mel = jnp.dot(mag.astype(jnp.bfloat16), fb_ref[...],
                  preferred_element_type=jnp.float32)           # (2R, Mp) f32
    logmel = jnp.log(jnp.maximum(mel, 1e-7))                    # safe_log

    # slab 0 = y_hat, slab 1 = y
    diff = jnp.abs(logmel[row_tile:, :] - logmel[:row_tile, :])  # (R, Mp)

    # Partial-reduce rows onto an (8, Mp) accumulator with cheap VPU adds;
    # the final cross-lane reduce happens once, outside the kernel.
    out_ref[...] += diff.reshape(row_tile // 8, 8, diff.shape[-1]).sum(axis=0)


def mel_l1_loss(y_hat, y, *, sample_rate=24000, n_fft=256, hop_length=64, n_mels=32,
                row_tile=256, num_chunks=2):
    assert y_hat.shape == y.shape and y_hat.ndim == 2
    assert row_tile % 8 == 0
    B, _ = y.shape
    n_freqs = n_fft // 2 + 1
    n_freq_pad = _round_up(n_freqs, 128)
    n_mels_pad = _round_up(n_mels, 128)

    # Lane-padded, window-folded [cos | sin] DFT matrix and mel filterbank.
    cos_mat, sin_mat = _dft_matrices(n_fft)
    dft = np.zeros((n_fft, 2 * n_freq_pad), np.float32)
    dft[:, :n_freqs] = cos_mat
    dft[:, n_freq_pad:n_freq_pad + n_freqs] = sin_mat
    fb = np.zeros((n_freq_pad, n_mels_pad), np.float32)
    fb[:n_freqs, :n_mels] = _mel_filterbank(sample_rate, n_fft, n_mels)

    frames_hat, num_frames = _frame_signal(y_hat.astype(jnp.float32), n_fft, hop_length)
    frames_tgt, _ = _frame_signal(y.astype(jnp.float32), n_fft, hop_length)

    # Pad rows so the grid is (num_chunks, steps). Zero frames give identical
    # log-mel (log 1e-7) for both slabs -> contribute 0 to the L1 sum; padded
    # mel columns hit zero filterbank columns -> also 0.
    n_rows = frames_hat.shape[0]
    padded_rows = _round_up(max(n_rows, 1), row_tile * num_chunks)
    pad_r = padded_rows - n_rows
    if pad_r:
        frames_hat = jnp.pad(frames_hat, ((0, pad_r), (0, 0)))
        frames_tgt = jnp.pad(frames_tgt, ((0, pad_r), (0, 0)))

    # (2, rows, n_fft): slab 0 = y_hat frames, slab 1 = y frames. bf16 matmul inputs.
    stacked = jnp.stack([frames_hat, frames_tgt], axis=0).astype(jnp.bfloat16)

    steps_per_chunk = padded_rows // row_tile // num_chunks
    grid = (num_chunks, steps_per_chunk)

    kernel = functools.partial(_mel_l1_kernel, row_tile=row_tile,
                               n_fft=n_fft, n_freq_pad=n_freq_pad)

    partials = pl.pallas_call(
        kernel,
        out_shape=jax.ShapeDtypeStruct((num_chunks * 8, n_mels_pad), jnp.float32),
        grid=grid,
        in_specs=[
            # frames: (2, row_tile, n_fft) tile, streamed along the reduction axis
            pl.BlockSpec((2, row_tile, n_fft),
                         lambda c, i: (0, c * steps_per_chunk + i, 0)),
            # window-folded [cos | sin] DFT matrix, resident
            pl.BlockSpec((n_fft, 2 * n_freq_pad), lambda c, i: (0, 0)),
            # zero-padded mel filterbank, resident
            pl.BlockSpec((n_freq_pad, n_mels_pad), lambda c, i: (0, 0)),
        ],
        # per-chunk resident accumulator block; written back once per chunk
        out_specs=pl.BlockSpec((8, n_mels_pad), lambda c, i: (c, 0)),
        compiler_params=pltpu.CompilerParams(
            dimension_semantics=("parallel", "arbitrary")),
    )(stacked, jnp.asarray(dft, jnp.bfloat16), jnp.asarray(fb, jnp.bfloat16))

    total = B * num_frames * n_mels          # true mel element count for the mean
    return jnp.sum(partials) / jnp.float32(total)


# ----------------------------- pure-JAX f32 reference (sanity check) -----------------------------

def _ref_loss(y_hat, y, *, sample_rate, n_fft, hop_length, n_mels):
    cos_mat, sin_mat = _dft_matrices(n_fft)
    mel_fb = _mel_filterbank(sample_rate, n_fft, n_mels)

    def log_mel(x):
        frames, _ = _frame_signal(x.astype(jnp.float32), n_fft, hop_length)
        re = frames @ cos_mat
        im = frames @ sin_mat
        mag = jnp.sqrt(re * re + im * im)
        mel = mag @ mel_fb
        return jnp.log(jnp.maximum(mel, 1e-7))

    return jnp.mean(jnp.abs(log_mel(y) - log_mel(y_hat)))


# ----------------------------- main -----------------------------

if __name__ == "__main__":
    # Small but module-consistent config (MelSpectrogram hyperparameters are ctor args).
    SAMPLE_RATE, N_FFT, HOP, N_MELS = 24000, 256, 64, 32
    B, T = 2, 1024

    key = jax.random.PRNGKey(0)
    k1, k2 = jax.random.split(key)
    y_hat = jax.random.normal(k1, (B, T), dtype=jnp.float32) * 0.1
    y = jax.random.normal(k2, (B, T), dtype=jnp.float32) * 0.1

    loss = mel_l1_loss(y_hat, y, sample_rate=SAMPLE_RATE, n_fft=N_FFT,
                       hop_length=HOP, n_mels=N_MELS)
    loss = jax.block_until_ready(loss)

    ref = jax.block_until_ready(
        _ref_loss(y_hat, y, sample_rate=SAMPLE_RATE, n_fft=N_FFT,
                  hop_length=HOP, n_mels=N_MELS))

    assert jnp.isfinite(loss), "loss is not finite"
    # bf16 matmul inputs with f32 accumulation: loosen tolerance slightly vs. the f32 reference.
    assert jnp.allclose(loss, ref, rtol=5e-3, atol=5e-3), (loss, ref)

    print("KERNEL_OK")
</pallas_src>

<mosaic_0001>
module attributes {stable_mosaic.version = 11 : i64} {
  func.func @_mel_l1_kernel(%arg0: i32, %arg1: i32, %arg2: memref<2x256x256xbf16, #tpu.memory_space<vmem>>, %arg3: memref<256x512xbf16, #tpu.memory_space<vmem>>, %arg4: memref<256x128xbf16, #tpu.memory_space<vmem>>, %arg5: memref<8x128xf32, #tpu.memory_space<vmem>>) attributes {dimension_semantics = [#tpu.dimension_semantics<parallel>, #tpu.dimension_semantics<arbitrary>], iteration_bounds = array<i64: 2, 1>, scalar_prefetch = 0 : i64, scratch_operands = 0 : i64, tpu.core_type = #tpu.core_type<tc>, window_params = [{transform_indices = @transform_0, window_bounds = array<i64: 2, 256, 256>}, {pipeline_mode = #tpu.pipeline_mode<synchronous>, transform_indices = @transform_1, window_bounds = array<i64: 256, 512>}, {pipeline_mode = #tpu.pipeline_mode<synchronous>, transform_indices = @transform_2, window_bounds = array<i64: 256, 128>}, {transform_indices = @transform_3, window_bounds = array<i64: 8, 128>}]} {
    %c0_i32 = arith.constant 0 : i32
    %0 = arith.cmpi eq, %arg1, %c0_i32 : i32
    %1 = arith.extui %0 : i1 to i32
    %c0_i32_0 = arith.constant 0 : i32
    %2 = arith.cmpi ne, %1, %c0_i32_0 : i32
    scf.if %2 {
      %cst_14 = arith.constant 0.000000e+00 : f32
      %28 = vector.broadcast %cst_14 : f32 to vector<8x128xf32>
      %c0_15 = arith.constant 0 : index
      %c0_16 = arith.constant 0 : index
      %29 = vector.load %arg5[%c0_15, %c0_16] : memref<8x128xf32, #tpu.memory_space<vmem>>, vector<8x128xf32>
      tpu.vector_store %arg5[%c0_15, %c0_16], %28 {strides = array<i32>} : memref<8x128xf32, #tpu.memory_space<vmem>>, vector<8x128xf32>,
    } else {
    }
    %c0 = arith.constant 0 : index
    %c0_1 = arith.constant 0 : index
    %c0_2 = arith.constant 0 : index
    %3 = vector.load %arg2[%c0, %c0_1, %c0_2] : memref<2x256x256xbf16, #tpu.memory_space<vmem>>, vector<2x256x256xbf16>
    %4 = vector.shape_cast %3 : vector<2x256x256xbf16> to vector<512x256xbf16>
    %c0_3 = arith.constant 0 : index
    %c0_4 = arith.constant 0 : index
    %5 = vector.load %arg3[%c0_3, %c0_4] : memref<256x512xbf16, #tpu.memory_space<vmem>>, vector<256x512xbf16>
    %cst = arith.constant dense<0.000000e+00> : vector<512x512xf32>
    %6 = tpu.matmul %4, %5, %cst {dimension_numbers = #tpu.dot_dimension_numbers<[1], [0], [0], [1], [0, 0, 1, 1], [], []>} : vector<512x256xbf16>, vector<256x512xbf16>, vector<512x512xf32> -> vector<512x512xf32>
    %7 = vector.extract_strided_slice %6 {offsets = [0, 0], sizes = [512, 256], strides = [1, 1]} : vector<512x512xf32> to vector<512x256xf32>
    %8 = vector.extract_strided_slice %6 {offsets = [0, 256], sizes = [512, 256], strides = [1, 1]} : vector<512x512xf32> to vector<512x256xf32>
    %9 = arith.mulf %7, %7 : vector<512x256xf32>
    %10 = arith.mulf %8, %8 : vector<512x256xf32>
    %11 = arith.addf %9, %10 : vector<512x256xf32>
    %12 = math.sqrt %11 : vector<512x256xf32>
    %13 = arith.truncf %12 : vector<512x256xf32> to vector<512x256xbf16>
    %c0_5 = arith.constant 0 : index
    %c0_6 = arith.constant 0 : index
    %14 = vector.load %arg4[%c0_5, %c0_6] : memref<256x128xbf16, #tpu.memory_space<vmem>>, vector<256x128xbf16>
    %cst_7 = arith.constant dense<0.000000e+00> : vector<512x128xf32>
    %15 = tpu.matmul %13, %14, %cst_7 {dimension_numbers = #tpu.dot_dimension_numbers<[1], [0], [0], [1], [0, 0, 1, 1], [], []>} : vector<512x256xbf16>, vector<256x128xbf16>, vector<512x128xf32> -> vector<512x128xf32>
    %cst_8 = arith.constant 1.000000e-07 : f32
    %16 = vector.broadcast %cst_8 : f32 to vector<512x128xf32>
    %17 = arith.maximumf %15, %16 : vector<512x128xf32>
    %18 = math.log %17 : vector<512x128xf32>
    %19 = vector.extract_strided_slice %18 {offsets = [256, 0], sizes = [256, 128], strides = [1, 1]} : vector<512x128xf32> to vector<256x128xf32>
    %20 = vector.extract_strided_slice %18 {offsets = [0, 0], sizes = [256, 128], strides = [1, 1]} : vector<512x128xf32> to vector<256x128xf32>
    %21 = arith.subf %19, %20 : vector<256x128xf32>
    %22 = math.absf %21 : vector<256x128xf32>
    %c0_9 = arith.constant 0 : index
    %c0_10 = arith.constant 0 : index
    %23 = vector.load %arg5[%c0_9, %c0_10] : memref<8x128xf32, #tpu.memory_space<vmem>>, vector<8x128xf32>
    %24 = vector.shape_cast %22 : vector<256x128xf32> to vector<32x8x128xf32>
    %cst_11 = arith.constant dense<0.000000e+00> : vector<8x128xf32>
    %25 = vector.multi_reduction <add>, %24, %cst_11 [0] : vector<32x8x128xf32> to vector<8x128xf32>
    %26 = arith.addf %23, %25 : vector<8x128xf32>
    %c0_12 = arith.constant 0 : index
    %c0_13 = arith.constant 0 : index
    %27 = vector.load %arg5[%c0_12, %c0_13] : memref<8x128xf32, #tpu.memory_space<vmem>>, vector<8x128xf32>
    tpu.vector_store %arg5[%c0_12, %c0_13], %26 {strides = array<i32>} : memref<8x128xf32, #tpu.memory_space<vmem>>, vector<8x128xf32>,
    return
  }
  func.func @transform_0(%arg0: i32, %arg1: i32) -> (i32, i32, i32) {
    %c1_i32 = arith.constant 1 : i32
    %0 = arith.muli %arg0, %c1_i32 : i32
    %1 = arith.addi %0, %arg1 : i32
    %c0_i32 = arith.constant 0 : i32
    %c0_i32_0 = arith.constant 0 : i32
    %c0_i32_1 = arith.constant 0 : i32
    return %c0_i32, %1, %c0_i32_0 : i32, i32, i32
  }
  func.func @transform_1(%arg0: i32, %arg1: i32) -> (i32, i32) {
    %c0_i32 = arith.constant 0 : i32
    %c0_i32_0 = arith.constant 0 : i32
    %c0_i32_1 = arith.constant 0 : i32
    return %c0_i32, %c0_i32_0 : i32, i32
  }
  func.func @transform_2(%arg0: i32, %arg1: i32) -> (i32, i32) {
    %c0_i32 = arith.constant 0 : i32
    %c0_i32_0 = arith.constant 0 : i32
    %c0_i32_1 = arith.constant 0 : i32
    return %c0_i32, %c0_i32_0 : i32, i32
  }
  func.func @transform_3(%arg0: i32, %arg1: i32) -> (i32, i32) {
    %c0_i32 = arith.constant 0 : i32
    %c0_i32_0 = arith.constant 0 : i32
    return %arg0, %c0_i32 : i32, i32
  }
}

</mosaic_0001>

<llo_original>
// kernel: tpu_custom_call.1
$region0: #{tpu_custom_call.1}
  #allocation0 [shape = 'u32[]', space=smem, size = 0x4, offset = 0x4, fixed_abs, tag = 'smem constant byte address 0x4 - core index']
  #allocation1 [shape = 'u32[72,128]{1,0:T(1,128)}', space=vmem, size = 0x9000, scoped, tag = 'internal scratch']
  #allocation9 [shape = 's32[]', space=sflag, size = 0x4, offset = 0, fixed_abs, tag = 'sflag constant byte address 0x0 - dummy sync flag']
  %s0 = inlined_call_operand.hbm [shape: bf16[2,512,256], index: 0, kind: input, shape index: {}]
  %s1 = inlined_call_operand.hbm [shape: bf16[256,512], index: 1, kind: input, shape index: {}]
  %s2 = inlined_call_operand.hbm [shape: bf16[256,128], index: 2, kind: input, shape index: {}]
  %s3 = inlined_call_operand.hbm [shape: f32[16,128], index: 3, kind: output, shape index: {}]
  %s4 = sld [smem:[#allocation0]]
  $region61: #{tpu_custom_call.1} parent=0
    _
  %s6 = ssub.s32 1, %s4
  %s7 = scalar_select 0, %s6, %s4
  $region1: #{tpu_custom_call.1} parent=0
    #allocation2 [shape = 'u8[524288]{0}', space=vmem, size = 0x80000, scoped, tag = 'input window, operand 0']
    #allocation3 [shape = 's32[2]{0}', space=sflag, size = 0x8, scoped, tag = 'scoped memory for tpu_custom_call.1']
    #allocation4 [shape = 's32[2]{0}', space=sflag, size = 0x8, scoped, tag = 'scoped memory for tpu_custom_call.1']
    #allocation5 [shape = 'u8[262144]{0}', space=vmem, size = 0x40000, scoped, tag = 'input window, operand 1, single buffered']
    #allocation6 [shape = 's32[1]{0}', space=sflag, size = 0x4, scoped, tag = 'scoped memory for tpu_custom_call.1']
    #allocation7 [shape = 'u8[65536]{0}', space=vmem, size = 0x10000, scoped, tag = 'input window, operand 2, single buffered']
    #allocation8 [shape = 'u8[8192]{0}', space=vmem, size = 0x2000, scoped, tag = 'output window, operand 0']
    %8 = vsyncpa [#allocation3], 0
    %s9 = scalar_lea.sflag [#allocation3], 1
    %10 = vsyncpa %s9, 0
    %11 = vsyncpa [#allocation6], 0
    %12 = vsyncpa [#allocation4], 0
    %s13 = scalar_lea.sflag [#allocation4], 1
    %14 = vsyncpa %s13, 0
    loop: start=0, step=1, limit=4
    $region2: #{tpu_custom_call.1} parent=1 // loop_pre_header
      _
    $region3: #{tpu_custom_call.1} parent=1 // loop_header
      %s16 = sphi 0, %s20
      %p17 = scmp.ge.s32.totalorder %s16, 4
      %s23 = sphi 0, %s35
      %s24 = sphi 0, %s31
      %s25 = sphi 0, %s23
      %s26 = sphi 0, %s24
      %s27 = sphi 0, %s25
      %s28 = sphi 0, %s26
      %s40 = sphi 0, %s42
      %s43 = sphi 0, %s40
      %s44 = sphi 0, %s43
      %s60 = sphi 0, %s44
      %s64 = sphi 0, %s64
      %s66 = sphi 0, %s64
      %s67 = sphi 0, %s66
      %s81 = sphi 0, %s67
      %s85 = sphi 0, %s85
      %s87 = sphi 0, %s85
      %s88 = sphi 0, %s87
      %s102 = sphi 0, %s88
      %s108 = sphi 0, %s110
      %s111 = sphi 0, %s108
      %s112 = sphi 0, %s111
      %s128 = sphi 0, %s112
    $region4: #{tpu_custom_call.1} parent=1 // loop_header_branch
      %19 = sbr.rel (%p17) target = $region8
    $region5: #{tpu_custom_call.1} parent=1 // loop_body
      %s21 = ssub.s32 %s16, 1
      %s22 = ssub.s32 %s16, 2
      %s29 = sadd.s32 1, %s24
      %p30 = scmp.ge.s32.totalorder %s29, 1
      %s31 = scalar_select %p30, 0, %s29
      %s32 = sadd.s32 1, %s23
      %s33 = scalar_select %p30, %s32, %s23
      %p34 = scmp.ge.s32.totalorder %s33, 2
      %s35 = scalar_select %p34, 0, %s33
      %s36 = sadd.s32 %s23, %s24
      %s37 = sadd.s32 %s35, %s31
      %s38 = ssub.s32 %s36, %s37
      %p39 = scmp.eq.s32.totalorder %s38, 0
      %s41 = sadd.s32 %s40, 1
      %s42 = scalar_select %p39, %s40, %s41
      %p45 = pneg %p39
      %p46 = scmp.eq.s32.totalorder %s16, 1
      %p47 = por %p45, %p46
      %p48 = scmp.ne.s32.totalorder %s40, %s43
      %p49 = scmp.eq.s32.totalorder %s16, 0
      %p50 = por %p48, %p49
      %p51 = scmp.ne.s32.totalorder %s40, %s43
      %p52 = scmp.eq.s32.totalorder %s21, 1
      %p53 = por %p51, %p52
      %p54 = scmp.ne.s32.totalorder %s43, %s44
      %p55 = scmp.eq.s32.totalorder %s21, 0
      %p56 = por %p54, %p55
      %p57 = scmp.ne.s32.totalorder %s43, %s44
      %p58 = scmp.eq.s32.totalorder %s22, 1
      %p59 = por %p57, %p58
      %p61 = scmp.ne.s32.totalorder %s44, %s60
      %p62 = scmp.eq.s32.totalorder %s22, 0
      %p63 = por %p61, %p62
      %s65 = sadd.s32 %s64, 1
      %p68 = scmp.eq.s32.totalorder %s16, 1
      %p69 = scmp.ne.s32.totalorder %s64, %s66
      %p70 = scmp.eq.s32.totalorder %s16, 0
      %p71 = por %p69, %p70
      %p72 = scmp.ne.s32.totalorder %s64, %s66
      %p73 = scmp.eq.s32.totalorder %s21, 1
      %p74 = por %p72, %p73
      %p75 = scmp.ne.s32.totalorder %s66, %s67
      %p76 = scmp.eq.s32.totalorder %s21, 0
      %p77 = por %p75, %p76
      %p78 = scmp.ne.s32.totalorder %s66, %s67
      %p79 = scmp.eq.s32.totalorder %s22, 1
      %p80 = por %p78, %p79
      %p82 = scmp.ne.s32.totalorder %s67, %s81
      %p83 = scmp.eq.s32.totalorder %s22, 0
      %p84 = por %p82, %p83
      %s86 = sadd.s32 %s85, 1
      %p89 = scmp.eq.s32.totalorder %s16, 1
      %p90 = scmp.ne.s32.totalorder %s85, %s87
      %p91 = scmp.eq.s32.totalorder %s16, 0
      %p92 = por %p90, %p91
      %p93 = scmp.ne.s32.totalorder %s85, %s87
      %p94 = scmp.eq.s32.totalorder %s21, 1
      %p95 = por %p93, %p94
      %p96 = scmp.ne.s32.totalorder %s87, %s88
      %p97 = scmp.eq.s32.totalorder %s21, 0
      %p98 = por %p96, %p97
      %p99 = scmp.ne.s32.totalorder %s87, %s88
      %p100 = scmp.eq.s32.totalorder %s22, 1
      %p101 = por %p99, %p100
      %p103 = scmp.ne.s32.totalorder %s88, %s102
      %p104 = scmp.eq.s32.totalorder %s22, 0
      %p105 = por %p103, %p104
      %s106 = ssub.s32 %s23, %s35
      %p107 = scmp.eq.s32.totalorder %s106, 0
      %s109 = sadd.s32 %s108, 1
      %s110 = scalar_select %p107, %s108, %s109
      %p113 = pneg %p107
      %p114 = scmp.eq.s32.totalorder %s16, 1
      %p115 = por %p113, %p114
      %p116 = scmp.ne.s32.totalorder %s108, %s111
      %p117 = scmp.eq.s32.totalorder %s16, 0
      %p118 = por %p116, %p117
      %p119 = scmp.ne.s32.totalorder %s108, %s111
      %p120 = scmp.eq.s32.totalorder %s21, 1
      %p121 = por %p119, %p120
      %p122 = scmp.ne.s32.totalorder %s111, %s112
      %p123 = scmp.eq.s32.totalorder %s21, 0
      %p124 = por %p122, %p123
      %p125 = scmp.ne.s32.totalorder %s111, %s112
      %p126 = scmp.eq.s32.totalorder %s22, 1
      %p127 = por %p125, %p126
      %p129 = scmp.ne.s32.totalorder %s112, %s128
      %p130 = scmp.eq.s32.totalorder %s22, 0
      %p131 = por %p129, %p130
      %p132 = scmp.le.s32.totalorder 1, %s16
      %p133 = scmp.lt.s32.totalorder %s16, 3
      %p134 = pnand %p132, %p133
      %p135 = pneg %p134
      // Predicated region
      $region9: #{tpu_custom_call.1} parent=5 // pred_check
        _
      $region10: #{tpu_custom_call.1} parent=5 // pred_check_branch
        %137 = sbr.rel (%p134) target = $region12
      $region11: #{tpu_custom_call.1} parent=5 // pred_region
        %s138 = ssub.s32 %s16, 1
        // Predicated region
        $region13: #{tpu_custom_call.1} parent=11 // pred_check
          %p139 = pneg %p77
        $region14: #{tpu_custom_call.1} parent=11 // pred_check_branch
          %141 = sbr.rel (%p139) target = $region16
        $region15: #{tpu_custom_call.1} parent=11 // pred_region
          %143 = vsyncadd [#allocation6], 0
          %s144 = sshll.u32 %s1, 4
          %s145 = int_to_ptr.hbm [resolvable:$true] %s144
          %s146 = sshll.u32 [#allocation5], 4
          %s147 = int_to_ptr.vmem [resolvable:$true] %s146
          %152 = dma.hbm_to_vmem [thread:$0]  %s145, 8192, %s147, [#allocation6], 256, 256, 16
        $region16: #{tpu_custom_call.1} parent=11 // pred_fallthru
          _
        // Predicated region
        $region17: #{tpu_custom_call.1} parent=11 // pred_check
          %p153 = pneg %p98
        $region18: #{tpu_custom_call.1} parent=11 // pred_check_branch
          %155 = sbr.rel (%p153) target = $region20
        $region19: #{tpu_custom_call.1} parent=11 // pred_region
          %157 = vsyncadd [#allocation6], 0
          %s158 = sshll.u32 %s2, 4
          %s159 = int_to_ptr.hbm [resolvable:$true] %s158
          %s160 = sshll.u32 [#allocation7], 4
          %s161 = int_to_ptr.vmem [resolvable:$true] %s160
          %166 = dma.hbm_to_vmem [thread:$0]  %s159, 2048, %s161, [#allocation6], 64, 64, 4
        $region20: #{tpu_custom_call.1} parent=11 // pred_fallthru
          _
      $region12: #{tpu_custom_call.1} parent=5 // pred_fallthru
        _
      %p167 = scmp.lt.s32.totalorder %s16, 2
      // Predicated region
      $region21: #{tpu_custom_call.1} parent=5 // pred_check
        %p168 = pneg %p167
      $region22: #{tpu_custom_call.1} parent=5 // pred_check_branch
        %170 = sbr.rel (%p168) target = $region24
      $region23: #{tpu_custom_call.1} parent=5 // pred_region
        // Predicated region
        $region25: #{tpu_custom_call.1} parent=23 // pred_check
          %p171 = pneg %p50
        $region26: #{tpu_custom_call.1} parent=23 // pred_check_branch
          %173 = sbr.rel (%p171) target = $region28
        $region27: #{tpu_custom_call.1} parent=23 // pred_region
          #allocation10 [shape = 'u32[6]{0}', space=smem, size = 0x18, scoped, tag = 'DMA stride descriptor']
          %s174 = sand.u32 %s40, 1
          %s175 = scalar_lea.sflag [#allocation3], %s174
          %s176 = sand.u32 %s40, 1
          %s177 = smul.addr %s176, 512
          %s178 = scalar_lea.vmem [#allocation2], %s177
          %s179 = sadd.s32 %s23, %s24
          %s180 = smul.u32 32, %s179
          %182 = vsyncadd %s175, 0
          %s183 = smul.addr %s180, 2
          %s184 = smul.addr %s183, 4
          %s185 = scalar_lea.hbm %s0, %s184
          %s187 = sshll.u32 1, 14
          %s188 = sxor.u32 4294967295, %s187
          %s190 = sld [smem:[#allocation0]]
          %s191 = sadd.s32 2, %s190
          %s193 = sshll.u32 7, 26
          %s194 = sxor.u32 4294967295, %s193
          %s195 = sand.u32 0, %s194
          %s196 = sshll.u32 %s191, 26
          %s197 = sor.u32 %s195, %s196
          %s198 = sshll.u32 %s185, 4
          %s199 = int_to_ptr.hbm [resolvable:$true] %s198
          %s200 = sshll.u32 %s178, 4
          %s201 = int_to_ptr.vmem [resolvable:$true] %s200
          %207 = sst [smem:[#allocation10]] 8192
          %s208 = scalar_lea.smem [#allocation10], 1
          %209 = sst [smem:[%s208]] 4096
          %s210 = scalar_lea.smem [#allocation10], 2
          %211 = sst [smem:[%s210]] 32
          %s212 = scalar_lea.smem [#allocation10], 3
          %213 = sst [smem:[%s212]] 128
          %s214 = scalar_lea.smem [#allocation10], 4
          %215 = sst [smem:[%s214]] 128
          %s216 = scalar_lea.smem [#allocation10], 5
          %217 = sst [smem:[%s216]] 8
          %219 = dma.general %s199, 8192, %s201, %s175, [#allocation9], [#allocation10], %s197, 0
        $region28: #{tpu_custom_call.1} parent=23 // pred_fallthru
          _
      $region24: #{tpu_custom_call.1} parent=5 // pred_fallthru
        _
      %p220 = scmp.le.s32.totalorder 1, %s16
      %p221 = scmp.lt.s32.totalorder %s16, 3
      %p222 = pnand %p220, %p221
      %p223 = pneg %p222
      // Predicated region
      $region29: #{tpu_custom_call.1} parent=5 // pred_check
        _
      $region30: #{tpu_custom_call.1} parent=5 // pred_check_branch
        %225 = sbr.rel (%p222) target = $region32
      $region31: #{tpu_custom_call.1} parent=5 // pred_region
        %s226 = ssub.s32 %s16, 1
        %s227 = sand.u32 %s43, 1
        %s228 = scalar_lea.sflag [#allocation3], %s227
        %s229 = sand.u32 %s43, 1
        %s230 = smul.addr %s229, 512
        %s231 = scalar_lea.vmem [#allocation2], %s230
        // Predicated region
        $region33: #{tpu_custom_call.1} parent=31 // pred_check
          %p232 = pneg %p56
        $region34: #{tpu_custom_call.1} parent=31 // pred_check_branch
          %234 = sbr.rel (%p232) target = $region36
        $region35: #{tpu_custom_call.1} parent=31 // pred_region
          %236 = dma.done %s228, 8192
        $region36: #{tpu_custom_call.1} parent=31 // pred_fallthru
          _
        // Predicated region
        $region37: #{tpu_custom_call.1} parent=31 // pred_check
          %p237 = pneg %p77
        $region38: #{tpu_custom_call.1} parent=31 // pred_check_branch
          %239 = sbr.rel (%p237) target = $region40
        $region39: #{tpu_custom_call.1} parent=31 // pred_region
          %241 = dma.done [#allocation6], 8192
        $region40: #{tpu_custom_call.1} parent=31 // pred_fallthru
          _
        // Predicated region
        $region41: #{tpu_custom_call.1} parent=31 // pred_check
          %p242 = pneg %p98
        $region42: #{tpu_custom_call.1} parent=31 // pred_check_branch
          %244 = sbr.rel (%p242) target = $region44
        $region43: #{tpu_custom_call.1} parent=31 // pred_region
          %246 = dma.done [#allocation6], 2048
        $region44: #{tpu_custom_call.1} parent=31 // pred_fallthru
          _
        %s247 = sand.u32 %s43, 1
        %s248 = scalar_lea.sflag [#allocation3], %s247
        %s249 = sand.u32 %s43, 1
        %s250 = smul.addr %s249, 512
        %s251 = scalar_lea.vmem [#allocation2], %s250
        %p252 = pneg %p56
        %p253 = pneg %p53
        %p254 = pneg %p77
        %p255 = pneg %p74
        %p256 = pneg %p98
        %p257 = pneg %p95
        %p258 = pneg %p124
        %p259 = pneg %p121
        %s260 = sand.u32 %s111, 1
        %s261 = scalar_lea.sflag [#allocation4], %s260
        %s262 = sand.u32 %s111, 1
        %s263 = smul.addr %s262, 8
        %s264 = scalar_lea.vmem [#allocation8], %s263
        %s265 = sadd.s32 %s25, %s26
        %s266 = smul.u32 32, %s265
        %p267 = scmp.eq.s32.totalorder %s26, 0
        // Predicated region
        $region45: #{tpu_custom_call.1} parent=31 // pred_check
          %p268 = pneg %p267
        $region46: #{tpu_custom_call.1} parent=31 // pred_check_branch
          %270 = sbr.rel (%p268) target = $region48
        $region47: #{tpu_custom_call.1} parent=31 // pred_region
          %271 = vst [vmem:[%s264] sm:$0xff] 0.0
        $region48: #{tpu_custom_call.1} parent=31 // pred_fallthru
          _
        %v272 = vld [vmem:[%s231] sm:$0xff]
        %v273 = vld [vmem:[%s231 + $0x8] sm:$0xff]
        %v274 = vld [vmem:[%s231 + $0x10] sm:$0xff]
        %v275 = vld [vmem:[%s231 + $0x18] sm:$0xff]
        %v276 = vld [vmem:[%s231 + $0x20] sm:$0xff]
        %v277 = vld [vmem:[%s231 + $0x28] sm:$0xff]
        %v278 = vld [vmem:[%s231 + $0x30] sm:$0xff]
        %v279 = vld [vmem:[%s231 + $0x38] sm:$0xff]
        %v280 = vld [vmem:[%s231 + $0x40] sm:$0xff]
        %v281 = vld [vmem:[%s231 + $0x48] sm:$0xff]
        %v282 = vld [vmem:[%s231 + $0x50] sm:$0xff]
        %v283 = vld [vmem:[%s231 + $0x58] sm:$0xff]
        %v284 = vld [vmem:[%s231 + $0x60] sm:$0xff]
        %v285 = vld [vmem:[%s231 + $0x68] sm:$0xff]
        %v286 = vld [vmem:[%s231 + $0x70] sm:$0xff]
        %v287 = vld [vmem:[%s231 + $0x78] sm:$0xff]
        %v288 = vld [vmem:[%s231 + $0x80] sm:$0xff]
        %v289 = vld [vmem:[%s231 + $0x88] sm:$0xff]
        %v290 = vld [vmem:[%s231 + $0x90] sm:$0xff]
        %v291 = vld [vmem:[%s231 + $0x98] sm:$0xff]
        %v292 = vld [vmem:[%s231 + $0xa0] sm:$0xff]
        %v293 = vld [vmem:[%s231 + $0xa8] sm:$0xff]
        %v294 = vld [vmem:[%s231 + $0xb0] sm:$0xff]
        %v295 = vld [vmem:[%s231 + $0xb8] sm:$0xff]
        %v296 = vld [vmem:[%s231 + $0xc0] sm:$0xff]
        %v297 = vld [vmem:[%s231 + $0xc8] sm:$0xff]
        %v298 = vld [vmem:[%s231 + $0xd0] sm:$0xff]
        %v299 = vld [vmem:[%s231 + $0xd8] sm:$0xff]
        %v300 = vld [vmem:[%s231 + $0xe0] sm:$0xff]
        %v301 = vld [vmem:[%s231 + $0xe8] sm:$0xff]
        %v302 = vld [vmem:[%s231 + $0xf0] sm:$0xff]
        %v303 = vld [vmem:[%s231 + $0xf8] sm:$0xff]
        %v304 = vld [vmem:[%s231 + $0x100] sm:$0xff]
        %v305 = vld [vmem:[%s231 + $0x108] sm:$0xff]
        %v306 = vld [vmem:[%s231 + $0x110] sm:$0xff]
        %v307 = vld [vmem:[%s231 + $0x118] sm:$0xff]
        %v308 = vld [vmem:[%s231 + $0x120] sm:$0xff]
        %v309 = vld [vmem:[%s231 + $0x128] sm:$0xff]
        %v310 = vld [vmem:[%s231 + $0x130] sm:$0xff]
        %v311 = vld [vmem:[%s231 + $0x138] sm:$0xff]
        %v312 = vld [vmem:[%s231 + $0x140] sm:$0xff]
        %v313 = vld [vmem:[%s231 + $0x148] sm:$0xff]
        %v314 = vld [vmem:[%s231 + $0x150] sm:$0xff]
        %v315 = vld [vmem:[%s231 + $0x158] sm:$0xff]
        %v316 = vld [vmem:[%s231 + $0x160] sm:$0xff]
        %v317 = vld [vmem:[%s231 + $0x168] sm:$0xff]
        %v318 = vld [vmem:[%s231 + $0x170] sm:$0xff]
        %v319 = vld [vmem:[%s231 + $0x178] sm:$0xff]
        %v320 = vld [vmem:[%s231 + $0x180] sm:$0xff]
        %v321 = vld [vmem:[%s231 + $0x188] sm:$0xff]
        %v322 = vld [vmem:[%s231 + $0x190] sm:$0xff]
        %v323 = vld [vmem:[%s231 + $0x198] sm:$0xff]
        %v324 = vld [vmem:[%s231 + $0x1a0] sm:$0xff]
        %v325 = vld [vmem:[%s231 + $0x1a8] sm:$0xff]
        %v326 = vld [vmem:[%s231 + $0x1b0] sm:$0xff]
        %v327 = vld [vmem:[%s231 + $0x1b8] sm:$0xff]
        %v328 = vld [vmem:[%s231 + $0x1c0] sm:$0xff]
        %v329 = vld [vmem:[%s231 + $0x1c8] sm:$0xff]
        %v330 = vld [vmem:[%s231 + $0x1d0] sm:$0xff]
        %v331 = vld [vmem:[%s231 + $0x1d8] sm:$0xff]
        %v332 = vld [vmem:[%s231 + $0x1e0] sm:$0xff]
        %v333 = vld [vmem:[%s231 + $0x1e8] sm:$0xff]
        %v334 = vld [vmem:[%s231 + $0x1f0] sm:$0xff]
        %v335 = vld [vmem:[%s231 + $0x1f8] sm:$0xff]
        %v336 = vld [vmem:[#allocation5] sm:$0xff]
        %v337 = vld [vmem:[#allocation5 + $0x8] sm:$0xff]
        %v338 = vld [vmem:[#allocation5 + $0x10] sm:$0xff]
        %v339 = vld [vmem:[#allocation5 + $0x18] sm:$0xff]
        %v340 = vld [vmem:[#allocation5 + $0x20] sm:$0xff]
        %v341 = vld [vmem:[#allocation5 + $0x28] sm:$0xff]
        %v342 = vld [vmem:[#allocation5 + $0x30] sm:$0xff]
        %v343 = vld [vmem:[#allocation5 + $0x38] sm:$0xff]
        %v344 = vld [vmem:[#allocation5 + $0x40] sm:$0xff]
        %v345 = vld [vmem:[#allocation5 + $0x48] sm:$0xff]
        %v346 = vld [vmem:[#allocation5 + $0x50] sm:$0xff]
        %v347 = vld [vmem:[#allocation5 + $0x58] sm:$0xff]
        %v348 = vld [vmem:[#allocation5 + $0x60] sm:$0xff]
        %v349 = vld [vmem:[#allocation5 + $0x68] sm:$0xff]
        %v350 = vld [vmem:[#allocation5 + $0x70] sm:$0xff]
        %v351 = vld [vmem:[#allocation5 + $0x78] sm:$0xff]
        %v352 = vld [vmem:[#allocation5 + $0x80] sm:$0xff]
        %v353 = vld [vmem:[#allocation5 + $0x88] sm:$0xff]
        %v354 = vld [vmem:[#allocation5 + $0x90] sm:$0xff]
        %v355 = vld [vmem:[#allocation5 + $0x98] sm:$0xff]
        %v356 = vld [vmem:[#allocation5 + $0xa0] sm:$0xff]
        %v357 = vld [vmem:[#allocation5 + $0xa8] sm:$0xff]
        %v358 = vld [vmem:[#allocation5 + $0xb0] sm:$0xff]
        %v359 = vld [vmem:[#allocation5 + $0xb8] sm:$0xff]
        %v360 = vld [vmem:[#allocation5 + $0xc0] sm:$0xff]
        %v361 = vld [vmem:[#allocation5 + $0xc8] sm:$0xff]
        %v362 = vld [vmem:[#allocation5 + $0xd0] sm:$0xff]
        %v363 = vld [vmem:[#allocation5 + $0xd8] sm:$0xff]
        %v364 = vld [vmem:[#allocation5 + $0xe0] sm:$0xff]
        %v365 = vld [vmem:[#allocation5 + $0xe8] sm:$0xff]
        %v366 = vld [vmem:[#allocation5 + $0xf0] sm:$0xff]
        %v367 = vld [vmem:[#allocation5 + $0xf8] sm:$0xff]
        %v368 = vld [vmem:[#allocation5 + $0x100] sm:$0xff]
        %v369 = vld [vmem:[#allocation5 + $0x108] sm:$0xff]
        %v370 = vld [vmem:[#allocation5 + $0x110] sm:$0xff]
        %v371 = vld [vmem:[#allocation5 + $0x118] sm:$0xff]
        %v372 = vld [vmem:[#allocation5 + $0x120] sm:$0xff]
        %v373 = vld [vmem:[#allocation5 + $0x128] sm:$0xff]
        %v374 = vld [vmem:[#allocation5 + $0x130] sm:$0xff]
        %v375 = vld [vmem:[#allocation5 + $0x138] sm:$0xff]
        %v376 = vld [vmem:[#allocation5 + $0x140] sm:$0xff]
        %v377 = vld [vmem:[#allocation5 + $0x148] sm:$0xff]
        %v378 = vld [vmem:[#allocation5 + $0x150] sm:$0xff]
        %v379 = vld [vmem:[#allocation5 + $0x158] sm:$0xff]
        %v380 = vld [vmem:[#allocation5 + $0x160] sm:$0xff]
        %v381 = vld [vmem:[#allocation5 + $0x168] sm:$0xff]
        %v382 = vld [vmem:[#allocation5 + $0x170] sm:$0xff]
        %v383 = vld [vmem:[#allocation5 + $0x178] sm:$0xff]
        %v384 = vld [vmem:[#allocation5 + $0x180] sm:$0xff]
        %v385 = vld [vmem:[#allocation5 + $0x188] sm:$0xff]
        %v386 = vld [vmem:[#allocation5 + $0x190] sm:$0xff]
        %v387 = vld [vmem:[#allocation5 + $0x198] sm:$0xff]
        %v388 = vld [vmem:[#allocation5 + $0x1a0] sm:$0xff]
        %v389 = vld [vmem:[#allocation5 + $0x1a8] sm:$0xff]
        %v390 = vld [vmem:[#allocation5 + $0x1b0] sm:$0xff]
        %v391 = vld [vmem:[#allocation5 + $0x1b8] sm:$0xff]
        %v392 = vld [vmem:[#allocation5 + $0x1c0] sm:$0xff]
        %v393 = vld [vmem:[#allocation5 + $0x1c8] sm:$0xff]
        %v394 = vld [vmem:[#allocation5 + $0x1d0] sm:$0xff]
        %v395 = vld [vmem:[#allocation5 + $0x1d8] sm:$0xff]
        %v396 = vld [vmem:[#allocation5 + $0x1e0] sm:$0xff]
        %v397 = vld [vmem:[#allocation5 + $0x1e8] sm:$0xff]
        %v398 = vld [vmem:[#allocation5 + $0x1f0] sm:$0xff]
        %v399 = vld [vmem:[#allocation5 + $0x1f8] sm:$0xff]
        %v464 = vunpack.c.l.b16 %v272
        %v465 = vunpack.c.h.b16 %v272
        %v466 = vunpack.c.l.b16 %v273
        %v467 = vunpack.c.h.b16 %v273
        %v468 = vunpack.c.l.b16 %v274
        %v469 = vunpack.c.h.b16 %v274
        %v470 = vunpack.c.l.b16 %v275
        %v471 = vunpack.c.h.b16 %v275
        %v472 = vunpack.c.l.b16 %v276
        %v473 = vunpack.c.h.b16 %v276
        %v474 = vunpack.c.l.b16 %v277
        %v475 = vunpack.c.h.b16 %v277
        %v476 = vunpack.c.l.b16 %v278
        %v477 = vunpack.c.h.b16 %v278
        %v478 = vunpack.c.l.b16 %v279
        %v479 = vunpack.c.h.b16 %v279
        %v480 = vunpack.c.l.b16 %v280
        %v481 = vunpack.c.h.b16 %v280
        %v482 = vunpack.c.l.b16 %v281
        %v483 = vunpack.c.h.b16 %v281
        %v484 = vunpack.c.l.b16 %v282
        %v485 = vunpack.c.h.b16 %v282
        %v486 = vunpack.c.l.b16 %v283
        %v487 = vunpack.c.h.b16 %v283
        %v488 = vunpack.c.l.b16 %v284
        %v489 = vunpack.c.h.b16 %v284
        %v490 = vunpack.c.l.b16 %v285
        %v491 = vunpack.c.h.b16 %v285
        %v492 = vunpack.c.l.b16 %v286
        %v493 = vunpack.c.h.b16 %v286
        %v494 = vunpack.c.l.b16 %v287
        %v495 = vunpack.c.h.b16 %v287
        %v496 = vunpack.c.l.b16 %v288
        %v497 = vunpack.c.h.b16 %v288
        %v498 = vunpack.c.l.b16 %v289
        %v499 = vunpack.c.h.b16 %v289
        %v500 = vunpack.c.l.b16 %v290
        %v501 = vunpack.c.h.b16 %v290
        %v502 = vunpack.c.l.b16 %v291
        %v503 = vunpack.c.h.b16 %v291
        %v504 = vunpack.c.l.b16 %v292
        %v505 = vunpack.c.h.b16 %v292
        %v506 = vunpack.c.l.b16 %v293
        %v507 = vunpack.c.h.b16 %v293
        %v508 = vunpack.c.l.b16 %v294
        %v509 = vunpack.c.h.b16 %v294
        %v510 = vunpack.c.l.b16 %v295
        %v511 = vunpack.c.h.b16 %v295
        %v512 = vunpack.c.l.b16 %v296
        %v513 = vunpack.c.h.b16 %v296
        %v514 = vunpack.c.l.b16 %v297
        %v515 = vunpack.c.h.b16 %v297
        %v516 = vunpack.c.l.b16 %v298
        %v517 = vunpack.c.h.b16 %v298
        %v518 = vunpack.c.l.b16 %v299
        %v519 = vunpack.c.h.b16 %v299
        %v520 = vunpack.c.l.b16 %v300
        %v521 = vunpack.c.h.b16 %v300
        %v522 = vunpack.c.l.b16 %v301
        %v523 = vunpack.c.h.b16 %v301
        %v524 = vunpack.c.l.b16 %v302
        %v525 = vunpack.c.h.b16 %v302
        %v526 = vunpack.c.l.b16 %v303
        %v527 = vunpack.c.h.b16 %v303
        %v528 = vunpack.c.l.b16 %v304
        %v529 = vunpack.c.h.b16 %v304
        %v530 = vunpack.c.l.b16 %v305
        %v531 = vunpack.c.h.b16 %v305
        %v532 = vunpack.c.l.b16 %v306
        %v533 = vunpack.c.h.b16 %v306
        %v534 = vunpack.c.l.b16 %v307
        %v535 = vunpack.c.h.b16 %v307
        %v536 = vunpack.c.l.b16 %v308
        %v537 = vunpack.c.h.b16 %v308
        %v538 = vunpack.c.l.b16 %v309
        %v539 = vunpack.c.h.b16 %v309
        %v540 = vunpack.c.l.b16 %v310
        %v541 = vunpack.c.h.b16 %v310
        %v542 = vunpack.c.l.b16 %v311
        %v543 = vunpack.c.h.b16 %v311
        %v544 = vunpack.c.l.b16 %v312
        %v545 = vunpack.c.h.b16 %v312
        %v546 = vunpack.c.l.b16 %v313
        %v547 = vunpack.c.h.b16 %v313
        %v548 = vunpack.c.l.b16 %v314
        %v549 = vunpack.c.h.b16 %v314
        %v550 = vunpack.c.l.b16 %v315
        %v551 = vunpack.c.h.b16 %v315
        %v552 = vunpack.c.l.b16 %v316
        %v553 = vunpack.c.h.b16 %v316
        %v554 = vunpack.c.l.b16 %v317
        %v555 = vunpack.c.h.b16 %v317
        %v556 = vunpack.c.l.b16 %v318
        %v557 = vunpack.c.h.b16 %v318
        %v558 = vunpack.c.l.b16 %v319
        %v559 = vunpack.c.h.b16 %v319
        %v560 = vunpack.c.l.b16 %v320
        %v561 = vunpack.c.h.b16 %v320
        %v562 = vunpack.c.l.b16 %v321
        %v563 = vunpack.c.h.b16 %v321
        %v564 = vunpack.c.l.b16 %v322
        %v565 = vunpack.c.h.b16 %v322
        %v566 = vunpack.c.l.b16 %v323
        %v567 = vunpack.c.h.b16 %v323
        %v568 = vunpack.c.l.b16 %v324
        %v569 = vunpack.c.h.b16 %v324
        %v570 = vunpack.c.l.b16 %v325
        %v571 = vunpack.c.h.b16 %v325
        %v572 = vunpack.c.l.b16 %v326
        %v573 = vunpack.c.h.b16 %v326
        %v574 = vunpack.c.l.b16 %v327
        %v575 = vunpack.c.h.b16 %v327
        %v576 = vunpack.c.l.b16 %v328
        %v577 = vunpack.c.h.b16 %v328
        %v578 = vunpack.c.l.b16 %v329
        %v579 = vunpack.c.h.b16 %v329
        %v580 = vunpack.c.l.b16 %v330
        %v581 = vunpack.c.h.b16 %v330
        %v582 = vunpack.c.l.b16 %v331
        %v583 = vunpack.c.h.b16 %v331
        %v584 = vunpack.c.l.b16 %v332
        %v585 = vunpack.c.h.b16 %v332
        %v586 = vunpack.c.l.b16 %v333
        %v587 = vunpack.c.h.b16 %v333
        %v588 = vunpack.c.l.b16 %v334
        %v589 = vunpack.c.h.b16 %v334
        %v590 = vunpack.c.l.b16 %v335
        %v591 = vunpack.c.h.b16 %v335
        %v592 = vpack.c.b16 %v466, %v464
        %v593 = vpack.c.b16 %v467, %v465
        %v594 = vpack.c.b16 %v470, %v468
        %v595 = vpack.c.b16 %v471, %v469
        %v596 = vpack.c.b16 %v474, %v472
        %v597 = vpack.c.b16 %v475, %v473
        %v598 = vpack.c.b16 %v478, %v476
        %v599 = vpack.c.b16 %v479, %v477
        %v600 = vpack.c.b16 %v482, %v480
        %v601 = vpack.c.b16 %v483, %v481
        %v602 = vpack.c.b16 %v486, %v484
        %v603 = vpack.c.b16 %v487, %v485
        %v604 = vpack.c.b16 %v490, %v488
        %v605 = vpack.c.b16 %v491, %v489
        %v606 = vpack.c.b16 %v494, %v492
        %v607 = vpack.c.b16 %v495, %v493
        %v608 = vpack.c.b16 %v498, %v496
        %v609 = vpack.c.b16 %v499, %v497
        %v610 = vpack.c.b16 %v502, %v500
        %v611 = vpack.c.b16 %v503, %v501
        %v612 = vpack.c.b16 %v506, %v504
        %v613 = vpack.c.b16 %v507, %v505
        %v614 = vpack.c.b16 %v510, %v508
        %v615 = vpack.c.b16 %v511, %v509
        %v616 = vpack.c.b16 %v514, %v512
        %v617 = vpack.c.b16 %v515, %v513
        %v618 = vpack.c.b16 %v518, %v516
        %v619 = vpack.c.b16 %v519, %v517
        %v620 = vpack.c.b16 %v522, %v520
        %v621 = vpack.c.b16 %v523, %v521
        %v622 = vpack.c.b16 %v526, %v524
        %v623 = vpack.c.b16 %v527, %v525
        %v624 = vpack.c.b16 %v530, %v528
        %v625 = vpack.c.b16 %v531, %v529
        %v626 = vpack.c.b16 %v534, %v532
        %v627 = vpack.c.b16 %v535, %v533
        %v628 = vpack.c.b16 %v538, %v536
        %v629 = vpack.c.b16 %v539, %v537
        %v630 = vpack.c.b16 %v542, %v540
        %v631 = vpack.c.b16 %v543, %v541
        %v632 = vpack.c.b16 %v546, %v544
        %v633 = vpack.c.b16 %v547, %v545
        %v634 = vpack.c.b16 %v550, %v548
        %v635 = vpack.c.b16 %v551, %v549
        %v636 = vpack.c.b16 %v554, %v552
        %v637 = vpack.c.b16 %v555, %v553
        %v638 = vpack.c.b16 %v558, %v556
        %v639 = vpack.c.b16 %v559, %v557
        %v640 = vpack.c.b16 %v562, %v560
        %v641 = vpack.c.b16 %v563, %v561
        %v642 = vpack.c.b16 %v566, %v564
        %v643 = vpack.c.b16 %v567, %v565
        %v644 = vpack.c.b16 %v570, %v568
        %v645 = vpack.c.b16 %v571, %v569
        %v646 = vpack.c.b16 %v574, %v572
        %v647 = vpack.c.b16 %v575, %v573
        %v648 = vpack.c.b16 %v578, %v576
        %v649 = vpack.c.b16 %v579, %v577
        %v650 = vpack.c.b16 %v582, %v580
        %v651 = vpack.c.b16 %v583, %v581
        %v652 = vpack.c.b16 %v586, %v584
        %v653 = vpack.c.b16 %v587, %v585
        %v654 = vpack.c.b16 %v590, %v588
        %v655 = vpack.c.b16 %v591, %v589
        %v784 = vunpack.c.l.b16 %v336
        %v785 = vunpack.c.h.b16 %v336
        %v786 = vunpack.c.l.b16 %v337
        %v787 = vunpack.c.h.b16 %v337
        %v788 = vunpack.c.l.b16 %v338
        %v789 = vunpack.c.h.b16 %v338
        %v790 = vunpack.c.l.b16 %v339
        %v791 = vunpack.c.h.b16 %v339
        %v792 = vunpack.c.l.b16 %v340
        %v793 = vunpack.c.h.b16 %v340
        %v794 = vunpack.c.l.b16 %v341
        %v795 = vunpack.c.h.b16 %v341
        %v796 = vunpack.c.l.b16 %v342
        %v797 = vunpack.c.h.b16 %v342
        %v798 = vunpack.c.l.b16 %v343
        %v799 = vunpack.c.h.b16 %v343
        %v800 = vunpack.c.l.b16 %v344
        %v801 = vunpack.c.h.b16 %v344
        %v802 = vunpack.c.l.b16 %v345
        %v803 = vunpack.c.h.b16 %v345
        %v804 = vunpack.c.l.b16 %v346
        %v805 = vunpack.c.h.b16 %v346
        %v806 = vunpack.c.l.b16 %v347
        %v807 = vunpack.c.h.b16 %v347
        %v808 = vunpack.c.l.b16 %v348
        %v809 = vunpack.c.h.b16 %v348
        %v810 = vunpack.c.l.b16 %v349
        %v811 = vunpack.c.h.b16 %v349
        %v812 = vunpack.c.l.b16 %v350
        %v813 = vunpack.c.h.b16 %v350
        %v814 = vunpack.c.l.b16 %v351
        %v815 = vunpack.c.h.b16 %v351
        %v816 = vunpack.c.l.b16 %v352
        %v817 = vunpack.c.h.b16 %v352
        %v818 = vunpack.c.l.b16 %v353
        %v819 = vunpack.c.h.b16 %v353
        %v820 = vunpack.c.l.b16 %v354
        %v821 = vunpack.c.h.b16 %v354
        %v822 = vunpack.c.l.b16 %v355
        %v823 = vunpack.c.h.b16 %v355
        %v824 = vunpack.c.l.b16 %v356
        %v825 = vunpack.c.h.b16 %v356
        %v826 = vunpack.c.l.b16 %v357
        %v827 = vunpack.c.h.b16 %v357
        %v828 = vunpack.c.l.b16 %v358
        %v829 = vunpack.c.h.b16 %v358
        %v830 = vunpack.c.l.b16 %v359
        %v831 = vunpack.c.h.b16 %v359
        %v832 = vunpack.c.l.b16 %v360
        %v833 = vunpack.c.h.b16 %v360
        %v834 = vunpack.c.l.b16 %v361
        %v835 = vunpack.c.h.b16 %v361
        %v836 = vunpack.c.l.b16 %v362
        %v837 = vunpack.c.h.b16 %v362
        %v838 = vunpack.c.l.b16 %v363
        %v839 = vunpack.c.h.b16 %v363
        %v840 = vunpack.c.l.b16 %v364
        %v841 = vunpack.c.h.b16 %v364
        %v842 = vunpack.c.l.b16 %v365
        %v843 = vunpack.c.h.b16 %v365
        %v844 = vunpack.c.l.b16 %v366
        %v845 = vunpack.c.h.b16 %v366
        %v846 = vunpack.c.l.b16 %v367
        %v847 = vunpack.c.h.b16 %v367
        %v848 = vunpack.c.l.b16 %v368
        %v849 = vunpack.c.h.b16 %v368
        %v850 = vunpack.c.l.b16 %v369
        %v851 = vunpack.c.h.b16 %v369
        %v852 = vunpack.c.l.b16 %v370
        %v853 = vunpack.c.h.b16 %v370
        %v854 = vunpack.c.l.b16 %v371
        %v855 = vunpack.c.h.b16 %v371
        %v856 = vunpack.c.l.b16 %v372
        %v857 = vunpack.c.h.b16 %v372
        %v858 = vunpack.c.l.b16 %v373
        %v859 = vunpack.c.h.b16 %v373
        %v860 = vunpack.c.l.b16 %v374
        %v861 = vunpack.c.h.b16 %v374
        %v862 = vunpack.c.l.b16 %v375
        %v863 = vunpack.c.h.b16 %v375
        %v864 = vunpack.c.l.b16 %v376
        %v865 = vunpack.c.h.b16 %v376
        %v866 = vunpack.c.l.b16 %v377
        %v867 = vunpack.c.h.b16 %v377
        %v868 = vunpack.c.l.b16 %v378
        %v869 = vunpack.c.h.b16 %v378
        %v870 = vunpack.c.l.b16 %v379
        %v871 = vunpack.c.h.b16 %v379
        %v872 = vunpack.c.l.b16 %v380
        %v873 = vunpack.c.h.b16 %v380
        %v874 = vunpack.c.l.b16 %v381
        %v875 = vunpack.c.h.b16 %v381
        %v876 = vunpack.c.l.b16 %v382
        %v877 = vunpack.c.h.b16 %v382
        %v878 = vunpack.c.l.b16 %v383
        %v879 = vunpack.c.h.b16 %v383
        %v880 = vunpack.c.l.b16 %v384
        %v881 = vunpack.c.h.b16 %v384
        %v882 = vunpack.c.l.b16 %v385
        %v883 = vunpack.c.h.b16 %v385
        %v884 = vunpack.c.l.b16 %v386
        %v885 = vunpack.c.h.b16 %v386
        %v886 = vunpack.c.l.b16 %v387
        %v887 = vunpack.c.h.b16 %v387
        %v888 = vunpack.c.l.b16 %v388
        %v889 = vunpack.c.h.b16 %v388
        %v890 = vunpack.c.l.b16 %v389
        %v891 = vunpack.c.h.b16 %v389
        %v892 = vunpack.c.l.b16 %v390
        %v893 = vunpack.c.h.b16 %v390
        %v894 = vunpack.c.l.b16 %v391
        %v895 = vunpack.c.h.b16 %v391
        %v896 = vunpack.c.l.b16 %v392
        %v897 = vunpack.c.h.b16 %v392
        %v898 = vunpack.c.l.b16 %v393
        %v899 = vunpack.c.h.b16 %v393
        %v900 = vunpack.c.l.b16 %v394
        %v901 = vunpack.c.h.b16 %v394
        %v902 = vunpack.c.l.b16 %v395
        %v903 = vunpack.c.h.b16 %v395
        %v904 = vunpack.c.l.b16 %v396
        %v905 = vunpack.c.h.b16 %v396
        %v906 = vunpack.c.l.b16 %v397
        %v907 = vunpack.c.h.b16 %v397
        %v908 = vunpack.c.l.b16 %v398
        %v909 = vunpack.c.h.b16 %v398
        %v910 = vunpack.c.l.b16 %v399
        %v911 = vunpack.c.h.b16 %v399
        %v912 = vpack.c.b16 %v788, %v784
        %v913 = vpack.c.b16 %v789, %v785
        %v914 = vpack.c.b16 %v790, %v786
        %v915 = vpack.c.b16 %v791, %v787
        %v916 = vpack.c.b16 %v796, %v792
        %v917 = vpack.c.b16 %v797, %v793
        %v918 = vpack.c.b16 %v798, %v794
        %v919 = vpack.c.b16 %v799, %v795
        %v920 = vpack.c.b16 %v804, %v800
        %v921 = vpack.c.b16 %v805, %v801
        %v922 = vpack.c.b16 %v806, %v802
        %v923 = vpack.c.b16 %v807, %v803
        %v924 = vpack.c.b16 %v812, %v808
        %v925 = vpack.c.b16 %v813, %v809
        %v926 = vpack.c.b16 %v814, %v810
        %v927 = vpack.c.b16 %v815, %v811
        %v928 = vpack.c.b16 %v820, %v816
        %v929 = vpack.c.b16 %v821, %v817
        %v930 = vpack.c.b16 %v822, %v818
        %v931 = vpack.c.b16 %v823, %v819
        %v932 = vpack.c.b16 %v828, %v824
        %v933 = vpack.c.b16 %v829, %v825
        %v934 = vpack.c.b16 %v830, %v826
        %v935 = vpack.c.b16 %v831, %v827
        %v936 = vpack.c.b16 %v836, %v832
        %v937 = vpack.c.b16 %v837, %v833
        %v938 = vpack.c.b16 %v838, %v834
        %v939 = vpack.c.b16 %v839, %v835
        %v940 = vpack.c.b16 %v844, %v840
        %v941 = vpack.c.b16 %v845, %v841
        %v942 = vpack.c.b16 %v846, %v842
        %v943 = vpack.c.b16 %v847, %v843
        %v944 = vpack.c.b16 %v852, %v848
        %v945 = vpack.c.b16 %v853, %v849
        %v946 = vpack.c.b16 %v854, %v850
        %v947 = vpack.c.b16 %v855, %v851
        %v948 = vpack.c.b16 %v860, %v856
        %v949 = vpack.c.b16 %v861, %v857
        %v950 = vpack.c.b16 %v862, %v858
        %v951 = vpack.c.b16 %v863, %v859
        %v952 = vpack.c.b16 %v868, %v864
        %v953 = vpack.c.b16 %v869, %v865
        %v954 = vpack.c.b16 %v870, %v866
        %v955 = vpack.c.b16 %v871, %v867
        %v956 = vpack.c.b16 %v876, %v872
        %v957 = vpack.c.b16 %v877, %v873
        %v958 = vpack.c.b16 %v878, %v874
        %v959 = vpack.c.b16 %v879, %v875
        %v960 = vpack.c.b16 %v884, %v880
        %v961 = vpack.c.b16 %v885, %v881
        %v962 = vpack.c.b16 %v886, %v882
        %v963 = vpack.c.b16 %v887, %v883
        %v964 = vpack.c.b16 %v892, %v888
        %v965 = vpack.c.b16 %v893, %v889
        %v966 = vpack.c.b16 %v894, %v890
        %v967 = vpack.c.b16 %v895, %v891
        %v968 = vpack.c.b16 %v900, %v896
        %v969 = vpack.c.b16 %v901, %v897
        %v970 = vpack.c.b16 %v902, %v898
        %v971 = vpack.c.b16 %v903, %v899
        %v972 = vpack.c.b16 %v908, %v904
        %v973 = vpack.c.b16 %v909, %v905
        %v974 = vpack.c.b16 %v910, %v906
        %v975 = vpack.c.b16 %v911, %v907
        %1040 = vmatpush.bf16.msra.mxu0 %v940
        %1041 = vmatpush.bf16.msra.mxu0 %v936
        %1042 = vmatpush.bf16.msra.mxu0 %v932
        %1043 = vmatpush.bf16.msra.mxu0 %v928
        %1044 = vmatpush.bf16.msra.mxu0 %v924
        %1045 = vmatpush.bf16.msra.mxu0 %v920
        %1046 = vmatpush.bf16.msra.mxu0 %v916
        %1047 = vmatpush.bf16.msra.mxu0 %v912
        %1048 = vmatmul.bf16.gmra.mxu0 %v592
        %v1049 = vpop.f32.mrf.mxu0
        %v1050 = vadd.f32 0.0, %v1049
        %v1051 = vpop.f32.mrf.mxu0
        %v1052 = vadd.f32 0.0, %v1051
        %1053 = vmatmul.bf16.gmra.mxu0 %v594
        %v1054 = vpop.f32.mrf.mxu0
        %v1055 = vadd.f32 0.0, %v1054
        %v1056 = vpop.f32.mrf.mxu0
        %v1057 = vadd.f32 0.0, %v1056
        %1058 = vmatmul.bf16.gmra.mxu0 %v596
        %v1059 = vpop.f32.mrf.mxu0
        %v1060 = vadd.f32 0.0, %v1059
        %v1061 = vpop.f32.mrf.mxu0
        %v1062 = vadd.f32 0.0, %v1061
        %1063 = vmatmul.bf16.gmra.mxu0 %v598
        %v1064 = vpop.f32.mrf.mxu0
        %v1065 = vadd.f32 0.0, %v1064
        %v1066 = vpop.f32.mrf.mxu0
        %v1067 = vadd.f32 0.0, %v1066
        %1068 = vmatmul.bf16.gmra.mxu0 %v600
        %v1069 = vpop.f32.mrf.mxu0
        %v1070 = vadd.f32 0.0, %v1069
        %v1071 = vpop.f32.mrf.mxu0
        %v1072 = vadd.f32 0.0, %v1071
        %1073 = vmatmul.bf16.gmra.mxu0 %v602
        %v1074 = vpop.f32.mrf.mxu0
        %v1075 = vadd.f32 0.0, %v1074
        %v1076 = vpop.f32.mrf.mxu0
        %v1077 = vadd.f32 0.0, %v1076
        %1078 = vmatmul.bf16.gmra.mxu0 %v604
        %v1079 = vpop.f32.mrf.mxu0
        %v1080 = vadd.f32 0.0, %v1079
        %v1081 = vpop.f32.mrf.mxu0
        %v1082 = vadd.f32 0.0, %v1081
        %1083 = vmatmul.bf16.gmra.mxu0 %v606
        %v1084 = vpop.f32.mrf.mxu0
        %v1085 = vadd.f32 0.0, %v1084
        %v1086 = vpop.f32.mrf.mxu0
        %v1087 = vadd.f32 0.0, %v1086
        %1088 = vmatmul.bf16.gmra.mxu0 %v608
        %v1089 = vpop.f32.mrf.mxu0
        %v1090 = vadd.f32 0.0, %v1089
        %v1091 = vpop.f32.mrf.mxu0
        %v1092 = vadd.f32 0.0, %v1091
        %1093 = vmatmul.bf16.gmra.mxu0 %v610
        %v1094 = vpop.f32.mrf.mxu0
        %v1095 = vadd.f32 0.0, %v1094
        %v1096 = vpop.f32.mrf.mxu0
        %v1097 = vadd.f32 0.0, %v1096
        %1098 = vmatmul.bf16.gmra.mxu0 %v612
        %v1099 = vpop.f32.mrf.mxu0
        %v1100 = vadd.f32 0.0, %v1099
        %v1101 = vpop.f32.mrf.mxu0
        %v1102 = vadd.f32 0.0, %v1101
        %1103 = vmatmul.bf16.gmra.mxu0 %v614
        %v1104 = vpop.f32.mrf.mxu0
        %v1105 = vadd.f32 0.0, %v1104
        %v1106 = vpop.f32.mrf.mxu0
        %v1107 = vadd.f32 0.0, %v1106
        %1108 = vmatmul.bf16.gmra.mxu0 %v616
        %v1109 = vpop.f32.mrf.mxu0
        %v1110 = vadd.f32 0.0, %v1109
        %v1111 = vpop.f32.mrf.mxu0
        %v1112 = vadd.f32 0.0, %v1111
        %1113 = vmatmul.bf16.gmra.mxu0 %v618
        %v1114 = vpop.f32.mrf.mxu0
        %v1115 = vadd.f32 0.0, %v1114
        %v1116 = vpop.f32.mrf.mxu0
        %v1117 = vadd.f32 0.0, %v1116
        %1118 = vmatmul.bf16.gmra.mxu0 %v620
        %v1119 = vpop.f32.mrf.mxu0
        %v1120 = vadd.f32 0.0, %v1119
        %v1121 = vpop.f32.mrf.mxu0
        %v1122 = vadd.f32 0.0, %v1121
        %1123 = vmatmul.bf16.gmra.mxu0 %v622
        %v1124 = vpop.f32.mrf.mxu0
        %v1125 = vadd.f32 0.0, %v1124
        %v1126 = vpop.f32.mrf.mxu0
        %v1127 = vadd.f32 0.0, %v1126
        %1128 = vmatmul.bf16.gmra.mxu0 %v624
        %v1129 = vpop.f32.mrf.mxu0
        %v1130 = vadd.f32 0.0, %v1129
        %v1131 = vpop.f32.mrf.mxu0
        %v1132 = vadd.f32 0.0, %v1131
        %1133 = vmatmul.bf16.gmra.mxu0 %v626
        %v1134 = vpop.f32.mrf.mxu0
        %v1135 = vadd.f32 0.0, %v1134
        %v1136 = vpop.f32.mrf.mxu0
        %v1137 = vadd.f32 0.0, %v1136
        %1138 = vmatmul.bf16.gmra.mxu0 %v628
        %v1139 = vpop.f32.mrf.mxu0
        %v1140 = vadd.f32 0.0, %v1139
        %v1141 = vpop.f32.mrf.mxu0
        %v1142 = vadd.f32 0.0, %v1141
        %1143 = vmatmul.bf16.gmra.mxu0 %v630
        %v1144 = vpop.f32.mrf.mxu0
        %v1145 = vadd.f32 0.0, %v1144
        %v1146 = vpop.f32.mrf.mxu0
        %v1147 = vadd.f32 0.0, %v1146
        %1148 = vmatmul.bf16.gmra.mxu0 %v632
        %v1149 = vpop.f32.mrf.mxu0
        %v1150 = vadd.f32 0.0, %v1149
        %v1151 = vpop.f32.mrf.mxu0
        %v1152 = vadd.f32 0.0, %v1151
        %1153 = vmatmul.bf16.gmra.mxu0 %v634
        %v1154 = vpop.f32.mrf.mxu0
        %v1155 = vadd.f32 0.0, %v1154
        %v1156 = vpop.f32.mrf.mxu0
        %v1157 = vadd.f32 0.0, %v1156
        %1158 = vmatmul.bf16.gmra.mxu0 %v636
        %v1159 = vpop.f32.mrf.mxu0
        %v1160 = vadd.f32 0.0, %v1159
        %v1161 = vpop.f32.mrf.mxu0
        %v1162 = vadd.f32 0.0, %v1161
        %1163 = vmatmul.bf16.gmra.mxu0 %v638
        %v1164 = vpop.f32.mrf.mxu0
        %v1165 = vadd.f32 0.0, %v1164
        %v1166 = vpop.f32.mrf.mxu0
        %v1167 = vadd.f32 0.0, %v1166
        %1168 = vmatmul.bf16.gmra.mxu0 %v640
        %v1169 = vpop.f32.mrf.mxu0
        %v1170 = vadd.f32 0.0, %v1169
        %v1171 = vpop.f32.mrf.mxu0
        %v1172 = vadd.f32 0.0, %v1171
        %1173 = vmatmul.bf16.gmra.mxu0 %v642
        %v1174 = vpop.f32.mrf.mxu0
        %v1175 = vadd.f32 0.0, %v1174
        %v1176 = vpop.f32.mrf.mxu0
        %v1177 = vadd.f32 0.0, %v1176
        %1178 = vmatmul.bf16.gmra.mxu0 %v644
        %v1179 = vpop.f32.mrf.mxu0
        %v1180 = vadd.f32 0.0, %v1179
        %v1181 = vpop.f32.mrf.mxu0
        %v1182 = vadd.f32 0.0, %v1181
        %1183 = vmatmul.bf16.gmra.mxu0 %v646
        %v1184 = vpop.f32.mrf.mxu0
        %v1185 = vadd.f32 0.0, %v1184
        %v1186 = vpop.f32.mrf.mxu0
        %v1187 = vadd.f32 0.0, %v1186
        %1188 = vmatmul.bf16.gmra.mxu0 %v648
        %v1189 = vpop.f32.mrf.mxu0
        %v1190 = vadd.f32 0.0, %v1189
        %v1191 = vpop.f32.mrf.mxu0
        %v1192 = vadd.f32 0.0, %v1191
        %1193 = vmatmul.bf16.gmra.mxu0 %v650
        %v1194 = vpop.f32.mrf.mxu0
        %v1195 = vadd.f32 0.0, %v1194
        %v1196 = vpop.f32.mrf.mxu0
        %v1197 = vadd.f32 0.0, %v1196
        %1198 = vmatmul.bf16.gmra.mxu0 %v652
        %v1199 = vpop.f32.mrf.mxu0
        %v1200 = vadd.f32 0.0, %v1199
        %v1201 = vpop.f32.mrf.mxu0
        %v1202 = vadd.f32 0.0, %v1201
        %1203 = vmatmul.bf16.gmra.mxu0 %v654
        %v1204 = vpop.f32.mrf.mxu0
        %v1205 = vadd.f32 0.0, %v1204
        %v1206 = vpop.f32.mrf.mxu0
        %v1207 = vadd.f32 0.0, %v1206
        %1208 = vdwg.mxu0
        %1209 = vmatpush.bf16.msra.mxu0 %v972
        %1210 = vmatpush.bf16.msra.mxu0 %v968
        %1211 = vmatpush.bf16.msra.mxu0 %v964
        %1212 = vmatpush.bf16.msra.mxu0 %v960
        %1213 = vmatpush.bf16.msra.mxu0 %v956
        %1214 = vmatpush.bf16.msra.mxu0 %v952
        %1215 = vmatpush.bf16.msra.mxu0 %v948
        %1216 = vmatpush.bf16.msra.mxu0 %v944
        %1217 = vmatmul.bf16.gmra.mxu0 %v593
        %v1218 = vpop.f32.mrf.mxu0
        %v1219 = vadd.f32 %v1050, %v1218
        %v1220 = vpop.f32.mrf.mxu0
        %v1221 = vadd.f32 %v1052, %v1220
        %1222 = vmatmul.bf16.gmra.mxu0 %v595
        %v1223 = vpop.f32.mrf.mxu0
        %v1224 = vadd.f32 %v1055, %v1223
        %v1225 = vpop.f32.mrf.mxu0
        %v1226 = vadd.f32 %v1057, %v1225
        %1227 = vmatmul.bf16.gmra.mxu0 %v597
        %v1228 = vpop.f32.mrf.mxu0
        %v1229 = vadd.f32 %v1060, %v1228
        %v1230 = vpop.f32.mrf.mxu0
        %v1231 = vadd.f32 %v1062, %v1230
        %1232 = vmatmul.bf16.gmra.mxu0 %v599
        %v1233 = vpop.f32.mrf.mxu0
        %v1234 = vadd.f32 %v1065, %v1233
        %v1235 = vpop.f32.mrf.mxu0
        %v1236 = vadd.f32 %v1067, %v1235
        %1237 = vmatmul.bf16.gmra.mxu0 %v601
        %v1238 = vpop.f32.mrf.mxu0
        %v1239 = vadd.f32 %v1070, %v1238
        %v1240 = vpop.f32.mrf.mxu0
        %v1241 = vadd.f32 %v1072, %v1240
        %1242 = vmatmul.bf16.gmra.mxu0 %v603
        %v1243 = vpop.f32.mrf.mxu0
        %v1244 = vadd.f32 %v1075, %v1243
        %v1245 = vpop.f32.mrf.mxu0
        %v1246 = vadd.f32 %v1077, %v1245
        %1247 = vmatmul.bf16.gmra.mxu0 %v605
        %v1248 = vpop.f32.mrf.mxu0
        %v1249 = vadd.f32 %v1080, %v1248
        %v1250 = vpop.f32.mrf.mxu0
        %v1251 = vadd.f32 %v1082, %v1250
        %1252 = vmatmul.bf16.gmra.mxu0 %v607
        %v1253 = vpop.f32.mrf.mxu0
        %v1254 = vadd.f32 %v1085, %v1253
        %v1255 = vpop.f32.mrf.mxu0
        %v1256 = vadd.f32 %v1087, %v1255
        %1257 = vmatmul.bf16.gmra.mxu0 %v609
        %v1258 = vpop.f32.mrf.mxu0
        %v1259 = vadd.f32 %v1090, %v1258
        %v1260 = vpop.f32.mrf.mxu0
        %v1261 = vadd.f32 %v1092, %v1260
        %1262 = vmatmul.bf16.gmra.mxu0 %v611
        %v1263 = vpop.f32.mrf.mxu0
        %v1264 = vadd.f32 %v1095, %v1263
        %v1265 = vpop.f32.mrf.mxu0
        %v1266 = vadd.f32 %v1097, %v1265
        %1267 = vmatmul.bf16.gmra.mxu0 %v613
        %v1268 = vpop.f32.mrf.mxu0
        %v1269 = vadd.f32 %v1100, %v1268
        %v1270 = vpop.f32.mrf.mxu0
        %v1271 = vadd.f32 %v1102, %v1270
        %1272 = vmatmul.bf16.gmra.mxu0 %v615
        %v1273 = vpop.f32.mrf.mxu0
        %v1274 = vadd.f32 %v1105, %v1273
        %v1275 = vpop.f32.mrf.mxu0
        %v1276 = vadd.f32 %v1107, %v1275
        %1277 = vmatmul.bf16.gmra.mxu0 %v617
        %v1278 = vpop.f32.mrf.mxu0
        %v1279 = vadd.f32 %v1110, %v1278
        %v1280 = vpop.f32.mrf.mxu0
        %v1281 = vadd.f32 %v1112, %v1280
        %1282 = vmatmul.bf16.gmra.mxu0 %v619
        %v1283 = vpop.f32.mrf.mxu0
        %v1284 = vadd.f32 %v1115, %v1283
        %v1285 = vpop.f32.mrf.mxu0
        %v1286 = vadd.f32 %v1117, %v1285
        %1287 = vmatmul.bf16.gmra.mxu0 %v621
        %v1288 = vpop.f32.mrf.mxu0
        %v1289 = vadd.f32 %v1120, %v1288
        %v1290 = vpop.f32.mrf.mxu0
        %v1291 = vadd.f32 %v1122, %v1290
        %1292 = vmatmul.bf16.gmra.mxu0 %v623
        %v1293 = vpop.f32.mrf.mxu0
        %v1294 = vadd.f32 %v1125, %v1293
        %v1295 = vpop.f32.mrf.mxu0
        %v1296 = vadd.f32 %v1127, %v1295
        %1297 = vmatmul.bf16.gmra.mxu0 %v625
        %v1298 = vpop.f32.mrf.mxu0
        %v1299 = vadd.f32 %v1130, %v1298
        %v1300 = vpop.f32.mrf.mxu0
        %v1301 = vadd.f32 %v1132, %v1300
        %1302 = vmatmul.bf16.gmra.mxu0 %v627
        %v1303 = vpop.f32.mrf.mxu0
        %v1304 = vadd.f32 %v1135, %v1303
        %v1305 = vpop.f32.mrf.mxu0
        %v1306 = vadd.f32 %v1137, %v1305
        %1307 = vmatmul.bf16.gmra.mxu0 %v629
        %v1308 = vpop.f32.mrf.mxu0
        %v1309 = vadd.f32 %v1140, %v1308
        %v1310 = vpop.f32.mrf.mxu0
        %v1311 = vadd.f32 %v1142, %v1310
        %1312 = vmatmul.bf16.gmra.mxu0 %v631
        %v1313 = vpop.f32.mrf.mxu0
        %v1314 = vadd.f32 %v1145, %v1313
        %v1315 = vpop.f32.mrf.mxu0
        %v1316 = vadd.f32 %v1147, %v1315
        %1317 = vmatmul.bf16.gmra.mxu0 %v633
        %v1318 = vpop.f32.mrf.mxu0
        %v1319 = vadd.f32 %v1150, %v1318
        %v1320 = vpop.f32.mrf.mxu0
        %v1321 = vadd.f32 %v1152, %v1320
        %1322 = vmatmul.bf16.gmra.mxu0 %v635
        %v1323 = vpop.f32.mrf.mxu0
        %v1324 = vadd.f32 %v1155, %v1323
        %v1325 = vpop.f32.mrf.mxu0
        %v1326 = vadd.f32 %v1157, %v1325
        %1327 = vmatmul.bf16.gmra.mxu0 %v637
        %v1328 = vpop.f32.mrf.mxu0
        %v1329 = vadd.f32 %v1160, %v1328
        %v1330 = vpop.f32.mrf.mxu0
        %v1331 = vadd.f32 %v1162, %v1330
        %1332 = vmatmul.bf16.gmra.mxu0 %v639
        %v1333 = vpop.f32.mrf.mxu0
        %v1334 = vadd.f32 %v1165, %v1333
        %v1335 = vpop.f32.mrf.mxu0
        %v1336 = vadd.f32 %v1167, %v1335
        %1337 = vmatmul.bf16.gmra.mxu0 %v641
        %v1338 = vpop.f32.mrf.mxu0
        %v1339 = vadd.f32 %v1170, %v1338
        %v1340 = vpop.f32.mrf.mxu0
        %v1341 = vadd.f32 %v1172, %v1340
        %1342 = vmatmul.bf16.gmra.mxu0 %v643
        %v1343 = vpop.f32.mrf.mxu0
        %v1344 = vadd.f32 %v1175, %v1343
        %v1345 = vpop.f32.mrf.mxu0
        %v1346 = vadd.f32 %v1177, %v1345
        %1347 = vmatmul.bf16.gmra.mxu0 %v645
        %v1348 = vpop.f32.mrf.mxu0
        %v1349 = vadd.f32 %v1180, %v1348
        %v1350 = vpop.f32.mrf.mxu0
        %v1351 = vadd.f32 %v1182, %v1350
        %1352 = vmatmul.bf16.gmra.mxu0 %v647
        %v1353 = vpop.f32.mrf.mxu0
        %v1354 = vadd.f32 %v1185, %v1353
        %v1355 = vpop.f32.mrf.mxu0
        %v1356 = vadd.f32 %v1187, %v1355
        %1357 = vmatmul.bf16.gmra.mxu0 %v649
        %v1358 = vpop.f32.mrf.mxu0
        %v1359 = vadd.f32 %v1190, %v1358
        %v1360 = vpop.f32.mrf.mxu0
        %v1361 = vadd.f32 %v1192, %v1360
        %1362 = vmatmul.bf16.gmra.mxu0 %v651
        %v1363 = vpop.f32.mrf.mxu0
        %v1364 = vadd.f32 %v1195, %v1363
        %v1365 = vpop.f32.mrf.mxu0
        %v1366 = vadd.f32 %v1197, %v1365
        %1367 = vmatmul.bf16.gmra.mxu0 %v653
        %v1368 = vpop.f32.mrf.mxu0
        %v1369 = vadd.f32 %v1200, %v1368
        %v1370 = vpop.f32.mrf.mxu0
        %v1371 = vadd.f32 %v1202, %v1370
        %1372 = vmatmul.bf16.gmra.mxu0 %v655
        %v1373 = vpop.f32.mrf.mxu0
        %v1374 = vadd.f32 %v1205, %v1373
        %v1375 = vpop.f32.mrf.mxu0
        %v1376 = vadd.f32 %v1207, %v1375
        %1377 = vdwg.mxu0
        %1378 = vmatpush.bf16.msra.mxu0 %v941
        %1379 = vmatpush.bf16.msra.mxu0 %v937
        %1380 = vmatpush.bf16.msra.mxu0 %v933
        %1381 = vmatpush.bf16.msra.mxu0 %v929
        %1382 = vmatpush.bf16.msra.mxu0 %v925
        %1383 = vmatpush.bf16.msra.mxu0 %v921
        %1384 = vmatpush.bf16.msra.mxu0 %v917
        %1385 = vmatpush.bf16.msra.mxu0 %v913
        %1386 = vmatmul.bf16.gmra.mxu0 %v592
        %v1387 = vpop.f32.mrf.mxu0
        %v1388 = vadd.f32 0.0, %v1387
        %v1389 = vpop.f32.mrf.mxu0
        %v1390 = vadd.f32 0.0, %v1389
        %1391 = vmatmul.bf16.gmra.mxu0 %v594
        %v1392 = vpop.f32.mrf.mxu0
        %v1393 = vadd.f32 0.0, %v1392
        %v1394 = vpop.f32.mrf.mxu0
        %v1395 = vadd.f32 0.0, %v1394
        %1396 = vmatmul.bf16.gmra.mxu0 %v596
        %v1397 = vpop.f32.mrf.mxu0
        %v1398 = vadd.f32 0.0, %v1397
        %v1399 = vpop.f32.mrf.mxu0
        %v1400 = vadd.f32 0.0, %v1399
        %1401 = vmatmul.bf16.gmra.mxu0 %v598
        %v1402 = vpop.f32.mrf.mxu0
        %v1403 = vadd.f32 0.0, %v1402
        %v1404 = vpop.f32.mrf.mxu0
        %v1405 = vadd.f32 0.0, %v1404
        %1406 = vmatmul.bf16.gmra.mxu0 %v600
        %v1407 = vpop.f32.mrf.mxu0
        %v1408 = vadd.f32 0.0, %v1407
        %v1409 = vpop.f32.mrf.mxu0
        %v1410 = vadd.f32 0.0, %v1409
        %1411 = vmatmul.bf16.gmra.mxu0 %v602
        %v1412 = vpop.f32.mrf.mxu0
        %v1413 = vadd.f32 0.0, %v1412
        %v1414 = vpop.f32.mrf.mxu0
        %v1415 = vadd.f32 0.0, %v1414
        %1416 = vmatmul.bf16.gmra.mxu0 %v604
        %v1417 = vpop.f32.mrf.mxu0
        %v1418 = vadd.f32 0.0, %v1417
        %v1419 = vpop.f32.mrf.mxu0
        %v1420 = vadd.f32 0.0, %v1419
        %1421 = vmatmul.bf16.gmra.mxu0 %v606
        %v1422 = vpop.f32.mrf.mxu0
        %v1423 = vadd.f32 0.0, %v1422
        %v1424 = vpop.f32.mrf.mxu0
        %v1425 = vadd.f32 0.0, %v1424
        %1426 = vmatmul.bf16.gmra.mxu0 %v608
        %v1427 = vpop.f32.mrf.mxu0
        %v1428 = vadd.f32 0.0, %v1427
        %v1429 = vpop.f32.mrf.mxu0
        %v1430 = vadd.f32 0.0, %v1429
        %1431 = vmatmul.bf16.gmra.mxu0 %v610
        %v1432 = vpop.f32.mrf.mxu0
        %v1433 = vadd.f32 0.0, %v1432
        %v1434 = vpop.f32.mrf.mxu0
        %v1435 = vadd.f32 0.0, %v1434
        %1436 = vmatmul.bf16.gmra.mxu0 %v612
        %v1437 = vpop.f32.mrf.mxu0
        %v1438 = vadd.f32 0.0, %v1437
        %v1439 = vpop.f32.mrf.mxu0
        %v1440 = vadd.f32 0.0, %v1439
        %1441 = vmatmul.bf16.gmra.mxu0 %v614
        %v1442 = vpop.f32.mrf.mxu0
        %v1443 = vadd.f32 0.0, %v1442
        %v1444 = vpop.f32.mrf.mxu0
        %v1445 = vadd.f32 0.0, %v1444
        %1446 = vmatmul.bf16.gmra.mxu0 %v616
        %v1447 = vpop.f32.mrf.mxu0
        %v1448 = vadd.f32 0.0, %v1447
        %v1449 = vpop.f32.mrf.mxu0
        %v1450 = vadd.f32 0.0, %v1449
        %1451 = vmatmul.bf16.gmra.mxu0 %v618
        %v1452 = vpop.f32.mrf.mxu0
        %v1453 = vadd.f32 0.0, %v1452
        %v1454 = vpop.f32.mrf.mxu0
        %v1455 = vadd.f32 0.0, %v1454
        %1456 = vmatmul.bf16.gmra.mxu0 %v620
        %v1457 = vpop.f32.mrf.mxu0
        %v1458 = vadd.f32 0.0, %v1457
        %v1459 = vpop.f32.mrf.mxu0
        %v1460 = vadd.f32 0.0, %v1459
        %1461 = vmatmul.bf16.gmra.mxu0 %v622
        %v1462 = vpop.f32.mrf.mxu0
        %v1463 = vadd.f32 0.0, %v1462
        %v1464 = vpop.f32.mrf.mxu0
        %v1465 = vadd.f32 0.0, %v1464
        %1466 = vmatmul.bf16.gmra.mxu0 %v624
        %v1467 = vpop.f32.mrf.mxu0
        %v1468 = vadd.f32 0.0, %v1467
        %v1469 = vpop.f32.mrf.mxu0
        %v1470 = vadd.f32 0.0, %v1469
        %1471 = vmatmul.bf16.gmra.mxu0 %v626
        %v1472 = vpop.f32.mrf.mxu0
        %v1473 = vadd.f32 0.0, %v1472
        %v1474 = vpop.f32.mrf.mxu0
        %v1475 = vadd.f32 0.0, %v1474
        %1476 = vmatmul.bf16.gmra.mxu0 %v628
        %v1477 = vpop.f32.mrf.mxu0
        %v1478 = vadd.f32 0.0, %v1477
        %v1479 = vpop.f32.mrf.mxu0
        %v1480 = vadd.f32 0.0, %v1479
        %1481 = vmatmul.bf16.gmra.mxu0 %v630
        %v1482 = vpop.f32.mrf.mxu0
        %v1483 = vadd.f32 0.0, %v1482
        %v1484 = vpop.f32.mrf.mxu0
        %v1485 = vadd.f32 0.0, %v1484
        %1486 = vmatmul.bf16.gmra.mxu0 %v632
        %v1487 = vpop.f32.mrf.mxu0
        %v1488 = vadd.f32 0.0, %v1487
        %v1489 = vpop.f32.mrf.mxu0
        %v1490 = vadd.f32 0.0, %v1489
        %1491 = vmatmul.bf16.gmra.mxu0 %v634
        %v1492 = vpop.f32.mrf.mxu0
        %v1493 = vadd.f32 0.0, %v1492
        %v1494 = vpop.f32.mrf.mxu0
        %v1495 = vadd.f32 0.0, %v1494
        %1496 = vmatmul.bf16.gmra.mxu0 %v636
        %v1497 = vpop.f32.mrf.mxu0
        %v1498 = vadd.f32 0.0, %v1497
        %v1499 = vpop.f32.mrf.mxu0
        %v1500 = vadd.f32 0.0, %v1499
        %1501 = vmatmul.bf16.gmra.mxu0 %v638
        %v1502 = vpop.f32.mrf.mxu0
        %v1503 = vadd.f32 0.0, %v1502
        %v1504 = vpop.f32.mrf.mxu0
        %v1505 = vadd.f32 0.0, %v1504
        %1506 = vmatmul.bf16.gmra.mxu0 %v640
        %v1507 = vpop.f32.mrf.mxu0
        %v1508 = vadd.f32 0.0, %v1507
        %v1509 = vpop.f32.mrf.mxu0
        %v1510 = vadd.f32 0.0, %v1509
        %1511 = vmatmul.bf16.gmra.mxu0 %v642
        %v1512 = vpop.f32.mrf.mxu0
        %v1513 = vadd.f32 0.0, %v1512
        %v1514 = vpop.f32.mrf.mxu0
        %v1515 = vadd.f32 0.0, %v1514
        %1516 = vmatmul.bf16.gmra.mxu0 %v644
        %v1517 = vpop.f32.mrf.mxu0
        %v1518 = vadd.f32 0.0, %v1517
        %v1519 = vpop.f32.mrf.mxu0
        %v1520 = vadd.f32 0.0, %v1519
        %1521 = vmatmul.bf16.gmra.mxu0 %v646
        %v1522 = vpop.f32.mrf.mxu0
        %v1523 = vadd.f32 0.0, %v1522
        %v1524 = vpop.f32.mrf.mxu0
        %v1525 = vadd.f32 0.0, %v1524
        %1526 = vmatmul.bf16.gmra.mxu0 %v648
        %v1527 = vpop.f32.mrf.mxu0
        %v1528 = vadd.f32 0.0, %v1527
        %v1529 = vpop.f32.mrf.mxu0
        %v1530 = vadd.f32 0.0, %v1529
        %1531 = vmatmul.bf16.gmra.mxu0 %v650
        %v1532 = vpop.f32.mrf.mxu0
        %v1533 = vadd.f32 0.0, %v1532
        %v1534 = vpop.f32.mrf.mxu0
        %v1535 = vadd.f32 0.0, %v1534
        %1536 = vmatmul.bf16.gmra.mxu0 %v652
        %v1537 = vpop.f32.mrf.mxu0
        %v1538 = vadd.f32 0.0, %v1537
        %v1539 = vpop.f32.mrf.mxu0
        %v1540 = vadd.f32 0.0, %v1539
        %1541 = vmatmul.bf16.gmra.mxu0 %v654
        %v1542 = vpop.f32.mrf.mxu0
        %v1543 = vadd.f32 0.0, %v1542
        %v1544 = vpop.f32.mrf.mxu0
        %v1545 = vadd.f32 0.0, %v1544
        %1546 = vdwg.mxu0
        %1547 = vmatpush.bf16.msra.mxu0 %v973
        %1548 = vmatpush.bf16.msra.mxu0 %v969
        %1549 = vmatpush.bf16.msra.mxu0 %v965
        %1550 = vmatpush.bf16.msra.mxu0 %v961
        %1551 = vmatpush.bf16.msra.mxu0 %v957
        %1552 = vmatpush.bf16.msra.mxu0 %v953
        %1553 = vmatpush.bf16.msra.mxu0 %v949
        %1554 = vmatpush.bf16.msra.mxu0 %v945
        %1555 = vmatmul.bf16.gmra.mxu0 %v593
        %v1556 = vpop.f32.mrf.mxu0
        %v1557 = vadd.f32 %v1388, %v1556
        %v1558 = vpop.f32.mrf.mxu0
        %v1559 = vadd.f32 %v1390, %v1558
        %1560 = vmatmul.bf16.gmra.mxu0 %v595
        %v1561 = vpop.f32.mrf.mxu0
        %v1562 = vadd.f32 %v1393, %v1561
        %v1563 = vpop.f32.mrf.mxu0
        %v1564 = vadd.f32 %v1395, %v1563
        %1565 = vmatmul.bf16.gmra.mxu0 %v597
        %v1566 = vpop.f32.mrf.mxu0
        %v1567 = vadd.f32 %v1398, %v1566
        %v1568 = vpop.f32.mrf.mxu0
        %v1569 = vadd.f32 %v1400, %v1568
        %1570 = vmatmul.bf16.gmra.mxu0 %v599
        %v1571 = vpop.f32.mrf.mxu0
        %v1572 = vadd.f32 %v1403, %v1571
        %v1573 = vpop.f32.mrf.mxu0
        %v1574 = vadd.f32 %v1405, %v1573
        %1575 = vmatmul.bf16.gmra.mxu0 %v601
        %v1576 = vpop.f32.mrf.mxu0
        %v1577 = vadd.f32 %v1408, %v1576
        %v1578 = vpop.f32.mrf.mxu0
        %v1579 = vadd.f32 %v1410, %v1578
        %1580 = vmatmul.bf16.gmra.mxu0 %v603
        %v1581 = vpop.f32.mrf.mxu0
        %v1582 = vadd.f32 %v1413, %v1581
        %v1583 = vpop.f32.mrf.mxu0
        %v1584 = vadd.f32 %v1415, %v1583
        %1585 = vmatmul.bf16.gmra.mxu0 %v605
        %v1586 = vpop.f32.mrf.mxu0
        %v1587 = vadd.f32 %v1418, %v1586
        %v1588 = vpop.f32.mrf.mxu0
        %v1589 = vadd.f32 %v1420, %v1588
        %1590 = vmatmul.bf16.gmra.mxu0 %v607
        %v1591 = vpop.f32.mrf.mxu0
        %v1592 = vadd.f32 %v1423, %v1591
        %v1593 = vpop.f32.mrf.mxu0
        %v1594 = vadd.f32 %v1425, %v1593
        %1595 = vmatmul.bf16.gmra.mxu0 %v609
        %v1596 = vpop.f32.mrf.mxu0
        %v1597 = vadd.f32 %v1428, %v1596
        %v1598 = vpop.f32.mrf.mxu0
        %v1599 = vadd.f32 %v1430, %v1598
        %1600 = vmatmul.bf16.gmra.mxu0 %v611
        %v1601 = vpop.f32.mrf.mxu0
        %v1602 = vadd.f32 %v1433, %v1601
        %v1603 = vpop.f32.mrf.mxu0
        %v1604 = vadd.f32 %v1435, %v1603
        %1605 = vmatmul.bf16.gmra.mxu0 %v613
        %v1606 = vpop.f32.mrf.mxu0
        %v1607 = vadd.f32 %v1438, %v1606
        %v1608 = vpop.f32.mrf.mxu0
        %v1609 = vadd.f32 %v1440, %v1608
        %1610 = vmatmul.bf16.gmra.mxu0 %v615
        %v1611 = vpop.f32.mrf.mxu0
        %v1612 = vadd.f32 %v1443, %v1611
        %v1613 = vpop.f32.mrf.mxu0
        %v1614 = vadd.f32 %v1445, %v1613
        %1615 = vmatmul.bf16.gmra.mxu0 %v617
        %v1616 = vpop.f32.mrf.mxu0
        %v1617 = vadd.f32 %v1448, %v1616
        %v1618 = vpop.f32.mrf.mxu0
        %v1619 = vadd.f32 %v1450, %v1618
        %1620 = vmatmul.bf16.gmra.mxu0 %v619
        %v1621 = vpop.f32.mrf.mxu0
        %v1622 = vadd.f32 %v1453, %v1621
        %v1623 = vpop.f32.mrf.mxu0
        %v1624 = vadd.f32 %v1455, %v1623
        %1625 = vmatmul.bf16.gmra.mxu0 %v621
        %v1626 = vpop.f32.mrf.mxu0
        %v1627 = vadd.f32 %v1458, %v1626
        %v1628 = vpop.f32.mrf.mxu0
        %v1629 = vadd.f32 %v1460, %v1628
        %1630 = vmatmul.bf16.gmra.mxu0 %v623
        %v1631 = vpop.f32.mrf.mxu0
        %v1632 = vadd.f32 %v1463, %v1631
        %v1633 = vpop.f32.mrf.mxu0
        %v1634 = vadd.f32 %v1465, %v1633
        %1635 = vmatmul.bf16.gmra.mxu0 %v625
        %v1636 = vpop.f32.mrf.mxu0
        %v1637 = vadd.f32 %v1468, %v1636
        %v1638 = vpop.f32.mrf.mxu0
        %v1639 = vadd.f32 %v1470, %v1638
        %1640 = vmatmul.bf16.gmra.mxu0 %v627
        %v1641 = vpop.f32.mrf.mxu0
        %v1642 = vadd.f32 %v1473, %v1641
        %v1643 = vpop.f32.mrf.mxu0
        %v1644 = vadd.f32 %v1475, %v1643
        %1645 = vmatmul.bf16.gmra.mxu0 %v629
        %v1646 = vpop.f32.mrf.mxu0
        %v1647 = vadd.f32 %v1478, %v1646
        %v1648 = vpop.f32.mrf.mxu0
        %v1649 = vadd.f32 %v1480, %v1648
        %1650 = vmatmul.bf16.gmra.mxu0 %v631
        %v1651 = vpop.f32.mrf.mxu0
        %v1652 = vadd.f32 %v1483, %v1651
        %v1653 = vpop.f32.mrf.mxu0
        %v1654 = vadd.f32 %v1485, %v1653
        %1655 = vmatmul.bf16.gmra.mxu0 %v633
        %v1656 = vpop.f32.mrf.mxu0
        %v1657 = vadd.f32 %v1488, %v1656
        %v1658 = vpop.f32.mrf.mxu0
        %v1659 = vadd.f32 %v1490, %v1658
        %1660 = vmatmul.bf16.gmra.mxu0 %v635
        %v1661 = vpop.f32.mrf.mxu0
        %v1662 = vadd.f32 %v1493, %v1661
        %v1663 = vpop.f32.mrf.mxu0
        %v1664 = vadd.f32 %v1495, %v1663
        %1665 = vmatmul.bf16.gmra.mxu0 %v637
        %v1666 = vpop.f32.mrf.mxu0
        %v1667 = vadd.f32 %v1498, %v1666
        %v1668 = vpop.f32.mrf.mxu0
        %v1669 = vadd.f32 %v1500, %v1668
        %1670 = vmatmul.bf16.gmra.mxu0 %v639
        %v1671 = vpop.f32.mrf.mxu0
        %v1672 = vadd.f32 %v1503, %v1671
        %v1673 = vpop.f32.mrf.mxu0
        %v1674 = vadd.f32 %v1505, %v1673
        %1675 = vmatmul.bf16.gmra.mxu0 %v641
        %v1676 = vpop.f32.mrf.mxu0
        %v1677 = vadd.f32 %v1508, %v1676
        %v1678 = vpop.f32.mrf.mxu0
        %v1679 = vadd.f32 %v1510, %v1678
        %1680 = vmatmul.bf16.gmra.mxu0 %v643
        %v1681 = vpop.f32.mrf.mxu0
        %v1682 = vadd.f32 %v1513, %v1681
        %v1683 = vpop.f32.mrf.mxu0
        %v1684 = vadd.f32 %v1515, %v1683
        %1685 = vmatmul.bf16.gmra.mxu0 %v645
        %v1686 = vpop.f32.mrf.mxu0
        %v1687 = vadd.f32 %v1518, %v1686
        %v1688 = vpop.f32.mrf.mxu0
        %v1689 = vadd.f32 %v1520, %v1688
        %1690 = vmatmul.bf16.gmra.mxu0 %v647
        %v1691 = vpop.f32.mrf.mxu0
        %v1692 = vadd.f32 %v1523, %v1691
        %v1693 = vpop.f32.mrf.mxu0
        %v1694 = vadd.f32 %v1525, %v1693
        %1695 = vmatmul.bf16.gmra.mxu0 %v649
        %v1696 = vpop.f32.mrf.mxu0
        %v1697 = vadd.f32 %v1528, %v1696
        %v1698 = vpop.f32.mrf.mxu0
        %v1699 = vadd.f32 %v1530, %v1698
        %1700 = vmatmul.bf16.gmra.mxu0 %v651
        %v1701 = vpop.f32.mrf.mxu0
        %v1702 = vadd.f32 %v1533, %v1701
        %v1703 = vpop.f32.mrf.mxu0
        %v1704 = vadd.f32 %v1535, %v1703
        %1705 = vmatmul.bf16.gmra.mxu0 %v653
        %v1706 = vpop.f32.mrf.mxu0
        %v1707 = vadd.f32 %v1538, %v1706
        %v1708 = vpop.f32.mrf.mxu0
        %v1709 = vadd.f32 %v1540, %v1708
        %1710 = vmatmul.bf16.gmra.mxu0 %v655
        %v1711 = vpop.f32.mrf.mxu0
        %v1712 = vadd.f32 %v1543, %v1711
        %v1713 = vpop.f32.mrf.mxu0
        %v1714 = vadd.f32 %v1545, %v1713
        %1715 = vdwg.mxu0
        %1716 = vmatpush.bf16.msra.mxu0 %v942
        %1717 = vmatpush.bf16.msra.mxu0 %v938
        %1718 = vmatpush.bf16.msra.mxu0 %v934
        %1719 = vmatpush.bf16.msra.mxu0 %v930
        %1720 = vmatpush.bf16.msra.mxu0 %v926
        %1721 = vmatpush.bf16.msra.mxu0 %v922
        %1722 = vmatpush.bf16.msra.mxu0 %v918
        %1723 = vmatpush.bf16.msra.mxu0 %v914
        %1724 = vmatmul.bf16.gmra.mxu0 %v592
        %v1725 = vpop.f32.mrf.mxu0
        %v1726 = vadd.f32 0.0, %v1725
        %v1727 = vpop.f32.mrf.mxu0
        %v1728 = vadd.f32 0.0, %v1727
        %1729 = vmatmul.bf16.gmra.mxu0 %v594
        %v1730 = vpop.f32.mrf.mxu0
        %v1731 = vadd.f32 0.0, %v1730
        %v1732 = vpop.f32.mrf.mxu0
        %v1733 = vadd.f32 0.0, %v1732
        %1734 = vmatmul.bf16.gmra.mxu0 %v596
        %v1735 = vpop.f32.mrf.mxu0
        %v1736 = vadd.f32 0.0, %v1735
        %v1737 = vpop.f32.mrf.mxu0
        %v1738 = vadd.f32 0.0, %v1737
        %1739 = vmatmul.bf16.gmra.mxu0 %v598
        %v1740 = vpop.f32.mrf.mxu0
        %v1741 = vadd.f32 0.0, %v1740
        %v1742 = vpop.f32.mrf.mxu0
        %v1743 = vadd.f32 0.0, %v1742
        %1744 = vmatmul.bf16.gmra.mxu0 %v600
        %v1745 = vpop.f32.mrf.mxu0
        %v1746 = vadd.f32 0.0, %v1745
        %v1747 = vpop.f32.mrf.mxu0
        %v1748 = vadd.f32 0.0, %v1747
        %1749 = vmatmul.bf16.gmra.mxu0 %v602
        %v1750 = vpop.f32.mrf.mxu0
        %v1751 = vadd.f32 0.0, %v1750
        %v1752 = vpop.f32.mrf.mxu0
        %v1753 = vadd.f32 0.0, %v1752
        %1754 = vmatmul.bf16.gmra.mxu0 %v604
        %v1755 = vpop.f32.mrf.mxu0
        %v1756 = vadd.f32 0.0, %v1755
        %v1757 = vpop.f32.mrf.mxu0
        %v1758 = vadd.f32 0.0, %v1757
        %1759 = vmatmul.bf16.gmra.mxu0 %v606
        %v1760 = vpop.f32.mrf.mxu0
        %v1761 = vadd.f32 0.0, %v1760
        %v1762 = vpop.f32.mrf.mxu0
        %v1763 = vadd.f32 0.0, %v1762
        %1764 = vmatmul.bf16.gmra.mxu0 %v608
        %v1765 = vpop.f32.mrf.mxu0
        %v1766 = vadd.f32 0.0, %v1765
        %v1767 = vpop.f32.mrf.mxu0
        %v1768 = vadd.f32 0.0, %v1767
        %1769 = vmatmul.bf16.gmra.mxu0 %v610
        %v1770 = vpop.f32.mrf.mxu0
        %v1771 = vadd.f32 0.0, %v1770
        %v1772 = vpop.f32.mrf.mxu0
        %v1773 = vadd.f32 0.0, %v1772
        %1774 = vmatmul.bf16.gmra.mxu0 %v612
        %v1775 = vpop.f32.mrf.mxu0
        %v1776 = vadd.f32 0.0, %v1775
        %v1777 = vpop.f32.mrf.mxu0
        %v1778 = vadd.f32 0.0, %v1777
        %1779 = vmatmul.bf16.gmra.mxu0 %v614
        %v1780 = vpop.f32.mrf.mxu0
        %v1781 = vadd.f32 0.0, %v1780
        %v1782 = vpop.f32.mrf.mxu0
        %v1783 = vadd.f32 0.0, %v1782
        %1784 = vmatmul.bf16.gmra.mxu0 %v616
        %v1785 = vpop.f32.mrf.mxu0
        %v1786 = vadd.f32 0.0, %v1785
        %v1787 = vpop.f32.mrf.mxu0
        %v1788 = vadd.f32 0.0, %v1787
        %1789 = vmatmul.bf16.gmra.mxu0 %v618
        %v1790 = vpop.f32.mrf.mxu0
        %v1791 = vadd.f32 0.0, %v1790
        %v1792 = vpop.f32.mrf.mxu0
        %v1793 = vadd.f32 0.0, %v1792
        %1794 = vmatmul.bf16.gmra.mxu0 %v620
        %v1795 = vpop.f32.mrf.mxu0
        %v1796 = vadd.f32 0.0, %v1795
        %v1797 = vpop.f32.mrf.mxu0
        %v1798 = vadd.f32 0.0, %v1797
        %1799 = vmatmul.bf16.gmra.mxu0 %v622
        %v1800 = vpop.f32.mrf.mxu0
        %v1801 = vadd.f32 0.0, %v1800
        %v1802 = vpop.f32.mrf.mxu0
        %v1803 = vadd.f32 0.0, %v1802
        %1804 = vmatmul.bf16.gmra.mxu0 %v624
        %v1805 = vpop.f32.mrf.mxu0
        %v1806 = vadd.f32 0.0, %v1805
        %v1807 = vpop.f32.mrf.mxu0
        %v1808 = vadd.f32 0.0, %v1807
        %1809 = vmatmul.bf16.gmra.mxu0 %v626
        %v1810 = vpop.f32.mrf.mxu0
        %v1811 = vadd.f32 0.0, %v1810
        %v1812 = vpop.f32.mrf.mxu0
        %v1813 = vadd.f32 0.0, %v1812
        %1814 = vmatmul.bf16.gmra.mxu0 %v628
        %v1815 = vpop.f32.mrf.mxu0
        %v1816 = vadd.f32 0.0, %v1815
        %v1817 = vpop.f32.mrf.mxu0
        %v1818 = vadd.f32 0.0, %v1817
        %1819 = vmatmul.bf16.gmra.mxu0 %v630
        %v1820 = vpop.f32.mrf.mxu0
        %v1821 = vadd.f32 0.0, %v1820
        %v1822 = vpop.f32.mrf.mxu0
        %v1823 = vadd.f32 0.0, %v1822
        %1824 = vmatmul.bf16.gmra.mxu0 %v632
        %v1825 = vpop.f32.mrf.mxu0
        %v1826 = vadd.f32 0.0, %v1825
        %v1827 = vpop.f32.mrf.mxu0
        %v1828 = vadd.f32 0.0, %v1827
        %1829 = vmatmul.bf16.gmra.mxu0 %v634
        %v1830 = vpop.f32.mrf.mxu0
        %v1831 = vadd.f32 0.0, %v1830
        %v1832 = vpop.f32.mrf.mxu0
        %v1833 = vadd.f32 0.0, %v1832
        %1834 = vmatmul.bf16.gmra.mxu0 %v636
        %v1835 = vpop.f32.mrf.mxu0
        %v1836 = vadd.f32 0.0, %v1835
        %v1837 = vpop.f32.mrf.mxu0
        %v1838 = vadd.f32 0.0, %v1837
        %1839 = vmatmul.bf16.gmra.mxu0 %v638
        %v1840 = vpop.f32.mrf.mxu0
        %v1841 = vadd.f32 0.0, %v1840
        %v1842 = vpop.f32.mrf.mxu0
        %v1843 = vadd.f32 0.0, %v1842
        %1844 = vmatmul.bf16.gmra.mxu0 %v640
        %v1845 = vpop.f32.mrf.mxu0
        %v1846 = vadd.f32 0.0, %v1845
        %v1847 = vpop.f32.mrf.mxu0
        %v1848 = vadd.f32 0.0, %v1847
        %1849 = vmatmul.bf16.gmra.mxu0 %v642
        %v1850 = vpop.f32.mrf.mxu0
        %v1851 = vadd.f32 0.0, %v1850
        %v1852 = vpop.f32.mrf.mxu0
        %v1853 = vadd.f32 0.0, %v1852
        %1854 = vmatmul.bf16.gmra.mxu0 %v644
        %v1855 = vpop.f32.mrf.mxu0
        %v1856 = vadd.f32 0.0, %v1855
        %v1857 = vpop.f32.mrf.mxu0
        %v1858 = vadd.f32 0.0, %v1857
        %1859 = vmatmul.bf16.gmra.mxu0 %v646
        %v1860 = vpop.f32.mrf.mxu0
        %v1861 = vadd.f32 0.0, %v1860
        %v1862 = vpop.f32.mrf.mxu0
        %v1863 = vadd.f32 0.0, %v1862
        %1864 = vmatmul.bf16.gmra.mxu0 %v648
        %v1865 = vpop.f32.mrf.mxu0
        %v1866 = vadd.f32 0.0, %v1865
        %v1867 = vpop.f32.mrf.mxu0
        %v1868 = vadd.f32 0.0, %v1867
        %1869 = vmatmul.bf16.gmra.mxu0 %v650
        %v1870 = vpop.f32.mrf.mxu0
        %v1871 = vadd.f32 0.0, %v1870
        %v1872 = vpop.f32.mrf.mxu0
        %v1873 = vadd.f32 0.0, %v1872
        %1874 = vmatmul.bf16.gmra.mxu0 %v652
        %v1875 = vpop.f32.mrf.mxu0
        %v1876 = vadd.f32 0.0, %v1875
        %v1877 = vpop.f32.mrf.mxu0
        %v1878 = vadd.f32 0.0, %v1877
        %1879 = vmatmul.bf16.gmra.mxu0 %v654
        %v1880 = vpop.f32.mrf.mxu0
        %v1881 = vadd.f32 0.0, %v1880
        %v1882 = vpop.f32.mrf.mxu0
        %v1883 = vadd.f32 0.0, %v1882
        %1884 = vdwg.mxu0
        %1885 = vmatpush.bf16.msra.mxu0 %v974
        %1886 = vmatpush.bf16.msra.mxu0 %v970
        %1887 = vmatpush.bf16.msra.mxu0 %v966
        %1888 = vmatpush.bf16.msra.mxu0 %v962
        %1889 = vmatpush.bf16.msra.mxu0 %v958
        %1890 = vmatpush.bf16.msra.mxu0 %v954
        %1891 = vmatpush.bf16.msra.mxu0 %v950
        %1892 = vmatpush.bf16.msra.mxu0 %v946
        %1893 = vmatmul.bf16.gmra.mxu0 %v593
        %v1894 = vpop.f32.mrf.mxu0
        %v1895 = vadd.f32 %v1726, %v1894
        %v1896 = vpop.f32.mrf.mxu0
        %v1897 = vadd.f32 %v1728, %v1896
        %1898 = vmatmul.bf16.gmra.mxu0 %v595
        %v1899 = vpop.f32.mrf.mxu0
        %v1900 = vadd.f32 %v1731, %v1899
        %v1901 = vpop.f32.mrf.mxu0
        %v1902 = vadd.f32 %v1733, %v1901
        %1903 = vmatmul.bf16.gmra.mxu0 %v597
        %v1904 = vpop.f32.mrf.mxu0
        %v1905 = vadd.f32 %v1736, %v1904
        %v1906 = vpop.f32.mrf.mxu0
        %v1907 = vadd.f32 %v1738, %v1906
        %1908 = vmatmul.bf16.gmra.mxu0 %v599
        %v1909 = vpop.f32.mrf.mxu0
        %v1910 = vadd.f32 %v1741, %v1909
        %v1911 = vpop.f32.mrf.mxu0
        %v1912 = vadd.f32 %v1743, %v1911
        %1913 = vmatmul.bf16.gmra.mxu0 %v601
        %v1914 = vpop.f32.mrf.mxu0
        %v1915 = vadd.f32 %v1746, %v1914
        %v1916 = vpop.f32.mrf.mxu0
        %v1917 = vadd.f32 %v1748, %v1916
        %1918 = vmatmul.bf16.gmra.mxu0 %v603
        %v1919 = vpop.f32.mrf.mxu0
        %v1920 = vadd.f32 %v1751, %v1919
        %v1921 = vpop.f32.mrf.mxu0
        %v1922 = vadd.f32 %v1753, %v1921
        %1923 = vmatmul.bf16.gmra.mxu0 %v605
        %v1924 = vpop.f32.mrf.mxu0
        %v1925 = vadd.f32 %v1756, %v1924
        %v1926 = vpop.f32.mrf.mxu0
        %v1927 = vadd.f32 %v1758, %v1926
        %1928 = vmatmul.bf16.gmra.mxu0 %v607
        %v1929 = vpop.f32.mrf.mxu0
        %v1930 = vadd.f32 %v1761, %v1929
        %v1931 = vpop.f32.mrf.mxu0
        %v1932 = vadd.f32 %v1763, %v1931
        %1933 = vmatmul.bf16.gmra.mxu0 %v609
        %v1934 = vpop.f32.mrf.mxu0
        %v1935 = vadd.f32 %v1766, %v1934
        %v1936 = vpop.f32.mrf.mxu0
        %v1937 = vadd.f32 %v1768, %v1936
        %1938 = vmatmul.bf16.gmra.mxu0 %v611
        %v1939 = vpop.f32.mrf.mxu0
        %v1940 = vadd.f32 %v1771, %v1939
        %v1941 = vpop.f32.mrf.mxu0
        %v1942 = vadd.f32 %v1773, %v1941
        %1943 = vmatmul.bf16.gmra.mxu0 %v613
        %v1944 = vpop.f32.mrf.mxu0
        %v1945 = vadd.f32 %v1776, %v1944
        %v1946 = vpop.f32.mrf.mxu0
        %v1947 = vadd.f32 %v1778, %v1946
        %1948 = vmatmul.bf16.gmra.mxu0 %v615
        %v1949 = vpop.f32.mrf.mxu0
        %v1950 = vadd.f32 %v1781, %v1949
        %v1951 = vpop.f32.mrf.mxu0
        %v1952 = vadd.f32 %v1783, %v1951
        %1953 = vmatmul.bf16.gmra.mxu0 %v617
        %v1954 = vpop.f32.mrf.mxu0
        %v1955 = vadd.f32 %v1786, %v1954
        %v1956 = vpop.f32.mrf.mxu0
        %v1957 = vadd.f32 %v1788, %v1956
        %1958 = vmatmul.bf16.gmra.mxu0 %v619
        %v1959 = vpop.f32.mrf.mxu0
        %v1960 = vadd.f32 %v1791, %v1959
        %v1961 = vpop.f32.mrf.mxu0
        %v1962 = vadd.f32 %v1793, %v1961
        %1963 = vmatmul.bf16.gmra.mxu0 %v621
        %v1964 = vpop.f32.mrf.mxu0
        %v1965 = vadd.f32 %v1796, %v1964
        %v1966 = vpop.f32.mrf.mxu0
        %v1967 = vadd.f32 %v1798, %v1966
        %1968 = vmatmul.bf16.gmra.mxu0 %v623
        %v1969 = vpop.f32.mrf.mxu0
        %v1970 = vadd.f32 %v1801, %v1969
        %v1971 = vpop.f32.mrf.mxu0
        %v1972 = vadd.f32 %v1803, %v1971
        %1973 = vmatmul.bf16.gmra.mxu0 %v625
        %v1974 = vpop.f32.mrf.mxu0
        %v1975 = vadd.f32 %v1806, %v1974
        %v1976 = vpop.f32.mrf.mxu0
        %v1977 = vadd.f32 %v1808, %v1976
        %1978 = vmatmul.bf16.gmra.mxu0 %v627
        %v1979 = vpop.f32.mrf.mxu0
        %v1980 = vadd.f32 %v1811, %v1979
        %v1981 = vpop.f32.mrf.mxu0
        %v1982 = vadd.f32 %v1813, %v1981
        %1983 = vmatmul.bf16.gmra.mxu0 %v629
        %v1984 = vpop.f32.mrf.mxu0
        %v1985 = vadd.f32 %v1816, %v1984
        %v1986 = vpop.f32.mrf.mxu0
        %v1987 = vadd.f32 %v1818, %v1986
        %1988 = vmatmul.bf16.gmra.mxu0 %v631
        %v1989 = vpop.f32.mrf.mxu0
        %v1990 = vadd.f32 %v1821, %v1989
        %v1991 = vpop.f32.mrf.mxu0
        %v1992 = vadd.f32 %v1823, %v1991
        %1993 = vmatmul.bf16.gmra.mxu0 %v633
        %v1994 = vpop.f32.mrf.mxu0
        %v1995 = vadd.f32 %v1826, %v1994
        %v1996 = vpop.f32.mrf.mxu0
        %v1997 = vadd.f32 %v1828, %v1996
        %1998 = vmatmul.bf16.gmra.mxu0 %v635
        %v1999 = vpop.f32.mrf.mxu0
        %v2000 = vadd.f32 %v1831, %v1999
        %v2001 = vpop.f32.mrf.mxu0
        %v2002 = vadd.f32 %v1833, %v2001
        %2003 = vmatmul.bf16.gmra.mxu0 %v637
        %v2004 = vpop.f32.mrf.mxu0
        %v2005 = vadd.f32 %v1836, %v2004
        %v2006 = vpop.f32.mrf.mxu0
        %v2007 = vadd.f32 %v1838, %v2006
        %2008 = vmatmul.bf16.gmra.mxu0 %v639
        %v2009 = vpop.f32.mrf.mxu0
        %v2010 = vadd.f32 %v1841, %v2009
        %v2011 = vpop.f32.mrf.mxu0
        %v2012 = vadd.f32 %v1843, %v2011
        %2013 = vmatmul.bf16.gmra.mxu0 %v641
        %v2014 = vpop.f32.mrf.mxu0
        %v2015 = vadd.f32 %v1846, %v2014
        %v2016 = vpop.f32.mrf.mxu0
        %v2017 = vadd.f32 %v1848, %v2016
        %2018 = vmatmul.bf16.gmra.mxu0 %v643
        %v2019 = vpop.f32.mrf.mxu0
        %v2020 = vadd.f32 %v1851, %v2019
        %v2021 = vpop.f32.mrf.mxu0
        %v2022 = vadd.f32 %v1853, %v2021
        %2023 = vmatmul.bf16.gmra.mxu0 %v645
        %v2024 = vpop.f32.mrf.mxu0
        %v2025 = vadd.f32 %v1856, %v2024
        %v2026 = vpop.f32.mrf.mxu0
        %v2027 = vadd.f32 %v1858, %v2026
        %2028 = vmatmul.bf16.gmra.mxu0 %v647
        %v2029 = vpop.f32.mrf.mxu0
        %v2030 = vadd.f32 %v1861, %v2029
        %v2031 = vpop.f32.mrf.mxu0
        %v2032 = vadd.f32 %v1863, %v2031
        %2033 = vmatmul.bf16.gmra.mxu0 %v649
        %v2034 = vpop.f32.mrf.mxu0
        %v2035 = vadd.f32 %v1866, %v2034
        %v2036 = vpop.f32.mrf.mxu0
        %v2037 = vadd.f32 %v1868, %v2036
        %2038 = vmatmul.bf16.gmra.mxu0 %v651
        %v2039 = vpop.f32.mrf.mxu0
        %v2040 = vadd.f32 %v1871, %v2039
        %v2041 = vpop.f32.mrf.mxu0
        %v2042 = vadd.f32 %v1873, %v2041
        %2043 = vmatmul.bf16.gmra.mxu0 %v653
        %v2044 = vpop.f32.mrf.mxu0
        %v2045 = vadd.f32 %v1876, %v2044
        %v2046 = vpop.f32.mrf.mxu0
        %v2047 = vadd.f32 %v1878, %v2046
        %2048 = vmatmul.bf16.gmra.mxu0 %v655
        %v2049 = vpop.f32.mrf.mxu0
        %v2050 = vadd.f32 %v1881, %v2049
        %v2051 = vpop.f32.mrf.mxu0
        %v2052 = vadd.f32 %v1883, %v2051
        %2053 = vdwg.mxu0
        %2054 = vmatpush.bf16.msra.mxu0 %v943
        %2055 = vmatpush.bf16.msra.mxu0 %v939
        %2056 = vmatpush.bf16.msra.mxu0 %v935
        %2057 = vmatpush.bf16.msra.mxu0 %v931
        %2058 = vmatpush.bf16.msra.mxu0 %v927
        %2059 = vmatpush.bf16.msra.mxu0 %v923
        %2060 = vmatpush.bf16.msra.mxu0 %v919
        %2061 = vmatpush.bf16.msra.mxu0 %v915
        %2062 = vmatmul.bf16.gmra.mxu0 %v592
        %v2063 = vpop.f32.mrf.mxu0
        %v2064 = vadd.f32 0.0, %v2063
        %v2065 = vpop.f32.mrf.mxu0
        %v2066 = vadd.f32 0.0, %v2065
        %2067 = vmatmul.bf16.gmra.mxu0 %v594
        %v2068 = vpop.f32.mrf.mxu0
        %v2069 = vadd.f32 0.0, %v2068
        %v2070 = vpop.f32.mrf.mxu0
        %v2071 = vadd.f32 0.0, %v2070
        %2072 = vmatmul.bf16.gmra.mxu0 %v596
        %v2073 = vpop.f32.mrf.mxu0
        %v2074 = vadd.f32 0.0, %v2073
        %v2075 = vpop.f32.mrf.mxu0
        %v2076 = vadd.f32 0.0, %v2075
        %2077 = vmatmul.bf16.gmra.mxu0 %v598
        %v2078 = vpop.f32.mrf.mxu0
        %v2079 = vadd.f32 0.0, %v2078
        %v2080 = vpop.f32.mrf.mxu0
        %v2081 = vadd.f32 0.0, %v2080
        %2082 = vmatmul.bf16.gmra.mxu0 %v600
        %v2083 = vpop.f32.mrf.mxu0
        %v2084 = vadd.f32 0.0, %v2083
        %v2085 = vpop.f32.mrf.mxu0
        %v2086 = vadd.f32 0.0, %v2085
        %2087 = vmatmul.bf16.gmra.mxu0 %v602
        %v2088 = vpop.f32.mrf.mxu0
        %v2089 = vadd.f32 0.0, %v2088
        %v2090 = vpop.f32.mrf.mxu0
        %v2091 = vadd.f32 0.0, %v2090
        %2092 = vmatmul.bf16.gmra.mxu0 %v604
        %v2093 = vpop.f32.mrf.mxu0
        %v2094 = vadd.f32 0.0, %v2093
        %v2095 = vpop.f32.mrf.mxu0
        %v2096 = vadd.f32 0.0, %v2095
        %2097 = vmatmul.bf16.gmra.mxu0 %v606
        %v2098 = vpop.f32.mrf.mxu0
        %v2099 = vadd.f32 0.0, %v2098
        %v2100 = vpop.f32.mrf.mxu0
        %v2101 = vadd.f32 0.0, %v2100
        %2102 = vmatmul.bf16.gmra.mxu0 %v608
        %v2103 = vpop.f32.mrf.mxu0
        %v2104 = vadd.f32 0.0, %v2103
        %v2105 = vpop.f32.mrf.mxu0
        %v2106 = vadd.f32 0.0, %v2105
        %2107 = vmatmul.bf16.gmra.mxu0 %v610
        %v2108 = vpop.f32.mrf.mxu0
        %v2109 = vadd.f32 0.0, %v2108
        %v2110 = vpop.f32.mrf.mxu0
        %v2111 = vadd.f32 0.0, %v2110
        %2112 = vmatmul.bf16.gmra.mxu0 %v612
        %v2113 = vpop.f32.mrf.mxu0
        %v2114 = vadd.f32 0.0, %v2113
        %v2115 = vpop.f32.mrf.mxu0
        %v2116 = vadd.f32 0.0, %v2115
        %2117 = vmatmul.bf16.gmra.mxu0 %v614
        %v2118 = vpop.f32.mrf.mxu0
        %v2119 = vadd.f32 0.0, %v2118
        %v2120 = vpop.f32.mrf.mxu0
        %v2121 = vadd.f32 0.0, %v2120
        %2122 = vmatmul.bf16.gmra.mxu0 %v616
        %v2123 = vpop.f32.mrf.mxu0
        %v2124 = vadd.f32 0.0, %v2123
        %v2125 = vpop.f32.mrf.mxu0
        %v2126 = vadd.f32 0.0, %v2125
        %2127 = vmatmul.bf16.gmra.mxu0 %v618
        %v2128 = vpop.f32.mrf.mxu0
        %v2129 = vadd.f32 0.0, %v2128
        %v2130 = vpop.f32.mrf.mxu0
        %v2131 = vadd.f32 0.0, %v2130
        %2132 = vmatmul.bf16.gmra.mxu0 %v620
        %v2133 = vpop.f32.mrf.mxu0
        %v2134 = vadd.f32 0.0, %v2133
        %v2135 = vpop.f32.mrf.mxu0
        %v2136 = vadd.f32 0.0, %v2135
        %2137 = vmatmul.bf16.gmra.mxu0 %v622
        %v2138 = vpop.f32.mrf.mxu0
        %v2139 = vadd.f32 0.0, %v2138
        %v2140 = vpop.f32.mrf.mxu0
        %v2141 = vadd.f32 0.0, %v2140
        %2142 = vmatmul.bf16.gmra.mxu0 %v624
        %v2143 = vpop.f32.mrf.mxu0
        %v2144 = vadd.f32 0.0, %v2143
        %v2145 = vpop.f32.mrf.mxu0
        %v2146 = vadd.f32 0.0, %v2145
        %2147 = vmatmul.bf16.gmra.mxu0 %v626
        %v2148 = vpop.f32.mrf.mxu0
        %v2149 = vadd.f32 0.0, %v2148
        %v2150 = vpop.f32.mrf.mxu0
        %v2151 = vadd.f32 0.0, %v2150
        %2152 = vmatmul.bf16.gmra.mxu0 %v628
        %v2153 = vpop.f32.mrf.mxu0
        %v2154 = vadd.f32 0.0, %v2153
        %v2155 = vpop.f32.mrf.mxu0
        %v2156 = vadd.f32 0.0, %v2155
        %2157 = vmatmul.bf16.gmra.mxu0 %v630
        %v2158 = vpop.f32.mrf.mxu0
        %v2159 = vadd.f32 0.0, %v2158
        %v2160 = vpop.f32.mrf.mxu0
        %v2161 = vadd.f32 0.0, %v2160
        %2162 = vmatmul.bf16.gmra.mxu0 %v632
        %v2163 = vpop.f32.mrf.mxu0
        %v2164 = vadd.f32 0.0, %v2163
        %v2165 = vpop.f32.mrf.mxu0
        %v2166 = vadd.f32 0.0, %v2165
        %2167 = vmatmul.bf16.gmra.mxu0 %v634
        %v2168 = vpop.f32.mrf.mxu0
        %v2169 = vadd.f32 0.0, %v2168
        %v2170 = vpop.f32.mrf.mxu0
        %v2171 = vadd.f32 0.0, %v2170
        %2172 = vmatmul.bf16.gmra.mxu0 %v636
        %v2173 = vpop.f32.mrf.mxu0
        %v2174 = vadd.f32 0.0, %v2173
        %v2175 = vpop.f32.mrf.mxu0
        %v2176 = vadd.f32 0.0, %v2175
        %2177 = vmatmul.bf16.gmra.mxu0 %v638
        %v2178 = vpop.f32.mrf.mxu0
        %v2179 = vadd.f32 0.0, %v2178
        %v2180 = vpop.f32.mrf.mxu0
        %v2181 = vadd.f32 0.0, %v2180
        %2182 = vmatmul.bf16.gmra.mxu0 %v640
        %v2183 = vpop.f32.mrf.mxu0
        %v2184 = vadd.f32 0.0, %v2183
        %v2185 = vpop.f32.mrf.mxu0
        %v2186 = vadd.f32 0.0, %v2185
        %2187 = vmatmul.bf16.gmra.mxu0 %v642
        %v2188 = vpop.f32.mrf.mxu0
        %v2189 = vadd.f32 0.0, %v2188
        %v2190 = vpop.f32.mrf.mxu0
        %v2191 = vadd.f32 0.0, %v2190
        %2192 = vmatmul.bf16.gmra.mxu0 %v644
        %v2193 = vpop.f32.mrf.mxu0
        %v2194 = vadd.f32 0.0, %v2193
        %v2195 = vpop.f32.mrf.mxu0
        %v2196 = vadd.f32 0.0, %v2195
        %2197 = vmatmul.bf16.gmra.mxu0 %v646
        %v2198 = vpop.f32.mrf.mxu0
        %v2199 = vadd.f32 0.0, %v2198
        %v2200 = vpop.f32.mrf.mxu0
        %v2201 = vadd.f32 0.0, %v2200
        %2202 = vmatmul.bf16.gmra.mxu0 %v648
        %v2203 = vpop.f32.mrf.mxu0
        %v2204 = vadd.f32 0.0, %v2203
        %v2205 = vpop.f32.mrf.mxu0
        %v2206 = vadd.f32 0.0, %v2205
        %2207 = vmatmul.bf16.gmra.mxu0 %v650
        %v2208 = vpop.f32.mrf.mxu0
        %v2209 = vadd.f32 0.0, %v2208
        %v2210 = vpop.f32.mrf.mxu0
        %v2211 = vadd.f32 0.0, %v2210
        %2212 = vmatmul.bf16.gmra.mxu0 %v652
        %v2213 = vpop.f32.mrf.mxu0
        %v2214 = vadd.f32 0.0, %v2213
        %v2215 = vpop.f32.mrf.mxu0
        %v2216 = vadd.f32 0.0, %v2215
        %2217 = vmatmul.bf16.gmra.mxu0 %v654
        %v2218 = vpop.f32.mrf.mxu0
        %v2219 = vadd.f32 0.0, %v2218
        %v2220 = vpop.f32.mrf.mxu0
        %v2221 = vadd.f32 0.0, %v2220
        %2222 = vdwg.mxu0
        %2223 = vmatpush.bf16.msra.mxu0 %v975
        %2224 = vmatpush.bf16.msra.mxu0 %v971
        %2225 = vmatpush.bf16.msra.mxu0 %v967
        %2226 = vmatpush.bf16.msra.mxu0 %v963
        %2227 = vmatpush.bf16.msra.mxu0 %v959
        %2228 = vmatpush.bf16.msra.mxu0 %v955
        %2229 = vmatpush.bf16.msra.mxu0 %v951
        %2230 = vmatpush.bf16.msra.mxu0 %v947
        %2231 = vmatmul.bf16.gmra.mxu0 %v593
        %v2232 = vpop.f32.mrf.mxu0
        %v2233 = vadd.f32 %v2064, %v2232
        %v2234 = vpop.f32.mrf.mxu0
        %v2235 = vadd.f32 %v2066, %v2234
        %2236 = vmatmul.bf16.gmra.mxu0 %v595
        %v2237 = vpop.f32.mrf.mxu0
        %v2238 = vadd.f32 %v2069, %v2237
        %v2239 = vpop.f32.mrf.mxu0
        %v2240 = vadd.f32 %v2071, %v2239
        %2241 = vmatmul.bf16.gmra.mxu0 %v597
        %v2242 = vpop.f32.mrf.mxu0
        %v2243 = vadd.f32 %v2074, %v2242
        %v2244 = vpop.f32.mrf.mxu0
        %v2245 = vadd.f32 %v2076, %v2244
        %2246 = vmatmul.bf16.gmra.mxu0 %v599
        %v2247 = vpop.f32.mrf.mxu0
        %v2248 = vadd.f32 %v2079, %v2247
        %v2249 = vpop.f32.mrf.mxu0
        %v2250 = vadd.f32 %v2081, %v2249
        %2251 = vmatmul.bf16.gmra.mxu0 %v601
        %v2252 = vpop.f32.mrf.mxu0
        %v2253 = vadd.f32 %v2084, %v2252
        %v2254 = vpop.f32.mrf.mxu0
        %v2255 = vadd.f32 %v2086, %v2254
        %2256 = vmatmul.bf16.gmra.mxu0 %v603
        %v2257 = vpop.f32.mrf.mxu0
        %v2258 = vadd.f32 %v2089, %v2257
        %v2259 = vpop.f32.mrf.mxu0
        %v2260 = vadd.f32 %v2091, %v2259
        %2261 = vmatmul.bf16.gmra.mxu0 %v605
        %v2262 = vpop.f32.mrf.mxu0
        %v2263 = vadd.f32 %v2094, %v2262
        %v2264 = vpop.f32.mrf.mxu0
        %v2265 = vadd.f32 %v2096, %v2264
        %2266 = vmatmul.bf16.gmra.mxu0 %v607
        %v2267 = vpop.f32.mrf.mxu0
        %v2268 = vadd.f32 %v2099, %v2267
        %v2269 = vpop.f32.mrf.mxu0
        %v2270 = vadd.f32 %v2101, %v2269
        %2271 = vmatmul.bf16.gmra.mxu0 %v609
        %v2272 = vpop.f32.mrf.mxu0
        %v2273 = vadd.f32 %v2104, %v2272
        %v2274 = vpop.f32.mrf.mxu0
        %v2275 = vadd.f32 %v2106, %v2274
        %2276 = vmatmul.bf16.gmra.mxu0 %v611
        %v2277 = vpop.f32.mrf.mxu0
        %v2278 = vadd.f32 %v2109, %v2277
        %v2279 = vpop.f32.mrf.mxu0
        %v2280 = vadd.f32 %v2111, %v2279
        %2281 = vmatmul.bf16.gmra.mxu0 %v613
        %v2282 = vpop.f32.mrf.mxu0
        %v2283 = vadd.f32 %v2114, %v2282
        %v2284 = vpop.f32.mrf.mxu0
        %v2285 = vadd.f32 %v2116, %v2284
        %2286 = vmatmul.bf16.gmra.mxu0 %v615
        %v2287 = vpop.f32.mrf.mxu0
        %v2288 = vadd.f32 %v2119, %v2287
        %v2289 = vpop.f32.mrf.mxu0
        %v2290 = vadd.f32 %v2121, %v2289
        %2291 = vmatmul.bf16.gmra.mxu0 %v617
        %v2292 = vpop.f32.mrf.mxu0
        %v2293 = vadd.f32 %v2124, %v2292
        %v2294 = vpop.f32.mrf.mxu0
        %v2295 = vadd.f32 %v2126, %v2294
        %2296 = vmatmul.bf16.gmra.mxu0 %v619
        %v2297 = vpop.f32.mrf.mxu0
        %v2298 = vadd.f32 %v2129, %v2297
        %v2299 = vpop.f32.mrf.mxu0
        %v2300 = vadd.f32 %v2131, %v2299
        %2301 = vmatmul.bf16.gmra.mxu0 %v621
        %v2302 = vpop.f32.mrf.mxu0
        %v2303 = vadd.f32 %v2134, %v2302
        %v2304 = vpop.f32.mrf.mxu0
        %v2305 = vadd.f32 %v2136, %v2304
        %2306 = vmatmul.bf16.gmra.mxu0 %v623
        %v2307 = vpop.f32.mrf.mxu0
        %v2308 = vadd.f32 %v2139, %v2307
        %v2309 = vpop.f32.mrf.mxu0
        %v2310 = vadd.f32 %v2141, %v2309
        %2311 = vmatmul.bf16.gmra.mxu0 %v625
        %v2312 = vpop.f32.mrf.mxu0
        %v2313 = vadd.f32 %v2144, %v2312
        %v2314 = vpop.f32.mrf.mxu0
        %v2315 = vadd.f32 %v2146, %v2314
        %2316 = vmatmul.bf16.gmra.mxu0 %v627
        %v2317 = vpop.f32.mrf.mxu0
        %v2318 = vadd.f32 %v2149, %v2317
        %v2319 = vpop.f32.mrf.mxu0
        %v2320 = vadd.f32 %v2151, %v2319
        %2321 = vmatmul.bf16.gmra.mxu0 %v629
        %v2322 = vpop.f32.mrf.mxu0
        %v2323 = vadd.f32 %v2154, %v2322
        %v2324 = vpop.f32.mrf.mxu0
        %v2325 = vadd.f32 %v2156, %v2324
        %2326 = vmatmul.bf16.gmra.mxu0 %v631
        %v2327 = vpop.f32.mrf.mxu0
        %v2328 = vadd.f32 %v2159, %v2327
        %v2329 = vpop.f32.mrf.mxu0
        %v2330 = vadd.f32 %v2161, %v2329
        %2331 = vmatmul.bf16.gmra.mxu0 %v633
        %v2332 = vpop.f32.mrf.mxu0
        %v2333 = vadd.f32 %v2164, %v2332
        %v2334 = vpop.f32.mrf.mxu0
        %v2335 = vadd.f32 %v2166, %v2334
        %2336 = vmatmul.bf16.gmra.mxu0 %v635
        %v2337 = vpop.f32.mrf.mxu0
        %v2338 = vadd.f32 %v2169, %v2337
        %v2339 = vpop.f32.mrf.mxu0
        %v2340 = vadd.f32 %v2171, %v2339
        %2341 = vmatmul.bf16.gmra.mxu0 %v637
        %v2342 = vpop.f32.mrf.mxu0
        %v2343 = vadd.f32 %v2174, %v2342
        %v2344 = vpop.f32.mrf.mxu0
        %v2345 = vadd.f32 %v2176, %v2344
        %2346 = vmatmul.bf16.gmra.mxu0 %v639
        %v2347 = vpop.f32.mrf.mxu0
        %v2348 = vadd.f32 %v2179, %v2347
        %v2349 = vpop.f32.mrf.mxu0
        %v2350 = vadd.f32 %v2181, %v2349
        %2351 = vmatmul.bf16.gmra.mxu0 %v641
        %v2352 = vpop.f32.mrf.mxu0
        %v2353 = vadd.f32 %v2184, %v2352
        %v2354 = vpop.f32.mrf.mxu0
        %v2355 = vadd.f32 %v2186, %v2354
        %2356 = vmatmul.bf16.gmra.mxu0 %v643
        %v2357 = vpop.f32.mrf.mxu0
        %v2358 = vadd.f32 %v2189, %v2357
        %v2359 = vpop.f32.mrf.mxu0
        %v2360 = vadd.f32 %v2191, %v2359
        %2361 = vmatmul.bf16.gmra.mxu0 %v645
        %v2362 = vpop.f32.mrf.mxu0
        %v2363 = vadd.f32 %v2194, %v2362
        %v2364 = vpop.f32.mrf.mxu0
        %v2365 = vadd.f32 %v2196, %v2364
        %2366 = vmatmul.bf16.gmra.mxu0 %v647
        %v2367 = vpop.f32.mrf.mxu0
        %v2368 = vadd.f32 %v2199, %v2367
        %v2369 = vpop.f32.mrf.mxu0
        %v2370 = vadd.f32 %v2201, %v2369
        %2371 = vmatmul.bf16.gmra.mxu0 %v649
        %v2372 = vpop.f32.mrf.mxu0
        %v2373 = vadd.f32 %v2204, %v2372
        %v2374 = vpop.f32.mrf.mxu0
        %v2375 = vadd.f32 %v2206, %v2374
        %2376 = vmatmul.bf16.gmra.mxu0 %v651
        %v2377 = vpop.f32.mrf.mxu0
        %v2378 = vadd.f32 %v2209, %v2377
        %v2379 = vpop.f32.mrf.mxu0
        %v2380 = vadd.f32 %v2211, %v2379
        %2381 = vmatmul.bf16.gmra.mxu0 %v653
        %v2382 = vpop.f32.mrf.mxu0
        %v2383 = vadd.f32 %v2214, %v2382
        %v2384 = vpop.f32.mrf.mxu0
        %v2385 = vadd.f32 %v2216, %v2384
        %2386 = vmatmul.bf16.gmra.mxu0 %v655
        %v2387 = vpop.f32.mrf.mxu0
        %v2388 = vadd.f32 %v2219, %v2387
        %v2389 = vpop.f32.mrf.mxu0
        %v2390 = vadd.f32 %v2221, %v2389
        %2391 = vdwg.mxu0
        %v2392 = vmul.f32 %v1219, %v1219
        %v2393 = vmul.f32 %v1557, %v1557
        %v2394 = vmul.f32 %v1221, %v1221
        %v2395 = vmul.f32 %v1559, %v1559
        %v2396 = vmul.f32 %v1224, %v1224
        %v2397 = vmul.f32 %v1562, %v1562
        %v2398 = vmul.f32 %v1226, %v1226
        %v2399 = vmul.f32 %v1564, %v1564
        %v2400 = vmul.f32 %v1229, %v1229
        %v2401 = vmul.f32 %v1567, %v1567
        %v2402 = vmul.f32 %v1231, %v1231
        %v2403 = vmul.f32 %v1569, %v1569
        %v2404 = vmul.f32 %v1234, %v1234
        %v2405 = vmul.f32 %v1572, %v1572
        %v2406 = vmul.f32 %v1236, %v1236
        %v2407 = vmul.f32 %v1574, %v1574
        %v2408 = vmul.f32 %v1239, %v1239
        %v2409 = vmul.f32 %v1577, %v1577
        %v2410 = vmul.f32 %v1241, %v1241
        %v2411 = vmul.f32 %v1579, %v1579
        %v2412 = vmul.f32 %v1244, %v1244
        %v2413 = vmul.f32 %v1582, %v1582
        %v2414 = vmul.f32 %v1246, %v1246
        %v2415 = vmul.f32 %v1584, %v1584
        %v2416 = vmul.f32 %v1249, %v1249
        %v2417 = vmul.f32 %v1587, %v1587
        %v2418 = vmul.f32 %v1251, %v1251
        %v2419 = vmul.f32 %v1589, %v1589
        %v2420 = vmul.f32 %v1254, %v1254
        %v2421 = vmul.f32 %v1592, %v1592
        %v2422 = vmul.f32 %v1256, %v1256
        %v2423 = vmul.f32 %v1594, %v1594
        %v2424 = vmul.f32 %v1259, %v1259
        %v2425 = vmul.f32 %v1597, %v1597
        %v2426 = vmul.f32 %v1261, %v1261
        %v2427 = vmul.f32 %v1599, %v1599
        %v2428 = vmul.f32 %v1264, %v1264
        %v2429 = vmul.f32 %v1602, %v1602
        %v2430 = vmul.f32 %v1266, %v1266
        %v2431 = vmul.f32 %v1604, %v1604
        %v2432 = vmul.f32 %v1269, %v1269
        %v2433 = vmul.f32 %v1607, %v1607
        %v2434 = vmul.f32 %v1271, %v1271
        %v2435 = vmul.f32 %v1609, %v1609
        %v2436 = vmul.f32 %v1274, %v1274
        %v2437 = vmul.f32 %v1612, %v1612
        %v2438 = vmul.f32 %v1276, %v1276
        %v2439 = vmul.f32 %v1614, %v1614
        %v2440 = vmul.f32 %v1279, %v1279
        %v2441 = vmul.f32 %v1617, %v1617
        %v2442 = vmul.f32 %v1281, %v1281
        %v2443 = vmul.f32 %v1619, %v1619
        %v2444 = vmul.f32 %v1284, %v1284
        %v2445 = vmul.f32 %v1622, %v1622
        %v2446 = vmul.f32 %v1286, %v1286
        %v2447 = vmul.f32 %v1624, %v1624
        %v2448 = vmul.f32 %v1289, %v1289
        %v2449 = vmul.f32 %v1627, %v1627
        %v2450 = vmul.f32 %v1291, %v1291
        %v2451 = vmul.f32 %v1629, %v1629
        %v2452 = vmul.f32 %v1294, %v1294
        %v2453 = vmul.f32 %v1632, %v1632
        %v2454 = vmul.f32 %v1296, %v1296
        %v2455 = vmul.f32 %v1634, %v1634
        %v2456 = vmul.f32 %v1299, %v1299
        %v2457 = vmul.f32 %v1637, %v1637
        %v2458 = vmul.f32 %v1301, %v1301
        %v2459 = vmul.f32 %v1639, %v1639
        %v2460 = vmul.f32 %v1304, %v1304
        %v2461 = vmul.f32 %v1642, %v1642
        %v2462 = vmul.f32 %v1306, %v1306
        %v2463 = vmul.f32 %v1644, %v1644
        %v2464 = vmul.f32 %v1309, %v1309
        %v2465 = vmul.f32 %v1647, %v1647
        %v2466 = vmul.f32 %v1311, %v1311
        %v2467 = vmul.f32 %v1649, %v1649
        %v2468 = vmul.f32 %v1314, %v1314
        %v2469 = vmul.f32 %v1652, %v1652
        %v2470 = vmul.f32 %v1316, %v1316
        %v2471 = vmul.f32 %v1654, %v1654
        %v2472 = vmul.f32 %v1319, %v1319
        %v2473 = vmul.f32 %v1657, %v1657
        %v2474 = vmul.f32 %v1321, %v1321
        %v2475 = vmul.f32 %v1659, %v1659
        %v2476 = vmul.f32 %v1324, %v1324
        %v2477 = vmul.f32 %v1662, %v1662
        %v2478 = vmul.f32 %v1326, %v1326
        %v2479 = vmul.f32 %v1664, %v1664
        %v2480 = vmul.f32 %v1329, %v1329
        %v2481 = vmul.f32 %v1667, %v1667
        %v2482 = vmul.f32 %v1331, %v1331
        %v2483 = vmul.f32 %v1669, %v1669
        %v2484 = vmul.f32 %v1334, %v1334
        %v2485 = vmul.f32 %v1672, %v1672
        %v2486 = vmul.f32 %v1336, %v1336
        %v2487 = vmul.f32 %v1674, %v1674
        %v2488 = vmul.f32 %v1339, %v1339
        %v2489 = vmul.f32 %v1677, %v1677
        %v2490 = vmul.f32 %v1341, %v1341
        %v2491 = vmul.f32 %v1679, %v1679
        %v2492 = vmul.f32 %v1344, %v1344
        %v2493 = vmul.f32 %v1682, %v1682
        %v2494 = vmul.f32 %v1346, %v1346
        %v2495 = vmul.f32 %v1684, %v1684
        %v2496 = vmul.f32 %v1349, %v1349
        %v2497 = vmul.f32 %v1687, %v1687
        %v2498 = vmul.f32 %v1351, %v1351
        %v2499 = vmul.f32 %v1689, %v1689
        %v2500 = vmul.f32 %v1354, %v1354
        %v2501 = vmul.f32 %v1692, %v1692
        %v2502 = vmul.f32 %v1356, %v1356
        %v2503 = vmul.f32 %v1694, %v1694
        %v2504 = vmul.f32 %v1359, %v1359
        %v2505 = vmul.f32 %v1697, %v1697
        %v2506 = vmul.f32 %v1361, %v1361
        %v2507 = vmul.f32 %v1699, %v1699
        %v2508 = vmul.f32 %v1364, %v1364
        %v2509 = vmul.f32 %v1702, %v1702
        %v2510 = vmul.f32 %v1366, %v1366
        %v2511 = vmul.f32 %v1704, %v1704
        %v2512 = vmul.f32 %v1369, %v1369
        %v2513 = vmul.f32 %v1707, %v1707
        %v2514 = vmul.f32 %v1371, %v1371
        %v2515 = vmul.f32 %v1709, %v1709
        %v2516 = vmul.f32 %v1374, %v1374
        %v2517 = vmul.f32 %v1712, %v1712
        %v2518 = vmul.f32 %v1376, %v1376
        %v2519 = vmul.f32 %v1714, %v1714
        %v2520 = vmul.f32 %v1895, %v1895
        %v2521 = vmul.f32 %v2233, %v2233
        %v2522 = vmul.f32 %v1897, %v1897
        %v2523 = vmul.f32 %v2235, %v2235
        %v2524 = vmul.f32 %v1900, %v1900
        %v2525 = vmul.f32 %v2238, %v2238
        %v2526 = vmul.f32 %v1902, %v1902
        %v2527 = vmul.f32 %v2240, %v2240
        %v2528 = vmul.f32 %v1905, %v1905
        %v2529 = vmul.f32 %v2243, %v2243
        %v2530 = vmul.f32 %v1907, %v1907
        %v2531 = vmul.f32 %v2245, %v2245
        %v2532 = vmul.f32 %v1910, %v1910
        %v2533 = vmul.f32 %v2248, %v2248
        %v2534 = vmul.f32 %v1912, %v1912
        %v2535 = vmul.f32 %v2250, %v2250
        %v2536 = vmul.f32 %v1915, %v1915
        %v2537 = vmul.f32 %v2253, %v2253
        %v2538 = vmul.f32 %v1917, %v1917
        %v2539 = vmul.f32 %v2255, %v2255
        %v2540 = vmul.f32 %v1920, %v1920
        %v2541 = vmul.f32 %v2258, %v2258
        %v2542 = vmul.f32 %v1922, %v1922
        %v2543 = vmul.f32 %v2260, %v2260
        %v2544 = vmul.f32 %v1925, %v1925
        %v2545 = vmul.f32 %v2263, %v2263
        %v2546 = vmul.f32 %v1927, %v1927
        %v2547 = vmul.f32 %v2265, %v2265
        %v2548 = vmul.f32 %v1930, %v1930
        %v2549 = vmul.f32 %v2268, %v2268
        %v2550 = vmul.f32 %v1932, %v1932
        %v2551 = vmul.f32 %v2270, %v2270
        %v2552 = vmul.f32 %v1935, %v1935
        %v2553 = vmul.f32 %v2273, %v2273
        %v2554 = vmul.f32 %v1937, %v1937
        %v2555 = vmul.f32 %v2275, %v2275
        %v2556 = vmul.f32 %v1940, %v1940
        %v2557 = vmul.f32 %v2278, %v2278
        %v2558 = vmul.f32 %v1942, %v1942
        %v2559 = vmul.f32 %v2280, %v2280
        %v2560 = vmul.f32 %v1945, %v1945
        %v2561 = vmul.f32 %v2283, %v2283
        %v2562 = vmul.f32 %v1947, %v1947
        %v2563 = vmul.f32 %v2285, %v2285
        %v2564 = vmul.f32 %v1950, %v1950
        %v2565 = vmul.f32 %v2288, %v2288
        %v2566 = vmul.f32 %v1952, %v1952
        %v2567 = vmul.f32 %v2290, %v2290
        %v2568 = vmul.f32 %v1955, %v1955
        %v2569 = vmul.f32 %v2293, %v2293
        %v2570 = vmul.f32 %v1957, %v1957
        %v2571 = vmul.f32 %v2295, %v2295
        %v2572 = vmul.f32 %v1960, %v1960
        %v2573 = vmul.f32 %v2298, %v2298
        %v2574 = vmul.f32 %v1962, %v1962
        %v2575 = vmul.f32 %v2300, %v2300
        %v2576 = vmul.f32 %v1965, %v1965
        %v2577 = vmul.f32 %v2303, %v2303
        %v2578 = vmul.f32 %v1967, %v1967
        %v2579 = vmul.f32 %v2305, %v2305
        %v2580 = vmul.f32 %v1970, %v1970
        %v2581 = vmul.f32 %v2308, %v2308
        %v2582 = vmul.f32 %v1972, %v1972
        %v2583 = vmul.f32 %v2310, %v2310
        %v2584 = vmul.f32 %v1975, %v1975
        %v2585 = vmul.f32 %v2313, %v2313
        %v2586 = vmul.f32 %v1977, %v1977
        %v2587 = vmul.f32 %v2315, %v2315
        %v2588 = vmul.f32 %v1980, %v1980
        %v2589 = vmul.f32 %v2318, %v2318
        %v2590 = vmul.f32 %v1982, %v1982
        %v2591 = vmul.f32 %v2320, %v2320
        %v2592 = vmul.f32 %v1985, %v1985
        %v2593 = vmul.f32 %v2323, %v2323
        %v2594 = vmul.f32 %v1987, %v1987
        %v2595 = vmul.f32 %v2325, %v2325
        %v2596 = vmul.f32 %v1990, %v1990
        %v2597 = vmul.f32 %v2328, %v2328
        %v2598 = vmul.f32 %v1992, %v1992
        %v2599 = vmul.f32 %v2330, %v2330
        %v2600 = vmul.f32 %v1995, %v1995
        %v2601 = vmul.f32 %v2333, %v2333
        %v2602 = vmul.f32 %v1997, %v1997
        %v2603 = vmul.f32 %v2335, %v2335
        %v2604 = vmul.f32 %v2000, %v2000
        %v2605 = vmul.f32 %v2338, %v2338
        %v2606 = vmul.f32 %v2002, %v2002
        %v2607 = vmul.f32 %v2340, %v2340
        %v2608 = vmul.f32 %v2005, %v2005
        %v2609 = vmul.f32 %v2343, %v2343
        %v2610 = vmul.f32 %v2007, %v2007
        %v2611 = vmul.f32 %v2345, %v2345
        %v2612 = vmul.f32 %v2010, %v2010
        %v2613 = vmul.f32 %v2348, %v2348
        %v2614 = vmul.f32 %v2012, %v2012
        %v2615 = vmul.f32 %v2350, %v2350
        %v2616 = vmul.f32 %v2015, %v2015
        %v2617 = vmul.f32 %v2353, %v2353
        %v2618 = vmul.f32 %v2017, %v2017
        %v2619 = vmul.f32 %v2355, %v2355
        %v2620 = vmul.f32 %v2020, %v2020
        %v2621 = vmul.f32 %v2358, %v2358
        %v2622 = vmul.f32 %v2022, %v2022
        %v2623 = vmul.f32 %v2360, %v2360
        %v2624 = vmul.f32 %v2025, %v2025
        %v2625 = vmul.f32 %v2363, %v2363
        %v2626 = vmul.f32 %v2027, %v2027
        %v2627 = vmul.f32 %v2365, %v2365
        %v2628 = vmul.f32 %v2030, %v2030
        %v2629 = vmul.f32 %v2368, %v2368
        %v2630 = vmul.f32 %v2032, %v2032
        %v2631 = vmul.f32 %v2370, %v2370
        %v2632 = vmul.f32 %v2035, %v2035
        %v2633 = vmul.f32 %v2373, %v2373
        %v2634 = vmul.f32 %v2037, %v2037
        %v2635 = vmul.f32 %v2375, %v2375
        %v2636 = vmul.f32 %v2040, %v2040
        %v2637 = vmul.f32 %v2378, %v2378
        %v2638 = vmul.f32 %v2042, %v2042
        %v2639 = vmul.f32 %v2380, %v2380
        %v2640 = vmul.f32 %v2045, %v2045
        %v2641 = vmul.f32 %v2383, %v2383
        %v2642 = vmul.f32 %v2047, %v2047
        %v2643 = vmul.f32 %v2385, %v2385
        %v2644 = vmul.f32 %v2050, %v2050
        %v2645 = vmul.f32 %v2388, %v2388
        %v2646 = vmul.f32 %v2052, %v2052
        %v2647 = vmul.f32 %v2390, %v2390
        %v2648 = vadd.f32 %v2392, %v2520
        %v2649 = vadd.f32 %v2393, %v2521
        %v2650 = vadd.f32 %v2394, %v2522
        %v2651 = vadd.f32 %v2395, %v2523
        %v2652 = vadd.f32 %v2396, %v2524
        %v2653 = vadd.f32 %v2397, %v2525
        %v2654 = vadd.f32 %v2398, %v2526
        %v2655 = vadd.f32 %v2399, %v2527
        %v2656 = vadd.f32 %v2400, %v2528
        %v2657 = vadd.f32 %v2401, %v2529
        %v2658 = vadd.f32 %v2402, %v2530
        %v2659 = vadd.f32 %v2403, %v2531
        %v2660 = vadd.f32 %v2404, %v2532
        %v2661 = vadd.f32 %v2405, %v2533
        %v2662 = vadd.f32 %v2406, %v2534
        %v2663 = vadd.f32 %v2407, %v2535
        %v2664 = vadd.f32 %v2408, %v2536
        %v2665 = vadd.f32 %v2409, %v2537
        %v2666 = vadd.f32 %v2410, %v2538
        %v2667 = vadd.f32 %v2411, %v2539
        %v2668 = vadd.f32 %v2412, %v2540
        %v2669 = vadd.f32 %v2413, %v2541
        %v2670 = vadd.f32 %v2414, %v2542
        %v2671 = vadd.f32 %v2415, %v2543
        %v2672 = vadd.f32 %v2416, %v2544
        %v2673 = vadd.f32 %v2417, %v2545
        %v2674 = vadd.f32 %v2418, %v2546
        %v2675 = vadd.f32 %v2419, %v2547
        %v2676 = vadd.f32 %v2420, %v2548
        %v2677 = vadd.f32 %v2421, %v2549
        %v2678 = vadd.f32 %v2422, %v2550
        %v2679 = vadd.f32 %v2423, %v2551
        %v2680 = vadd.f32 %v2424, %v2552
        %v2681 = vadd.f32 %v2425, %v2553
        %v2682 = vadd.f32 %v2426, %v2554
        %v2683 = vadd.f32 %v2427, %v2555
        %v2684 = vadd.f32 %v2428, %v2556
        %v2685 = vadd.f32 %v2429, %v2557
        %v2686 = vadd.f32 %v2430, %v2558
        %v2687 = vadd.f32 %v2431, %v2559
        %v2688 = vadd.f32 %v2432, %v2560
        %v2689 = vadd.f32 %v2433, %v2561
        %v2690 = vadd.f32 %v2434, %v2562
        %v2691 = vadd.f32 %v2435, %v2563
        %v2692 = vadd.f32 %v2436, %v2564
        %v2693 = vadd.f32 %v2437, %v2565
        %v2694 = vadd.f32 %v2438, %v2566
        %v2695 = vadd.f32 %v2439, %v2567
        %v2696 = vadd.f32 %v2440, %v2568
        %v2697 = vadd.f32 %v2441, %v2569
        %v2698 = vadd.f32 %v2442, %v2570
        %v2699 = vadd.f32 %v2443, %v2571
        %v2700 = vadd.f32 %v2444, %v2572
        %v2701 = vadd.f32 %v2445, %v2573
        %v2702 = vadd.f32 %v2446, %v2574
        %v2703 = vadd.f32 %v2447, %v2575
        %v2704 = vadd.f32 %v2448, %v2576
        %v2705 = vadd.f32 %v2449, %v2577
        %v2706 = vadd.f32 %v2450, %v2578
        %v2707 = vadd.f32 %v2451, %v2579
        %v2708 = vadd.f32 %v2452, %v2580
        %v2709 = vadd.f32 %v2453, %v2581
        %v2710 = vadd.f32 %v2454, %v2582
        %v2711 = vadd.f32 %v2455, %v2583
        %v2712 = vadd.f32 %v2456, %v2584
        %v2713 = vadd.f32 %v2457, %v2585
        %v2714 = vadd.f32 %v2458, %v2586
        %v2715 = vadd.f32 %v2459, %v2587
        %v2716 = vadd.f32 %v2460, %v2588
        %v2717 = vadd.f32 %v2461, %v2589
        %v2718 = vadd.f32 %v2462, %v2590
        %v2719 = vadd.f32 %v2463, %v2591
        %v2720 = vadd.f32 %v2464, %v2592
        %v2721 = vadd.f32 %v2465, %v2593
        %v2722 = vadd.f32 %v2466, %v2594
        %v2723 = vadd.f32 %v2467, %v2595
        %v2724 = vadd.f32 %v2468, %v2596
        %v2725 = vadd.f32 %v2469, %v2597
        %v2726 = vadd.f32 %v2470, %v2598
        %v2727 = vadd.f32 %v2471, %v2599
        %v2728 = vadd.f32 %v2472, %v2600
        %v2729 = vadd.f32 %v2473, %v2601
        %v2730 = vadd.f32 %v2474, %v2602
        %v2731 = vadd.f32 %v2475, %v2603
        %v2732 = vadd.f32 %v2476, %v2604
        %v2733 = vadd.f32 %v2477, %v2605
        %v2734 = vadd.f32 %v2478, %v2606
        %v2735 = vadd.f32 %v2479, %v2607
        %v2736 = vadd.f32 %v2480, %v2608
        %v2737 = vadd.f32 %v2481, %v2609
        %v2738 = vadd.f32 %v2482, %v2610
        %v2739 = vadd.f32 %v2483, %v2611
        %v2740 = vadd.f32 %v2484, %v2612
        %v2741 = vadd.f32 %v2485, %v2613
        %v2742 = vadd.f32 %v2486, %v2614
        %v2743 = vadd.f32 %v2487, %v2615
        %v2744 = vadd.f32 %v2488, %v2616
        %v2745 = vadd.f32 %v2489, %v2617
        %v2746 = vadd.f32 %v2490, %v2618
        %v2747 = vadd.f32 %v2491, %v2619
        %v2748 = vadd.f32 %v2492, %v2620
        %v2749 = vadd.f32 %v2493, %v2621
        %v2750 = vadd.f32 %v2494, %v2622
        %v2751 = vadd.f32 %v2495, %v2623
        %v2752 = vadd.f32 %v2496, %v2624
        %v2753 = vadd.f32 %v2497, %v2625
        %v2754 = vadd.f32 %v2498, %v2626
        %v2755 = vadd.f32 %v2499, %v2627
        %v2756 = vadd.f32 %v2500, %v2628
        %v2757 = vadd.f32 %v2501, %v2629
        %v2758 = vadd.f32 %v2502, %v2630
        %v2759 = vadd.f32 %v2503, %v2631
        %v2760 = vadd.f32 %v2504, %v2632
        %v2761 = vadd.f32 %v2505, %v2633
        %v2762 = vadd.f32 %v2506, %v2634
        %v2763 = vadd.f32 %v2507, %v2635
        %v2764 = vadd.f32 %v2508, %v2636
        %v2765 = vadd.f32 %v2509, %v2637
        %v2766 = vadd.f32 %v2510, %v2638
        %v2767 = vadd.f32 %v2511, %v2639
        %v2768 = vadd.f32 %v2512, %v2640
        %v2769 = vadd.f32 %v2513, %v2641
        %v2770 = vadd.f32 %v2514, %v2642
        %v2771 = vadd.f32 %v2515, %v2643
        %v2772 = vadd.f32 %v2516, %v2644
        %v2773 = vadd.f32 %v2517, %v2645
        %v2774 = vadd.f32 %v2518, %v2646
        %v2775 = vadd.f32 %v2519, %v2647
        %v2776 = vrsqrt.pop %v2648
        %v2777 = vmul.f32 %v2776, %v2648
        %v2778 = vmul.f32 %v2777, %v2776
        %v2779 = vmul.f32 0.5, %v2778
        %v2780 = vsub.f32 1.5, %v2779
        %v2781 = vmul.f32 %v2776, %v2780
        %v2782 = vmul.f32 %v2648, %v2781
        %vm2783 = vcmp.eq.f32.partialorder %v2648, inf
        %v2784 = vsel %vm2783, %v2648, %v2782
        %vm2785 = vcmp.eq.f32.partialorder %v2648, 0.0
        %v2786 = vand.u32 %v2648, 2147483648
        %v2787 = vsel %vm2785, %v2786, %v2784
        %v2788 = vrsqrt.pop %v2649
        %v2789 = vmul.f32 %v2788, %v2649
        %v2790 = vmul.f32 %v2789, %v2788
        %v2791 = vmul.f32 0.5, %v2790
        %v2792 = vsub.f32 1.5, %v2791
        %v2793 = vmul.f32 %v2788, %v2792
        %v2794 = vmul.f32 %v2649, %v2793
        %vm2795 = vcmp.eq.f32.partialorder %v2649, inf
        %v2796 = vsel %vm2795, %v2649, %v2794
        %vm2797 = vcmp.eq.f32.partialorder %v2649, 0.0
        %v2798 = vand.u32 %v2649, 2147483648
        %v2799 = vsel %vm2797, %v2798, %v2796
        %v2800 = vrsqrt.pop %v2650
        %v2801 = vmul.f32 %v2800, %v2650
        %v2802 = vmul.f32 %v2801, %v2800
        %v2803 = vmul.f32 0.5, %v2802
        %v2804 = vsub.f32 1.5, %v2803
        %v2805 = vmul.f32 %v2800, %v2804
        %v2806 = vmul.f32 %v2650, %v2805
        %vm2807 = vcmp.eq.f32.partialorder %v2650, inf
        %v2808 = vsel %vm2807, %v2650, %v2806
        %vm2809 = vcmp.eq.f32.partialorder %v2650, 0.0
        %v2810 = vand.u32 %v2650, 2147483648
        %v2811 = vsel %vm2809, %v2810, %v2808
        %v2812 = vrsqrt.pop %v2651
        %v2813 = vmul.f32 %v2812, %v2651
        %v2814 = vmul.f32 %v2813, %v2812
        %v2815 = vmul.f32 0.5, %v2814
        %v2816 = vsub.f32 1.5, %v2815
        %v2817 = vmul.f32 %v2812, %v2816
        %v2818 = vmul.f32 %v2651, %v2817
        %vm2819 = vcmp.eq.f32.partialorder %v2651, inf
        %v2820 = vsel %vm2819, %v2651, %v2818
        %vm2821 = vcmp.eq.f32.partialorder %v2651, 0.0
        %v2822 = vand.u32 %v2651, 2147483648
        %v2823 = vsel %vm2821, %v2822, %v2820
        %v2824 = vrsqrt.pop %v2652
        %v2825 = vmul.f32 %v2824, %v2652
        %v2826 = vmul.f32 %v2825, %v2824
        %v2827 = vmul.f32 0.5, %v2826
        %v2828 = vsub.f32 1.5, %v2827
        %v2829 = vmul.f32 %v2824, %v2828
        %v2830 = vmul.f32 %v2652, %v2829
        %vm2831 = vcmp.eq.f32.partialorder %v2652, inf
        %v2832 = vsel %vm2831, %v2652, %v2830
        %vm2833 = vcmp.eq.f32.partialorder %v2652, 0.0
        %v2834 = vand.u32 %v2652, 2147483648
        %v2835 = vsel %vm2833, %v2834, %v2832
        %v2836 = vrsqrt.pop %v2653
        %v2837 = vmul.f32 %v2836, %v2653
        %v2838 = vmul.f32 %v2837, %v2836
        %v2839 = vmul.f32 0.5, %v2838
        %v2840 = vsub.f32 1.5, %v2839
        %v2841 = vmul.f32 %v2836, %v2840
        %v2842 = vmul.f32 %v2653, %v2841
        %vm2843 = vcmp.eq.f32.partialorder %v2653, inf
        %v2844 = vsel %vm2843, %v2653, %v2842
        %vm2845 = vcmp.eq.f32.partialorder %v2653, 0.0
        %v2846 = vand.u32 %v2653, 2147483648
        %v2847 = vsel %vm2845, %v2846, %v2844
        %v2848 = vrsqrt.pop %v2654
        %v2849 = vmul.f32 %v2848, %v2654
        %v2850 = vmul.f32 %v2849, %v2848
        %v2851 = vmul.f32 0.5, %v2850
        %v2852 = vsub.f32 1.5, %v2851
        %v2853 = vmul.f32 %v2848, %v2852
        %v2854 = vmul.f32 %v2654, %v2853
        %vm2855 = vcmp.eq.f32.partialorder %v2654, inf
        %v2856 = vsel %vm2855, %v2654, %v2854
        %vm2857 = vcmp.eq.f32.partialorder %v2654, 0.0
        %v2858 = vand.u32 %v2654, 2147483648
        %v2859 = vsel %vm2857, %v2858, %v2856
        %v2860 = vrsqrt.pop %v2655
        %v2861 = vmul.f32 %v2860, %v2655
        %v2862 = vmul.f32 %v2861, %v2860
        %v2863 = vmul.f32 0.5, %v2862
        %v2864 = vsub.f32 1.5, %v2863
        %v2865 = vmul.f32 %v2860, %v2864
        %v2866 = vmul.f32 %v2655, %v2865
        %vm2867 = vcmp.eq.f32.partialorder %v2655, inf
        %v2868 = vsel %vm2867, %v2655, %v2866
        %vm2869 = vcmp.eq.f32.partialorder %v2655, 0.0
        %v2870 = vand.u32 %v2655, 2147483648
        %v2871 = vsel %vm2869, %v2870, %v2868
        %v2872 = vrsqrt.pop %v2656
        %v2873 = vmul.f32 %v2872, %v2656
        %v2874 = vmul.f32 %v2873, %v2872
        %v2875 = vmul.f32 0.5, %v2874
        %v2876 = vsub.f32 1.5, %v2875
        %v2877 = vmul.f32 %v2872, %v2876
        %v2878 = vmul.f32 %v2656, %v2877
        %vm2879 = vcmp.eq.f32.partialorder %v2656, inf
        %v2880 = vsel %vm2879, %v2656, %v2878
        %vm2881 = vcmp.eq.f32.partialorder %v2656, 0.0
        %v2882 = vand.u32 %v2656, 2147483648
        %v2883 = vsel %vm2881, %v2882, %v2880
        %v2884 = vrsqrt.pop %v2657
        %v2885 = vmul.f32 %v2884, %v2657
        %v2886 = vmul.f32 %v2885, %v2884
        %v2887 = vmul.f32 0.5, %v2886
        %v2888 = vsub.f32 1.5, %v2887
        %v2889 = vmul.f32 %v2884, %v2888
        %v2890 = vmul.f32 %v2657, %v2889
        %vm2891 = vcmp.eq.f32.partialorder %v2657, inf
        %v2892 = vsel %vm2891, %v2657, %v2890
        %vm2893 = vcmp.eq.f32.partialorder %v2657, 0.0
        %v2894 = vand.u32 %v2657, 2147483648
        %v2895 = vsel %vm2893, %v2894, %v2892
        %v2896 = vrsqrt.pop %v2658
        %v2897 = vmul.f32 %v2896, %v2658
        %v2898 = vmul.f32 %v2897, %v2896
        %v2899 = vmul.f32 0.5, %v2898
        %v2900 = vsub.f32 1.5, %v2899
        %v2901 = vmul.f32 %v2896, %v2900
        %v2902 = vmul.f32 %v2658, %v2901
        %vm2903 = vcmp.eq.f32.partialorder %v2658, inf
        %v2904 = vsel %vm2903, %v2658, %v2902
        %vm2905 = vcmp.eq.f32.partialorder %v2658, 0.0
        %v2906 = vand.u32 %v2658, 2147483648
        %v2907 = vsel %vm2905, %v2906, %v2904
        %v2908 = vrsqrt.pop %v2659
        %v2909 = vmul.f32 %v2908, %v2659
        %v2910 = vmul.f32 %v2909, %v2908
        %v2911 = vmul.f32 0.5, %v2910
        %v2912 = vsub.f32 1.5, %v2911
        %v2913 = vmul.f32 %v2908, %v2912
        %v2914 = vmul.f32 %v2659, %v2913
        %vm2915 = vcmp.eq.f32.partialorder %v2659, inf
        %v2916 = vsel %vm2915, %v2659, %v2914
        %vm2917 = vcmp.eq.f32.partialorder %v2659, 0.0
        %v2918 = vand.u32 %v2659, 2147483648
        %v2919 = vsel %vm2917, %v2918, %v2916
        %v2920 = vrsqrt.pop %v2660
        %v2921 = vmul.f32 %v2920, %v2660
        %v2922 = vmul.f32 %v2921, %v2920
        %v2923 = vmul.f32 0.5, %v2922
        %v2924 = vsub.f32 1.5, %v2923
        %v2925 = vmul.f32 %v2920, %v2924
        %v2926 = vmul.f32 %v2660, %v2925
        %vm2927 = vcmp.eq.f32.partialorder %v2660, inf
        %v2928 = vsel %vm2927, %v2660, %v2926
        %vm2929 = vcmp.eq.f32.partialorder %v2660, 0.0
        %v2930 = vand.u32 %v2660, 2147483648
        %v2931 = vsel %vm2929, %v2930, %v2928
        %v2932 = vrsqrt.pop %v2661
        %v2933 = vmul.f32 %v2932, %v2661
        %v2934 = vmul.f32 %v2933, %v2932
        %v2935 = vmul.f32 0.5, %v2934
        %v2936 = vsub.f32 1.5, %v2935
        %v2937 = vmul.f32 %v2932, %v2936
        %v2938 = vmul.f32 %v2661, %v2937
        %vm2939 = vcmp.eq.f32.partialorder %v2661, inf
        %v2940 = vsel %vm2939, %v2661, %v2938
        %vm2941 = vcmp.eq.f32.partialorder %v2661, 0.0
        %v2942 = vand.u32 %v2661, 2147483648
        %v2943 = vsel %vm2941, %v2942, %v2940
        %v2944 = vrsqrt.pop %v2662
        %v2945 = vmul.f32 %v2944, %v2662
        %v2946 = vmul.f32 %v2945, %v2944
        %v2947 = vmul.f32 0.5, %v2946
        %v2948 = vsub.f32 1.5, %v2947
        %v2949 = vmul.f32 %v2944, %v2948
        %v2950 = vmul.f32 %v2662, %v2949
        %vm2951 = vcmp.eq.f32.partialorder %v2662, inf
        %v2952 = vsel %vm2951, %v2662, %v2950
        %vm2953 = vcmp.eq.f32.partialorder %v2662, 0.0
        %v2954 = vand.u32 %v2662, 2147483648
        %v2955 = vsel %vm2953, %v2954, %v2952
        %v2956 = vrsqrt.pop %v2663
        %v2957 = vmul.f32 %v2956, %v2663
        %v2958 = vmul.f32 %v2957, %v2956
        %v2959 = vmul.f32 0.5, %v2958
        %v2960 = vsub.f32 1.5, %v2959
        %v2961 = vmul.f32 %v2956, %v2960
        %v2962 = vmul.f32 %v2663, %v2961
        %vm2963 = vcmp.eq.f32.partialorder %v2663, inf
        %v2964 = vsel %vm2963, %v2663, %v2962
        %vm2965 = vcmp.eq.f32.partialorder %v2663, 0.0
        %v2966 = vand.u32 %v2663, 2147483648
        %v2967 = vsel %vm2965, %v2966, %v2964
        %v2968 = vrsqrt.pop %v2664
        %v2969 = vmul.f32 %v2968, %v2664
        %v2970 = vmul.f32 %v2969, %v2968
        %v2971 = vmul.f32 0.5, %v2970
        %v2972 = vsub.f32 1.5, %v2971
        %v2973 = vmul.f32 %v2968, %v2972
        %v2974 = vmul.f32 %v2664, %v2973
        %vm2975 = vcmp.eq.f32.partialorder %v2664, inf
        %v2976 = vsel %vm2975, %v2664, %v2974
        %vm2977 = vcmp.eq.f32.partialorder %v2664, 0.0
        %v2978 = vand.u32 %v2664, 2147483648
        %v2979 = vsel %vm2977, %v2978, %v2976
        %v2980 = vrsqrt.pop %v2665
        %v2981 = vmul.f32 %v2980, %v2665
        %v2982 = vmul.f32 %v2981, %v2980
        %v2983 = vmul.f32 0.5, %v2982
        %v2984 = vsub.f32 1.5, %v2983
        %v2985 = vmul.f32 %v2980, %v2984
        %v2986 = vmul.f32 %v2665, %v2985
        %vm2987 = vcmp.eq.f32.partialorder %v2665, inf
        %v2988 = vsel %vm2987, %v2665, %v2986
        %vm2989 = vcmp.eq.f32.partialorder %v2665, 0.0
        %v2990 = vand.u32 %v2665, 2147483648
        %v2991 = vsel %vm2989, %v2990, %v2988
        %v2992 = vrsqrt.pop %v2666
        %v2993 = vmul.f32 %v2992, %v2666
        %v2994 = vmul.f32 %v2993, %v2992
        %v2995 = vmul.f32 0.5, %v2994
        %v2996 = vsub.f32 1.5, %v2995
        %v2997 = vmul.f32 %v2992, %v2996
        %v2998 = vmul.f32 %v2666, %v2997
        %vm2999 = vcmp.eq.f32.partialorder %v2666, inf
        %v3000 = vsel %vm2999, %v2666, %v2998
        %vm3001 = vcmp.eq.f32.partialorder %v2666, 0.0
        %v3002 = vand.u32 %v2666, 2147483648
        %v3003 = vsel %vm3001, %v3002, %v3000
        %v3004 = vrsqrt.pop %v2667
        %v3005 = vmul.f32 %v3004, %v2667
        %v3006 = vmul.f32 %v3005, %v3004
        %v3007 = vmul.f32 0.5, %v3006
        %v3008 = vsub.f32 1.5, %v3007
        %v3009 = vmul.f32 %v3004, %v3008
        %v3010 = vmul.f32 %v2667, %v3009
        %vm3011 = vcmp.eq.f32.partialorder %v2667, inf
        %v3012 = vsel %vm3011, %v2667, %v3010
        %vm3013 = vcmp.eq.f32.partialorder %v2667, 0.0
        %v3014 = vand.u32 %v2667, 2147483648
        %v3015 = vsel %vm3013, %v3014, %v3012
        %v3016 = vrsqrt.pop %v2668
        %v3017 = vmul.f32 %v3016, %v2668
        %v3018 = vmul.f32 %v3017, %v3016
        %v3019 = vmul.f32 0.5, %v3018
        %v3020 = vsub.f32 1.5, %v3019
        %v3021 = vmul.f32 %v3016, %v3020
        %v3022 = vmul.f32 %v2668, %v3021
        %vm3023 = vcmp.eq.f32.partialorder %v2668, inf
        %v3024 = vsel %vm3023, %v2668, %v3022
        %vm3025 = vcmp.eq.f32.partialorder %v2668, 0.0
        %v3026 = vand.u32 %v2668, 2147483648
        %v3027 = vsel %vm3025, %v3026, %v3024
        %v3028 = vrsqrt.pop %v2669
        %v3029 = vmul.f32 %v3028, %v2669
        %v3030 = vmul.f32 %v3029, %v3028
        %v3031 = vmul.f32 0.5, %v3030
        %v3032 = vsub.f32 1.5, %v3031
        %v3033 = vmul.f32 %v3028, %v3032
        %v3034 = vmul.f32 %v2669, %v3033
        %vm3035 = vcmp.eq.f32.partialorder %v2669, inf
        %v3036 = vsel %vm3035, %v2669, %v3034
        %vm3037 = vcmp.eq.f32.partialorder %v2669, 0.0
        %v3038 = vand.u32 %v2669, 2147483648
        %v3039 = vsel %vm3037, %v3038, %v3036
        %v3040 = vrsqrt.pop %v2670
        %v3041 = vmul.f32 %v3040, %v2670
        %v3042 = vmul.f32 %v3041, %v3040
        %v3043 = vmul.f32 0.5, %v3042
        %v3044 = vsub.f32 1.5, %v3043
        %v3045 = vmul.f32 %v3040, %v3044
        %v3046 = vmul.f32 %v2670, %v3045
        %vm3047 = vcmp.eq.f32.partialorder %v2670, inf
        %v3048 = vsel %vm3047, %v2670, %v3046
        %vm3049 = vcmp.eq.f32.partialorder %v2670, 0.0
        %v3050 = vand.u32 %v2670, 2147483648
        %v3051 = vsel %vm3049, %v3050, %v3048
        %v3052 = vrsqrt.pop %v2671
        %v3053 = vmul.f32 %v3052, %v2671
        %v3054 = vmul.f32 %v3053, %v3052
        %v3055 = vmul.f32 0.5, %v3054
        %v3056 = vsub.f32 1.5, %v3055
        %v3057 = vmul.f32 %v3052, %v3056
        %v3058 = vmul.f32 %v2671, %v3057
        %vm3059 = vcmp.eq.f32.partialorder %v2671, inf
        %v3060 = vsel %vm3059, %v2671, %v3058
        %vm3061 = vcmp.eq.f32.partialorder %v2671, 0.0
        %v3062 = vand.u32 %v2671, 2147483648
        %v3063 = vsel %vm3061, %v3062, %v3060
        %v3064 = vrsqrt.pop %v2672
        %v3065 = vmul.f32 %v3064, %v2672
        %v3066 = vmul.f32 %v3065, %v3064
        %v3067 = vmul.f32 0.5, %v3066
        %v3068 = vsub.f32 1.5, %v3067
        %v3069 = vmul.f32 %v3064, %v3068
        %v3070 = vmul.f32 %v2672, %v3069
        %vm3071 = vcmp.eq.f32.partialorder %v2672, inf
        %v3072 = vsel %vm3071, %v2672, %v3070
        %vm3073 = vcmp.eq.f32.partialorder %v2672, 0.0
        %v3074 = vand.u32 %v2672, 2147483648
        %v3075 = vsel %vm3073, %v3074, %v3072
        %v3076 = vrsqrt.pop %v2673
        %v3077 = vmul.f32 %v3076, %v2673
        %v3078 = vmul.f32 %v3077, %v3076
        %v3079 = vmul.f32 0.5, %v3078
        %v3080 = vsub.f32 1.5, %v3079
        %v3081 = vmul.f32 %v3076, %v3080
        %v3082 = vmul.f32 %v2673, %v3081
        %vm3083 = vcmp.eq.f32.partialorder %v2673, inf
        %v3084 = vsel %vm3083, %v2673, %v3082
        %vm3085 = vcmp.eq.f32.partialorder %v2673, 0.0
        %v3086 = vand.u32 %v2673, 2147483648
        %v3087 = vsel %vm3085, %v3086, %v3084
        %v3088 = vrsqrt.pop %v2674
        %v3089 = vmul.f32 %v3088, %v2674
        %v3090 = vmul.f32 %v3089, %v3088
        %v3091 = vmul.f32 0.5, %v3090
        %v3092 = vsub.f32 1.5, %v3091
        %v3093 = vmul.f32 %v3088, %v3092
        %v3094 = vmul.f32 %v2674, %v3093
        %vm3095 = vcmp.eq.f32.partialorder %v2674, inf
        %v3096 = vsel %vm3095, %v2674, %v3094
        %vm3097 = vcmp.eq.f32.partialorder %v2674, 0.0
        %v3098 = vand.u32 %v2674, 2147483648
        %v3099 = vsel %vm3097, %v3098, %v3096
        %v3100 = vrsqrt.pop %v2675
        %v3101 = vmul.f32 %v3100, %v2675
        %v3102 = vmul.f32 %v3101, %v3100
        %v3103 = vmul.f32 0.5, %v3102
        %v3104 = vsub.f32 1.5, %v3103
        %v3105 = vmul.f32 %v3100, %v3104
        %v3106 = vmul.f32 %v2675, %v3105
        %vm3107 = vcmp.eq.f32.partialorder %v2675, inf
        %v3108 = vsel %vm3107, %v2675, %v3106
        %vm3109 = vcmp.eq.f32.partialorder %v2675, 0.0
        %v3110 = vand.u32 %v2675, 2147483648
        %v3111 = vsel %vm3109, %v3110, %v3108
        %v3112 = vrsqrt.pop %v2676
        %v3113 = vmul.f32 %v3112, %v2676
        %v3114 = vmul.f32 %v3113, %v3112
        %v3115 = vmul.f32 0.5, %v3114
        %v3116 = vsub.f32 1.5, %v3115
        %v3117 = vmul.f32 %v3112, %v3116
        %v3118 = vmul.f32 %v2676, %v3117
        %vm3119 = vcmp.eq.f32.partialorder %v2676, inf
        %v3120 = vsel %vm3119, %v2676, %v3118
        %vm3121 = vcmp.eq.f32.partialorder %v2676, 0.0
        %v3122 = vand.u32 %v2676, 2147483648
        %v3123 = vsel %vm3121, %v3122, %v3120
        %v3124 = vrsqrt.pop %v2677
        %v3125 = vmul.f32 %v3124, %v2677
        %v3126 = vmul.f32 %v3125, %v3124
        %v3127 = vmul.f32 0.5, %v3126
        %v3128 = vsub.f32 1.5, %v3127
        %v3129 = vmul.f32 %v3124, %v3128
        %v3130 = vmul.f32 %v2677, %v3129
        %vm3131 = vcmp.eq.f32.partialorder %v2677, inf
        %v3132 = vsel %vm3131, %v2677, %v3130
        %vm3133 = vcmp.eq.f32.partialorder %v2677, 0.0
        %v3134 = vand.u32 %v2677, 2147483648
        %v3135 = vsel %vm3133, %v3134, %v3132
        %v3136 = vrsqrt.pop %v2678
        %v3137 = vmul.f32 %v3136, %v2678
        %v3138 = vmul.f32 %v3137, %v3136
        %v3139 = vmul.f32 0.5, %v3138
        %v3140 = vsub.f32 1.5, %v3139
        %v3141 = vmul.f32 %v3136, %v3140
        %v3142 = vmul.f32 %v2678, %v3141
        %vm3143 = vcmp.eq.f32.partialorder %v2678, inf
        %v3144 = vsel %vm3143, %v2678, %v3142
        %vm3145 = vcmp.eq.f32.partialorder %v2678, 0.0
        %v3146 = vand.u32 %v2678, 2147483648
        %v3147 = vsel %vm3145, %v3146, %v3144
        %v3148 = vrsqrt.pop %v2679
        %v3149 = vmul.f32 %v3148, %v2679
        %v3150 = vmul.f32 %v3149, %v3148
        %v3151 = vmul.f32 0.5, %v3150
        %v3152 = vsub.f32 1.5, %v3151
        %v3153 = vmul.f32 %v3148, %v3152
        %v3154 = vmul.f32 %v2679, %v3153
        %vm3155 = vcmp.eq.f32.partialorder %v2679, inf
        %v3156 = vsel %vm3155, %v2679, %v3154
        %vm3157 = vcmp.eq.f32.partialorder %v2679, 0.0
        %v3158 = vand.u32 %v2679, 2147483648
        %v3159 = vsel %vm3157, %v3158, %v3156
        %v3160 = vrsqrt.pop %v2680
        %v3161 = vmul.f32 %v3160, %v2680
        %v3162 = vmul.f32 %v3161, %v3160
        %v3163 = vmul.f32 0.5, %v3162
        %v3164 = vsub.f32 1.5, %v3163
        %v3165 = vmul.f32 %v3160, %v3164
        %v3166 = vmul.f32 %v2680, %v3165
        %vm3167 = vcmp.eq.f32.partialorder %v2680, inf
        %v3168 = vsel %vm3167, %v2680, %v3166
        %vm3169 = vcmp.eq.f32.partialorder %v2680, 0.0
        %v3170 = vand.u32 %v2680, 2147483648
        %v3171 = vsel %vm3169, %v3170, %v3168
        %v3172 = vrsqrt.pop %v2681
        %v3173 = vmul.f32 %v3172, %v2681
        %v3174 = vmul.f32 %v3173, %v3172
        %v3175 = vmul.f32 0.5, %v3174
        %v3176 = vsub.f32 1.5, %v3175
        %v3177 = vmul.f32 %v3172, %v3176
        %v3178 = vmul.f32 %v2681, %v3177
        %vm3179 = vcmp.eq.f32.partialorder %v2681, inf
        %v3180 = vsel %vm3179, %v2681, %v3178
        %vm3181 = vcmp.eq.f32.partialorder %v2681, 0.0
        %v3182 = vand.u32 %v2681, 2147483648
        %v3183 = vsel %vm3181, %v3182, %v3180
        %v3184 = vrsqrt.pop %v2682
        %v3185 = vmul.f32 %v3184, %v2682
        %v3186 = vmul.f32 %v3185, %v3184
        %v3187 = vmul.f32 0.5, %v3186
        %v3188 = vsub.f32 1.5, %v3187
        %v3189 = vmul.f32 %v3184, %v3188
        %v3190 = vmul.f32 %v2682, %v3189
        %vm3191 = vcmp.eq.f32.partialorder %v2682, inf
        %v3192 = vsel %vm3191, %v2682, %v3190
        %vm3193 = vcmp.eq.f32.partialorder %v2682, 0.0
        %v3194 = vand.u32 %v2682, 2147483648
        %v3195 = vsel %vm3193, %v3194, %v3192
        %v3196 = vrsqrt.pop %v2683
        %v3197 = vmul.f32 %v3196, %v2683
        %v3198 = vmul.f32 %v3197, %v3196
        %v3199 = vmul.f32 0.5, %v3198
        %v3200 = vsub.f32 1.5, %v3199
        %v3201 = vmul.f32 %v3196, %v3200
        %v3202 = vmul.f32 %v2683, %v3201
        %vm3203 = vcmp.eq.f32.partialorder %v2683, inf
        %v3204 = vsel %vm3203, %v2683, %v3202
        %vm3205 = vcmp.eq.f32.partialorder %v2683, 0.0
        %v3206 = vand.u32 %v2683, 2147483648
        %v3207 = vsel %vm3205, %v3206, %v3204
        %v3208 = vrsqrt.pop %v2684
        %v3209 = vmul.f32 %v3208, %v2684
        %v3210 = vmul.f32 %v3209, %v3208
        %v3211 = vmul.f32 0.5, %v3210
        %v3212 = vsub.f32 1.5, %v3211
        %v3213 = vmul.f32 %v3208, %v3212
        %v3214 = vmul.f32 %v2684, %v3213
        %vm3215 = vcmp.eq.f32.partialorder %v2684, inf
        %v3216 = vsel %vm3215, %v2684, %v3214
        %vm3217 = vcmp.eq.f32.partialorder %v2684, 0.0
        %v3218 = vand.u32 %v2684, 2147483648
        %v3219 = vsel %vm3217, %v3218, %v3216
        %v3220 = vrsqrt.pop %v2685
        %v3221 = vmul.f32 %v3220, %v2685
        %v3222 = vmul.f32 %v3221, %v3220
        %v3223 = vmul.f32 0.5, %v3222
        %v3224 = vsub.f32 1.5, %v3223
        %v3225 = vmul.f32 %v3220, %v3224
        %v3226 = vmul.f32 %v2685, %v3225
        %vm3227 = vcmp.eq.f32.partialorder %v2685, inf
        %v3228 = vsel %vm3227, %v2685, %v3226
        %vm3229 = vcmp.eq.f32.partialorder %v2685, 0.0
        %v3230 = vand.u32 %v2685, 2147483648
        %v3231 = vsel %vm3229, %v3230, %v3228
        %v3232 = vrsqrt.pop %v2686
        %v3233 = vmul.f32 %v3232, %v2686
        %v3234 = vmul.f32 %v3233, %v3232
        %v3235 = vmul.f32 0.5, %v3234
        %v3236 = vsub.f32 1.5, %v3235
        %v3237 = vmul.f32 %v3232, %v3236
        %v3238 = vmul.f32 %v2686, %v3237
        %vm3239 = vcmp.eq.f32.partialorder %v2686, inf
        %v3240 = vsel %vm3239, %v2686, %v3238
        %vm3241 = vcmp.eq.f32.partialorder %v2686, 0.0
        %v3242 = vand.u32 %v2686, 2147483648
        %v3243 = vsel %vm3241, %v3242, %v3240
        %v3244 = vrsqrt.pop %v2687
        %v3245 = vmul.f32 %v3244, %v2687
        %v3246 = vmul.f32 %v3245, %v3244
        %v3247 = vmul.f32 0.5, %v3246
        %v3248 = vsub.f32 1.5, %v3247
        %v3249 = vmul.f32 %v3244, %v3248
        %v3250 = vmul.f32 %v2687, %v3249
        %vm3251 = vcmp.eq.f32.partialorder %v2687, inf
        %v3252 = vsel %vm3251, %v2687, %v3250
        %vm3253 = vcmp.eq.f32.partialorder %v2687, 0.0
        %v3254 = vand.u32 %v2687, 2147483648
        %v3255 = vsel %vm3253, %v3254, %v3252
        %v3256 = vrsqrt.pop %v2688
        %v3257 = vmul.f32 %v3256, %v2688
        %v3258 = vmul.f32 %v3257, %v3256
        %v3259 = vmul.f32 0.5, %v3258
        %v3260 = vsub.f32 1.5, %v3259
        %v3261 = vmul.f32 %v3256, %v3260
        %v3262 = vmul.f32 %v2688, %v3261
        %vm3263 = vcmp.eq.f32.partialorder %v2688, inf
        %v3264 = vsel %vm3263, %v2688, %v3262
        %vm3265 = vcmp.eq.f32.partialorder %v2688, 0.0
        %v3266 = vand.u32 %v2688, 2147483648
        %v3267 = vsel %vm3265, %v3266, %v3264
        %v3268 = vrsqrt.pop %v2689
        %v3269 = vmul.f32 %v3268, %v2689
        %v3270 = vmul.f32 %v3269, %v3268
        %v3271 = vmul.f32 0.5, %v3270
        %v3272 = vsub.f32 1.5, %v3271
        %v3273 = vmul.f32 %v3268, %v3272
        %v3274 = vmul.f32 %v2689, %v3273
        %vm3275 = vcmp.eq.f32.partialorder %v2689, inf
        %v3276 = vsel %vm3275, %v2689, %v3274
        %vm3277 = vcmp.eq.f32.partialorder %v2689, 0.0
        %v3278 = vand.u32 %v2689, 2147483648
        %v3279 = vsel %vm3277, %v3278, %v3276
        %v3280 = vrsqrt.pop %v2690
        %v3281 = vmul.f32 %v3280, %v2690
        %v3282 = vmul.f32 %v3281, %v3280
        %v3283 = vmul.f32 0.5, %v3282
        %v3284 = vsub.f32 1.5, %v3283
        %v3285 = vmul.f32 %v3280, %v3284
        %v3286 = vmul.f32 %v2690, %v3285
        %vm3287 = vcmp.eq.f32.partialorder %v2690, inf
        %v3288 = vsel %vm3287, %v2690, %v3286
        %vm3289 = vcmp.eq.f32.partialorder %v2690, 0.0
        %v3290 = vand.u32 %v2690, 2147483648
        %v3291 = vsel %vm3289, %v3290, %v3288
        %v3292 = vrsqrt.pop %v2691
        %v3293 = vmul.f32 %v3292, %v2691
        %v3294 = vmul.f32 %v3293, %v3292
        %v3295 = vmul.f32 0.5, %v3294
        %v3296 = vsub.f32 1.5, %v3295
        %v3297 = vmul.f32 %v3292, %v3296
        %v3298 = vmul.f32 %v2691, %v3297
        %vm3299 = vcmp.eq.f32.partialorder %v2691, inf
        %v3300 = vsel %vm3299, %v2691, %v3298
        %vm3301 = vcmp.eq.f32.partialorder %v2691, 0.0
        %v3302 = vand.u32 %v2691, 2147483648
        %v3303 = vsel %vm3301, %v3302, %v3300
        %v3304 = vrsqrt.pop %v2692
        %v3305 = vmul.f32 %v3304, %v2692
        %v3306 = vmul.f32 %v3305, %v3304
        %v3307 = vmul.f32 0.5, %v3306
        %v3308 = vsub.f32 1.5, %v3307
        %v3309 = vmul.f32 %v3304, %v3308
        %v3310 = vmul.f32 %v2692, %v3309
        %vm3311 = vcmp.eq.f32.partialorder %v2692, inf
        %v3312 = vsel %vm3311, %v2692, %v3310
        %vm3313 = vcmp.eq.f32.partialorder %v2692, 0.0
        %v3314 = vand.u32 %v2692, 2147483648
        %v3315 = vsel %vm3313, %v3314, %v3312
        %v3316 = vrsqrt.pop %v2693
        %v3317 = vmul.f32 %v3316, %v2693
        %v3318 = vmul.f32 %v3317, %v3316
        %v3319 = vmul.f32 0.5, %v3318
        %v3320 = vsub.f32 1.5, %v3319
        %v3321 = vmul.f32 %v3316, %v3320
        %v3322 = vmul.f32 %v2693, %v3321
        %vm3323 = vcmp.eq.f32.partialorder %v2693, inf
        %v3324 = vsel %vm3323, %v2693, %v3322
        %vm3325 = vcmp.eq.f32.partialorder %v2693, 0.0
        %v3326 = vand.u32 %v2693, 2147483648
        %v3327 = vsel %vm3325, %v3326, %v3324
        %v3328 = vrsqrt.pop %v2694
        %v3329 = vmul.f32 %v3328, %v2694
        %v3330 = vmul.f32 %v3329, %v3328
        %v3331 = vmul.f32 0.5, %v3330
        %v3332 = vsub.f32 1.5, %v3331
        %v3333 = vmul.f32 %v3328, %v3332
        %v3334 = vmul.f32 %v2694, %v3333
        %vm3335 = vcmp.eq.f32.partialorder %v2694, inf
        %v3336 = vsel %vm3335, %v2694, %v3334
        %vm3337 = vcmp.eq.f32.partialorder %v2694, 0.0
        %v3338 = vand.u32 %v2694, 2147483648
        %v3339 = vsel %vm3337, %v3338, %v3336
        %v3340 = vrsqrt.pop %v2695
        %v3341 = vmul.f32 %v3340, %v2695
        %v3342 = vmul.f32 %v3341, %v3340
        %v3343 = vmul.f32 0.5, %v3342
        %v3344 = vsub.f32 1.5, %v3343
        %v3345 = vmul.f32 %v3340, %v3344
        %v3346 = vmul.f32 %v2695, %v3345
        %vm3347 = vcmp.eq.f32.partialorder %v2695, inf
        %v3348 = vsel %vm3347, %v2695, %v3346
        %vm3349 = vcmp.eq.f32.partialorder %v2695, 0.0
        %v3350 = vand.u32 %v2695, 2147483648
        %v3351 = vsel %vm3349, %v3350, %v3348
        %v3352 = vrsqrt.pop %v2696
        %v3353 = vmul.f32 %v3352, %v2696
        %v3354 = vmul.f32 %v3353, %v3352
        %v3355 = vmul.f32 0.5, %v3354
        %v3356 = vsub.f32 1.5, %v3355
        %v3357 = vmul.f32 %v3352, %v3356
        %v3358 = vmul.f32 %v2696, %v3357
        %vm3359 = vcmp.eq.f32.partialorder %v2696, inf
        %v3360 = vsel %vm3359, %v2696, %v3358
        %vm3361 = vcmp.eq.f32.partialorder %v2696, 0.0
        %v3362 = vand.u32 %v2696, 2147483648
        %v3363 = vsel %vm3361, %v3362, %v3360
        %v3364 = vrsqrt.pop %v2697
        %v3365 = vmul.f32 %v3364, %v2697
        %v3366 = vmul.f32 %v3365, %v3364
        %v3367 = vmul.f32 0.5, %v3366
        %v3368 = vsub.f32 1.5, %v3367
        %v3369 = vmul.f32 %v3364, %v3368
        %v3370 = vmul.f32 %v2697, %v3369
        %vm3371 = vcmp.eq.f32.partialorder %v2697, inf
        %v3372 = vsel %vm3371, %v2697, %v3370
        %vm3373 = vcmp.eq.f32.partialorder %v2697, 0.0
        %v3374 = vand.u32 %v2697, 2147483648
        %v3375 = vsel %vm3373, %v3374, %v3372
        %v3376 = vrsqrt.pop %v2698
        %v3377 = vmul.f32 %v3376, %v2698
        %v3378 = vmul.f32 %v3377, %v3376
        %v3379 = vmul.f32 0.5, %v3378
        %v3380 = vsub.f32 1.5, %v3379
        %v3381 = vmul.f32 %v3376, %v3380
        %v3382 = vmul.f32 %v2698, %v3381
        %vm3383 = vcmp.eq.f32.partialorder %v2698, inf
        %v3384 = vsel %vm3383, %v2698, %v3382
        %vm3385 = vcmp.eq.f32.partialorder %v2698, 0.0
        %v3386 = vand.u32 %v2698, 2147483648
        %v3387 = vsel %vm3385, %v3386, %v3384
        %v3388 = vrsqrt.pop %v2699
        %v3389 = vmul.f32 %v3388, %v2699
        %v3390 = vmul.f32 %v3389, %v3388
        %v3391 = vmul.f32 0.5, %v3390
        %v3392 = vsub.f32 1.5, %v3391
        %v3393 = vmul.f32 %v3388, %v3392
        %v3394 = vmul.f32 %v2699, %v3393
        %vm3395 = vcmp.eq.f32.partialorder %v2699, inf
        %v3396 = vsel %vm3395, %v2699, %v3394
        %vm3397 = vcmp.eq.f32.partialorder %v2699, 0.0
        %v3398 = vand.u32 %v2699, 2147483648
        %v3399 = vsel %vm3397, %v3398, %v3396
        %v3400 = vrsqrt.pop %v2700
        %v3401 = vmul.f32 %v3400, %v2700
        %v3402 = vmul.f32 %v3401, %v3400
        %v3403 = vmul.f32 0.5, %v3402
        %v3404 = vsub.f32 1.5, %v3403
        %v3405 = vmul.f32 %v3400, %v3404
        %v3406 = vmul.f32 %v2700, %v3405
        %vm3407 = vcmp.eq.f32.partialorder %v2700, inf
        %v3408 = vsel %vm3407, %v2700, %v3406
        %vm3409 = vcmp.eq.f32.partialorder %v2700, 0.0
        %v3410 = vand.u32 %v2700, 2147483648
        %v3411 = vsel %vm3409, %v3410, %v3408
        %v3412 = vrsqrt.pop %v2701
        %v3413 = vmul.f32 %v3412, %v2701
        %v3414 = vmul.f32 %v3413, %v3412
        %v3415 = vmul.f32 0.5, %v3414
        %v3416 = vsub.f32 1.5, %v3415
        %v3417 = vmul.f32 %v3412, %v3416
        %v3418 = vmul.f32 %v2701, %v3417
        %vm3419 = vcmp.eq.f32.partialorder %v2701, inf
        %v3420 = vsel %vm3419, %v2701, %v3418
        %vm3421 = vcmp.eq.f32.partialorder %v2701, 0.0
        %v3422 = vand.u32 %v2701, 2147483648
        %v3423 = vsel %vm3421, %v3422, %v3420
        %v3424 = vrsqrt.pop %v2702
        %v3425 = vmul.f32 %v3424, %v2702
        %v3426 = vmul.f32 %v3425, %v3424
        %v3427 = vmul.f32 0.5, %v3426
        %v3428 = vsub.f32 1.5, %v3427
        %v3429 = vmul.f32 %v3424, %v3428
        %v3430 = vmul.f32 %v2702, %v3429
        %vm3431 = vcmp.eq.f32.partialorder %v2702, inf
        %v3432 = vsel %vm3431, %v2702, %v3430
        %vm3433 = vcmp.eq.f32.partialorder %v2702, 0.0
        %v3434 = vand.u32 %v2702, 2147483648
        %v3435 = vsel %vm3433, %v3434, %v3432
        %v3436 = vrsqrt.pop %v2703
        %v3437 = vmul.f32 %v3436, %v2703
        %v3438 = vmul.f32 %v3437, %v3436
        %v3439 = vmul.f32 0.5, %v3438
        %v3440 = vsub.f32 1.5, %v3439
        %v3441 = vmul.f32 %v3436, %v3440
        %v3442 = vmul.f32 %v2703, %v3441
        %vm3443 = vcmp.eq.f32.partialorder %v2703, inf
        %v3444 = vsel %vm3443, %v2703, %v3442
        %vm3445 = vcmp.eq.f32.partialorder %v2703, 0.0
        %v3446 = vand.u32 %v2703, 2147483648
        %v3447 = vsel %vm3445, %v3446, %v3444
        %v3448 = vrsqrt.pop %v2704
        %v3449 = vmul.f32 %v3448, %v2704
        %v3450 = vmul.f32 %v3449, %v3448
        %v3451 = vmul.f32 0.5, %v3450
        %v3452 = vsub.f32 1.5, %v3451
        %v3453 = vmul.f32 %v3448, %v3452
        %v3454 = vmul.f32 %v2704, %v3453
        %vm3455 = vcmp.eq.f32.partialorder %v2704, inf
        %v3456 = vsel %vm3455, %v2704, %v3454
        %vm3457 = vcmp.eq.f32.partialorder %v2704, 0.0
        %v3458 = vand.u32 %v2704, 2147483648
        %v3459 = vsel %vm3457, %v3458, %v3456
        %v3460 = vrsqrt.pop %v2705
        %v3461 = vmul.f32 %v3460, %v2705
        %v3462 = vmul.f32 %v3461, %v3460
        %v3463 = vmul.f32 0.5, %v3462
        %v3464 = vsub.f32 1.5, %v3463
        %v3465 = vmul.f32 %v3460, %v3464
        %v3466 = vmul.f32 %v2705, %v3465
        %vm3467 = vcmp.eq.f32.partialorder %v2705, inf
        %v3468 = vsel %vm3467, %v2705, %v3466
        %vm3469 = vcmp.eq.f32.partialorder %v2705, 0.0
        %v3470 = vand.u32 %v2705, 2147483648
        %v3471 = vsel %vm3469, %v3470, %v3468
        %v3472 = vrsqrt.pop %v2706
        %v3473 = vmul.f32 %v3472, %v2706
        %v3474 = vmul.f32 %v3473, %v3472
        %v3475 = vmul.f32 0.5, %v3474
        %v3476 = vsub.f32 1.5, %v3475
        %v3477 = vmul.f32 %v3472, %v3476
        %v3478 = vmul.f32 %v2706, %v3477
        %vm3479 = vcmp.eq.f32.partialorder %v2706, inf
        %v3480 = vsel %vm3479, %v2706, %v3478
        %vm3481 = vcmp.eq.f32.partialorder %v2706, 0.0
        %v3482 = vand.u32 %v2706, 2147483648
        %v3483 = vsel %vm3481, %v3482, %v3480
        %v3484 = vrsqrt.pop %v2707
        %v3485 = vmul.f32 %v3484, %v2707
        %v3486 = vmul.f32 %v3485, %v3484
        %v3487 = vmul.f32 0.5, %v3486
        %v3488 = vsub.f32 1.5, %v3487
        %v3489 = vmul.f32 %v3484, %v3488
        %v3490 = vmul.f32 %v2707, %v3489
        %vm3491 = vcmp.eq.f32.partialorder %v2707, inf
        %v3492 = vsel %vm3491, %v2707, %v3490
        %vm3493 = vcmp.eq.f32.partialorder %v2707, 0.0
        %v3494 = vand.u32 %v2707, 2147483648
        %v3495 = vsel %vm3493, %v3494, %v3492
        %v3496 = vrsqrt.pop %v2708
        %v3497 = vmul.f32 %v3496, %v2708
        %v3498 = vmul.f32 %v3497, %v3496
        %v3499 = vmul.f32 0.5, %v3498
        %v3500 = vsub.f32 1.5, %v3499
        %v3501 = vmul.f32 %v3496, %v3500
        %v3502 = vmul.f32 %v2708, %v3501
        %vm3503 = vcmp.eq.f32.partialorder %v2708, inf
        %v3504 = vsel %vm3503, %v2708, %v3502
        %vm3505 = vcmp.eq.f32.partialorder %v2708, 0.0
        %v3506 = vand.u32 %v2708, 2147483648
        %v3507 = vsel %vm3505, %v3506, %v3504
        %v3508 = vrsqrt.pop %v2709
        %v3509 = vmul.f32 %v3508, %v2709
        %v3510 = vmul.f32 %v3509, %v3508
        %v3511 = vmul.f32 0.5, %v3510
        %v3512 = vsub.f32 1.5, %v3511
        %v3513 = vmul.f32 %v3508, %v3512
        %v3514 = vmul.f32 %v2709, %v3513
        %vm3515 = vcmp.eq.f32.partialorder %v2709, inf
        %v3516 = vsel %vm3515, %v2709, %v3514
        %vm3517 = vcmp.eq.f32.partialorder %v2709, 0.0
        %v3518 = vand.u32 %v2709, 2147483648
        %v3519 = vsel %vm3517, %v3518, %v3516
        %v3520 = vrsqrt.pop %v2710
        %v3521 = vmul.f32 %v3520, %v2710
        %v3522 = vmul.f32 %v3521, %v3520
        %v3523 = vmul.f32 0.5, %v3522
        %v3524 = vsub.f32 1.5, %v3523
        %v3525 = vmul.f32 %v3520, %v3524
        %v3526 = vmul.f32 %v2710, %v3525
        %vm3527 = vcmp.eq.f32.partialorder %v2710, inf
        %v3528 = vsel %vm3527, %v2710, %v3526
        %vm3529 = vcmp.eq.f32.partialorder %v2710, 0.0
        %v3530 = vand.u32 %v2710, 2147483648
        %v3531 = vsel %vm3529, %v3530, %v3528
        %v3532 = vrsqrt.pop %v2711
        %v3533 = vmul.f32 %v3532, %v2711
        %v3534 = vmul.f32 %v3533, %v3532
        %v3535 = vmul.f32 0.5, %v3534
        %v3536 = vsub.f32 1.5, %v3535
        %v3537 = vmul.f32 %v3532, %v3536
        %v3538 = vmul.f32 %v2711, %v3537
        %vm3539 = vcmp.eq.f32.partialorder %v2711, inf
        %v3540 = vsel %vm3539, %v2711, %v3538
        %vm3541 = vcmp.eq.f32.partialorder %v2711, 0.0
        %v3542 = vand.u32 %v2711, 2147483648
        %v3543 = vsel %vm3541, %v3542, %v3540
        %v3544 = vrsqrt.pop %v2712
        %v3545 = vmul.f32 %v3544, %v2712
        %v3546 = vmul.f32 %v3545, %v3544
        %v3547 = vmul.f32 0.5, %v3546
        %v3548 = vsub.f32 1.5, %v3547
        %v3549 = vmul.f32 %v3544, %v3548
        %v3550 = vmul.f32 %v2712, %v3549
        %vm3551 = vcmp.eq.f32.partialorder %v2712, inf
        %v3552 = vsel %vm3551, %v2712, %v3550
        %vm3553 = vcmp.eq.f32.partialorder %v2712, 0.0
        %v3554 = vand.u32 %v2712, 2147483648
        %v3555 = vsel %vm3553, %v3554, %v3552
        %v3556 = vrsqrt.pop %v2713
        %v3557 = vmul.f32 %v3556, %v2713
        %v3558 = vmul.f32 %v3557, %v3556
        %v3559 = vmul.f32 0.5, %v3558
        %v3560 = vsub.f32 1.5, %v3559
        %v3561 = vmul.f32 %v3556, %v3560
        %v3562 = vmul.f32 %v2713, %v3561
        %vm3563 = vcmp.eq.f32.partialorder %v2713, inf
        %v3564 = vsel %vm3563, %v2713, %v3562
        %vm3565 = vcmp.eq.f32.partialorder %v2713, 0.0
        %v3566 = vand.u32 %v2713, 2147483648
        %v3567 = vsel %vm3565, %v3566, %v3564
        %v3568 = vrsqrt.pop %v2714
        %v3569 = vmul.f32 %v3568, %v2714
        %v3570 = vmul.f32 %v3569, %v3568
        %v3571 = vmul.f32 0.5, %v3570
        %v3572 = vsub.f32 1.5, %v3571
        %v3573 = vmul.f32 %v3568, %v3572
        %v3574 = vmul.f32 %v2714, %v3573
        %vm3575 = vcmp.eq.f32.partialorder %v2714, inf
        %v3576 = vsel %vm3575, %v2714, %v3574
        %vm3577 = vcmp.eq.f32.partialorder %v2714, 0.0
        %v3578 = vand.u32 %v2714, 2147483648
        %v3579 = vsel %vm3577, %v3578, %v3576
        %v3580 = vrsqrt.pop %v2715
        %v3581 = vmul.f32 %v3580, %v2715
        %v3582 = vmul.f32 %v3581, %v3580
        %v3583 = vmul.f32 0.5, %v3582
        %v3584 = vsub.f32 1.5, %v3583
        %v3585 = vmul.f32 %v3580, %v3584
        %v3586 = vmul.f32 %v2715, %v3585
        %vm3587 = vcmp.eq.f32.partialorder %v2715, inf
        %v3588 = vsel %vm3587, %v2715, %v3586
        %vm3589 = vcmp.eq.f32.partialorder %v2715, 0.0
        %v3590 = vand.u32 %v2715, 2147483648
        %v3591 = vsel %vm3589, %v3590, %v3588
        %v3592 = vrsqrt.pop %v2716
        %v3593 = vmul.f32 %v3592, %v2716
        %v3594 = vmul.f32 %v3593, %v3592
        %v3595 = vmul.f32 0.5, %v3594
        %v3596 = vsub.f32 1.5, %v3595
        %v3597 = vmul.f32 %v3592, %v3596
        %v3598 = vmul.f32 %v2716, %v3597
        %vm3599 = vcmp.eq.f32.partialorder %v2716, inf
        %v3600 = vsel %vm3599, %v2716, %v3598
        %vm3601 = vcmp.eq.f32.partialorder %v2716, 0.0
        %v3602 = vand.u32 %v2716, 2147483648
        %v3603 = vsel %vm3601, %v3602, %v3600
        %v3604 = vrsqrt.pop %v2717
        %v3605 = vmul.f32 %v3604, %v2717
        %v3606 = vmul.f32 %v3605, %v3604
        %v3607 = vmul.f32 0.5, %v3606
        %v3608 = vsub.f32 1.5, %v3607
        %v3609 = vmul.f32 %v3604, %v3608
        %v3610 = vmul.f32 %v2717, %v3609
        %vm3611 = vcmp.eq.f32.partialorder %v2717, inf
        %v3612 = vsel %vm3611, %v2717, %v3610
        %vm3613 = vcmp.eq.f32.partialorder %v2717, 0.0
        %v3614 = vand.u32 %v2717, 2147483648
        %v3615 = vsel %vm3613, %v3614, %v3612
        %v3616 = vrsqrt.pop %v2718
        %v3617 = vmul.f32 %v3616, %v2718
        %v3618 = vmul.f32 %v3617, %v3616
        %v3619 = vmul.f32 0.5, %v3618
        %v3620 = vsub.f32 1.5, %v3619
        %v3621 = vmul.f32 %v3616, %v3620
        %v3622 = vmul.f32 %v2718, %v3621
        %vm3623 = vcmp.eq.f32.partialorder %v2718, inf
        %v3624 = vsel %vm3623, %v2718, %v3622
        %vm3625 = vcmp.eq.f32.partialorder %v2718, 0.0
        %v3626 = vand.u32 %v2718, 2147483648
        %v3627 = vsel %vm3625, %v3626, %v3624
        %v3628 = vrsqrt.pop %v2719
        %v3629 = vmul.f32 %v3628, %v2719
        %v3630 = vmul.f32 %v3629, %v3628
        %v3631 = vmul.f32 0.5, %v3630
        %v3632 = vsub.f32 1.5, %v3631
        %v3633 = vmul.f32 %v3628, %v3632
        %v3634 = vmul.f32 %v2719, %v3633
        %vm3635 = vcmp.eq.f32.partialorder %v2719, inf
        %v3636 = vsel %vm3635, %v2719, %v3634
        %vm3637 = vcmp.eq.f32.partialorder %v2719, 0.0
        %v3638 = vand.u32 %v2719, 2147483648
        %v3639 = vsel %vm3637, %v3638, %v3636
        %v3640 = vrsqrt.pop %v2720
        %v3641 = vmul.f32 %v3640, %v2720
        %v3642 = vmul.f32 %v3641, %v3640
        %v3643 = vmul.f32 0.5, %v3642
        %v3644 = vsub.f32 1.5, %v3643
        %v3645 = vmul.f32 %v3640, %v3644
        %v3646 = vmul.f32 %v2720, %v3645
        %vm3647 = vcmp.eq.f32.partialorder %v2720, inf
        %v3648 = vsel %vm3647, %v2720, %v3646
        %vm3649 = vcmp.eq.f32.partialorder %v2720, 0.0
        %v3650 = vand.u32 %v2720, 2147483648
        %v3651 = vsel %vm3649, %v3650, %v3648
        %v3652 = vrsqrt.pop %v2721
        %v3653 = vmul.f32 %v3652, %v2721
        %v3654 = vmul.f32 %v3653, %v3652
        %v3655 = vmul.f32 0.5, %v3654
        %v3656 = vsub.f32 1.5, %v3655
        %v3657 = vmul.f32 %v3652, %v3656
        %v3658 = vmul.f32 %v2721, %v3657
        %vm3659 = vcmp.eq.f32.partialorder %v2721, inf
        %v3660 = vsel %vm3659, %v2721, %v3658
        %vm3661 = vcmp.eq.f32.partialorder %v2721, 0.0
        %v3662 = vand.u32 %v2721, 2147483648
        %v3663 = vsel %vm3661, %v3662, %v3660
        %v3664 = vrsqrt.pop %v2722
        %v3665 = vmul.f32 %v3664, %v2722
        %v3666 = vmul.f32 %v3665, %v3664
        %v3667 = vmul.f32 0.5, %v3666
        %v3668 = vsub.f32 1.5, %v3667
        %v3669 = vmul.f32 %v3664, %v3668
        %v3670 = vmul.f32 %v2722, %v3669
        %vm3671 = vcmp.eq.f32.partialorder %v2722, inf
        %v3672 = vsel %vm3671, %v2722, %v3670
        %vm3673 = vcmp.eq.f32.partialorder %v2722, 0.0
        %v3674 = vand.u32 %v2722, 2147483648
        %v3675 = vsel %vm3673, %v3674, %v3672
        %v3676 = vrsqrt.pop %v2723
        %v3677 = vmul.f32 %v3676, %v2723
        %v3678 = vmul.f32 %v3677, %v3676
        %v3679 = vmul.f32 0.5, %v3678
        %v3680 = vsub.f32 1.5, %v3679
        %v3681 = vmul.f32 %v3676, %v3680
        %v3682 = vmul.f32 %v2723, %v3681
        %vm3683 = vcmp.eq.f32.partialorder %v2723, inf
        %v3684 = vsel %vm3683, %v2723, %v3682
        %vm3685 = vcmp.eq.f32.partialorder %v2723, 0.0
        %v3686 = vand.u32 %v2723, 2147483648
        %v3687 = vsel %vm3685, %v3686, %v3684
        %v3688 = vrsqrt.pop %v2724
        %v3689 = vmul.f32 %v3688, %v2724
        %v3690 = vmul.f32 %v3689, %v3688
        %v3691 = vmul.f32 0.5, %v3690
        %v3692 = vsub.f32 1.5, %v3691
        %v3693 = vmul.f32 %v3688, %v3692
        %v3694 = vmul.f32 %v2724, %v3693
        %vm3695 = vcmp.eq.f32.partialorder %v2724, inf
        %v3696 = vsel %vm3695, %v2724, %v3694
        %vm3697 = vcmp.eq.f32.partialorder %v2724, 0.0
        %v3698 = vand.u32 %v2724, 2147483648
        %v3699 = vsel %vm3697, %v3698, %v3696
        %v3700 = vrsqrt.pop %v2725
        %v3701 = vmul.f32 %v3700, %v2725
        %v3702 = vmul.f32 %v3701, %v3700
        %v3703 = vmul.f32 0.5, %v3702
        %v3704 = vsub.f32 1.5, %v3703
        %v3705 = vmul.f32 %v3700, %v3704
        %v3706 = vmul.f32 %v2725, %v3705
        %vm3707 = vcmp.eq.f32.partialorder %v2725, inf
        %v3708 = vsel %vm3707, %v2725, %v3706
        %vm3709 = vcmp.eq.f32.partialorder %v2725, 0.0
        %v3710 = vand.u32 %v2725, 2147483648
        %v3711 = vsel %vm3709, %v3710, %v3708
        %v3712 = vrsqrt.pop %v2726
        %v3713 = vmul.f32 %v3712, %v2726
        %v3714 = vmul.f32 %v3713, %v3712
        %v3715 = vmul.f32 0.5, %v3714
        %v3716 = vsub.f32 1.5, %v3715
        %v3717 = vmul.f32 %v3712, %v3716
        %v3718 = vmul.f32 %v2726, %v3717
        %vm3719 = vcmp.eq.f32.partialorder %v2726, inf
        %v3720 = vsel %vm3719, %v2726, %v3718
        %vm3721 = vcmp.eq.f32.partialorder %v2726, 0.0
        %v3722 = vand.u32 %v2726, 2147483648
        %v3723 = vsel %vm3721, %v3722, %v3720
        %v3724 = vrsqrt.pop %v2727
        %v3725 = vmul.f32 %v3724, %v2727
        %v3726 = vmul.f32 %v3725, %v3724
        %v3727 = vmul.f32 0.5, %v3726
        %v3728 = vsub.f32 1.5, %v3727
        %v3729 = vmul.f32 %v3724, %v3728
        %v3730 = vmul.f32 %v2727, %v3729
        %vm3731 = vcmp.eq.f32.partialorder %v2727, inf
        %v3732 = vsel %vm3731, %v2727, %v3730
        %vm3733 = vcmp.eq.f32.partialorder %v2727, 0.0
        %v3734 = vand.u32 %v2727, 2147483648
        %v3735 = vsel %vm3733, %v3734, %v3732
        %v3736 = vrsqrt.pop %v2728
        %v3737 = vmul.f32 %v3736, %v2728
        %v3738 = vmul.f32 %v3737, %v3736
        %v3739 = vmul.f32 0.5, %v3738
        %v3740 = vsub.f32 1.5, %v3739
        %v3741 = vmul.f32 %v3736, %v3740
        %v3742 = vmul.f32 %v2728, %v3741
        %vm3743 = vcmp.eq.f32.partialorder %v2728, inf
        %v3744 = vsel %vm3743, %v2728, %v3742
        %vm3745 = vcmp.eq.f32.partialorder %v2728, 0.0
        %v3746 = vand.u32 %v2728, 2147483648
        %v3747 = vsel %vm3745, %v3746, %v3744
        %v3748 = vrsqrt.pop %v2729
        %v3749 = vmul.f32 %v3748, %v2729
        %v3750 = vmul.f32 %v3749, %v3748
        %v3751 = vmul.f32 0.5, %v3750
        %v3752 = vsub.f32 1.5, %v3751
        %v3753 = vmul.f32 %v3748, %v3752
        %v3754 = vmul.f32 %v2729, %v3753
        %vm3755 = vcmp.eq.f32.partialorder %v2729, inf
        %v3756 = vsel %vm3755, %v2729, %v3754
        %vm3757 = vcmp.eq.f32.partialorder %v2729, 0.0
        %v3758 = vand.u32 %v2729, 2147483648
        %v3759 = vsel %vm3757, %v3758, %v3756
        %v3760 = vrsqrt.pop %v2730
        %v3761 = vmul.f32 %v3760, %v2730
        %v3762 = vmul.f32 %v3761, %v3760
        %v3763 = vmul.f32 0.5, %v3762
        %v3764 = vsub.f32 1.5, %v3763
        %v3765 = vmul.f32 %v3760, %v3764
        %v3766 = vmul.f32 %v2730, %v3765
        %vm3767 = vcmp.eq.f32.partialorder %v2730, inf
        %v3768 = vsel %vm3767, %v2730, %v3766
        %vm3769 = vcmp.eq.f32.partialorder %v2730, 0.0
        %v3770 = vand.u32 %v2730, 2147483648
        %v3771 = vsel %vm3769, %v3770, %v3768
        %v3772 = vrsqrt.pop %v2731
        %v3773 = vmul.f32 %v3772, %v2731
        %v3774 = vmul.f32 %v3773, %v3772
        %v3775 = vmul.f32 0.5, %v3774
        %v3776 = vsub.f32 1.5, %v3775
        %v3777 = vmul.f32 %v3772, %v3776
        %v3778 = vmul.f32 %v2731, %v3777
        %vm3779 = vcmp.eq.f32.partialorder %v2731, inf
        %v3780 = vsel %vm3779, %v2731, %v3778
        %vm3781 = vcmp.eq.f32.partialorder %v2731, 0.0
        %v3782 = vand.u32 %v2731, 2147483648
        %v3783 = vsel %vm3781, %v3782, %v3780
        %v3784 = vrsqrt.pop %v2732
        %v3785 = vmul.f32 %v3784, %v2732
        %v3786 = vmul.f32 %v3785, %v3784
        %v3787 = vmul.f32 0.5, %v3786
        %v3788 = vsub.f32 1.5, %v3787
        %v3789 = vmul.f32 %v3784, %v3788
        %v3790 = vmul.f32 %v2732, %v3789
        %vm3791 = vcmp.eq.f32.partialorder %v2732, inf
        %v3792 = vsel %vm3791, %v2732, %v3790
        %vm3793 = vcmp.eq.f32.partialorder %v2732, 0.0
        %v3794 = vand.u32 %v2732, 2147483648
        %v3795 = vsel %vm3793, %v3794, %v3792
        %v3796 = vrsqrt.pop %v2733
        %v3797 = vmul.f32 %v3796, %v2733
        %v3798 = vmul.f32 %v3797, %v3796
        %v3799 = vmul.f32 0.5, %v3798
        %v3800 = vsub.f32 1.5, %v3799
        %v3801 = vmul.f32 %v3796, %v3800
        %v3802 = vmul.f32 %v2733, %v3801
        %vm3803 = vcmp.eq.f32.partialorder %v2733, inf
        %v3804 = vsel %vm3803, %v2733, %v3802
        %vm3805 = vcmp.eq.f32.partialorder %v2733, 0.0
        %v3806 = vand.u32 %v2733, 2147483648
        %v3807 = vsel %vm3805, %v3806, %v3804
        %v3808 = vrsqrt.pop %v2734
        %v3809 = vmul.f32 %v3808, %v2734
        %v3810 = vmul.f32 %v3809, %v3808
        %v3811 = vmul.f32 0.5, %v3810
        %v3812 = vsub.f32 1.5, %v3811
        %v3813 = vmul.f32 %v3808, %v3812
        %v3814 = vmul.f32 %v2734, %v3813
        %vm3815 = vcmp.eq.f32.partialorder %v2734, inf
        %v3816 = vsel %vm3815, %v2734, %v3814
        %vm3817 = vcmp.eq.f32.partialorder %v2734, 0.0
        %v3818 = vand.u32 %v2734, 2147483648
        %v3819 = vsel %vm3817, %v3818, %v3816
        %v3820 = vrsqrt.pop %v2735
        %v3821 = vmul.f32 %v3820, %v2735
        %v3822 = vmul.f32 %v3821, %v3820
        %v3823 = vmul.f32 0.5, %v3822
        %v3824 = vsub.f32 1.5, %v3823
        %v3825 = vmul.f32 %v3820, %v3824
        %v3826 = vmul.f32 %v2735, %v3825
        %vm3827 = vcmp.eq.f32.partialorder %v2735, inf
        %v3828 = vsel %vm3827, %v2735, %v3826
        %vm3829 = vcmp.eq.f32.partialorder %v2735, 0.0
        %v3830 = vand.u32 %v2735, 2147483648
        %v3831 = vsel %vm3829, %v3830, %v3828
        %v3832 = vrsqrt.pop %v2736
        %v3833 = vmul.f32 %v3832, %v2736
        %v3834 = vmul.f32 %v3833, %v3832
        %v3835 = vmul.f32 0.5, %v3834
        %v3836 = vsub.f32 1.5, %v3835
        %v3837 = vmul.f32 %v3832, %v3836
        %v3838 = vmul.f32 %v2736, %v3837
        %vm3839 = vcmp.eq.f32.partialorder %v2736, inf
        %v3840 = vsel %vm3839, %v2736, %v3838
        %vm3841 = vcmp.eq.f32.partialorder %v2736, 0.0
        %v3842 = vand.u32 %v2736, 2147483648
        %v3843 = vsel %vm3841, %v3842, %v3840
        %v3844 = vrsqrt.pop %v2737
        %v3845 = vmul.f32 %v3844, %v2737
        %v3846 = vmul.f32 %v3845, %v3844
        %v3847 = vmul.f32 0.5, %v3846
        %v3848 = vsub.f32 1.5, %v3847
        %v3849 = vmul.f32 %v3844, %v3848
        %v3850 = vmul.f32 %v2737, %v3849
        %vm3851 = vcmp.eq.f32.partialorder %v2737, inf
        %v3852 = vsel %vm3851, %v2737, %v3850
        %vm3853 = vcmp.eq.f32.partialorder %v2737, 0.0
        %v3854 = vand.u32 %v2737, 2147483648
        %v3855 = vsel %vm3853, %v3854, %v3852
        %v3856 = vrsqrt.pop %v2738
        %v3857 = vmul.f32 %v3856, %v2738
        %v3858 = vmul.f32 %v3857, %v3856
        %v3859 = vmul.f32 0.5, %v3858
        %v3860 = vsub.f32 1.5, %v3859
        %v3861 = vmul.f32 %v3856, %v3860
        %v3862 = vmul.f32 %v2738, %v3861
        %vm3863 = vcmp.eq.f32.partialorder %v2738, inf
        %v3864 = vsel %vm3863, %v2738, %v3862
        %vm3865 = vcmp.eq.f32.partialorder %v2738, 0.0
        %v3866 = vand.u32 %v2738, 2147483648
        %v3867 = vsel %vm3865, %v3866, %v3864
        %v3868 = vrsqrt.pop %v2739
        %v3869 = vmul.f32 %v3868, %v2739
        %v3870 = vmul.f32 %v3869, %v3868
        %v3871 = vmul.f32 0.5, %v3870
        %v3872 = vsub.f32 1.5, %v3871
        %v3873 = vmul.f32 %v3868, %v3872
        %v3874 = vmul.f32 %v2739, %v3873
        %vm3875 = vcmp.eq.f32.partialorder %v2739, inf
        %v3876 = vsel %vm3875, %v2739, %v3874
        %vm3877 = vcmp.eq.f32.partialorder %v2739, 0.0
        %v3878 = vand.u32 %v2739, 2147483648
        %v3879 = vsel %vm3877, %v3878, %v3876
        %v3880 = vrsqrt.pop %v2740
        %v3881 = vmul.f32 %v3880, %v2740
        %v3882 = vmul.f32 %v3881, %v3880
        %v3883 = vmul.f32 0.5, %v3882
        %v3884 = vsub.f32 1.5, %v3883
        %v3885 = vmul.f32 %v3880, %v3884
        %v3886 = vmul.f32 %v2740, %v3885
        %vm3887 = vcmp.eq.f32.partialorder %v2740, inf
        %v3888 = vsel %vm3887, %v2740, %v3886
        %vm3889 = vcmp.eq.f32.partialorder %v2740, 0.0
        %v3890 = vand.u32 %v2740, 2147483648
        %v3891 = vsel %vm3889, %v3890, %v3888
        %v3892 = vrsqrt.pop %v2741
        %v3893 = vmul.f32 %v3892, %v2741
        %v3894 = vmul.f32 %v3893, %v3892
        %v3895 = vmul.f32 0.5, %v3894
        %v3896 = vsub.f32 1.5, %v3895
        %v3897 = vmul.f32 %v3892, %v3896
        %v3898 = vmul.f32 %v2741, %v3897
        %vm3899 = vcmp.eq.f32.partialorder %v2741, inf
        %v3900 = vsel %vm3899, %v2741, %v3898
        %vm3901 = vcmp.eq.f32.partialorder %v2741, 0.0
        %v3902 = vand.u32 %v2741, 2147483648
        %v3903 = vsel %vm3901, %v3902, %v3900
        %v3904 = vrsqrt.pop %v2742
        %v3905 = vmul.f32 %v3904, %v2742
        %v3906 = vmul.f32 %v3905, %v3904
        %v3907 = vmul.f32 0.5, %v3906
        %v3908 = vsub.f32 1.5, %v3907
        %v3909 = vmul.f32 %v3904, %v3908
        %v3910 = vmul.f32 %v2742, %v3909
        %vm3911 = vcmp.eq.f32.partialorder %v2742, inf
        %v3912 = vsel %vm3911, %v2742, %v3910
        %vm3913 = vcmp.eq.f32.partialorder %v2742, 0.0
        %v3914 = vand.u32 %v2742, 2147483648
        %v3915 = vsel %vm3913, %v3914, %v3912
        %v3916 = vrsqrt.pop %v2743
        %v3917 = vmul.f32 %v3916, %v2743
        %v3918 = vmul.f32 %v3917, %v3916
        %v3919 = vmul.f32 0.5, %v3918
        %v3920 = vsub.f32 1.5, %v3919
        %v3921 = vmul.f32 %v3916, %v3920
        %v3922 = vmul.f32 %v2743, %v3921
        %vm3923 = vcmp.eq.f32.partialorder %v2743, inf
        %v3924 = vsel %vm3923, %v2743, %v3922
        %vm3925 = vcmp.eq.f32.partialorder %v2743, 0.0
        %v3926 = vand.u32 %v2743, 2147483648
        %v3927 = vsel %vm3925, %v3926, %v3924
        %v3928 = vrsqrt.pop %v2744
        %v3929 = vmul.f32 %v3928, %v2744
        %v3930 = vmul.f32 %v3929, %v3928
        %v3931 = vmul.f32 0.5, %v3930
        %v3932 = vsub.f32 1.5, %v3931
        %v3933 = vmul.f32 %v3928, %v3932
        %v3934 = vmul.f32 %v2744, %v3933
        %vm3935 = vcmp.eq.f32.partialorder %v2744, inf
        %v3936 = vsel %vm3935, %v2744, %v3934
        %vm3937 = vcmp.eq.f32.partialorder %v2744, 0.0
        %v3938 = vand.u32 %v2744, 2147483648
        %v3939 = vsel %vm3937, %v3938, %v3936
        %v3940 = vrsqrt.pop %v2745
        %v3941 = vmul.f32 %v3940, %v2745
        %v3942 = vmul.f32 %v3941, %v3940
        %v3943 = vmul.f32 0.5, %v3942
        %v3944 = vsub.f32 1.5, %v3943
        %v3945 = vmul.f32 %v3940, %v3944
        %v3946 = vmul.f32 %v2745, %v3945
        %vm3947 = vcmp.eq.f32.partialorder %v2745, inf
        %v3948 = vsel %vm3947, %v2745, %v3946
        %vm3949 = vcmp.eq.f32.partialorder %v2745, 0.0
        %v3950 = vand.u32 %v2745, 2147483648
        %v3951 = vsel %vm3949, %v3950, %v3948
        %v3952 = vrsqrt.pop %v2746
        %v3953 = vmul.f32 %v3952, %v2746
        %v3954 = vmul.f32 %v3953, %v3952
        %v3955 = vmul.f32 0.5, %v3954
        %v3956 = vsub.f32 1.5, %v3955
        %v3957 = vmul.f32 %v3952, %v3956
        %v3958 = vmul.f32 %v2746, %v3957
        %vm3959 = vcmp.eq.f32.partialorder %v2746, inf
        %v3960 = vsel %vm3959, %v2746, %v3958
        %vm3961 = vcmp.eq.f32.partialorder %v2746, 0.0
        %v3962 = vand.u32 %v2746, 2147483648
        %v3963 = vsel %vm3961, %v3962, %v3960
        %v3964 = vrsqrt.pop %v2747
        %v3965 = vmul.f32 %v3964, %v2747
        %v3966 = vmul.f32 %v3965, %v3964
        %v3967 = vmul.f32 0.5, %v3966
        %v3968 = vsub.f32 1.5, %v3967
        %v3969 = vmul.f32 %v3964, %v3968
        %v3970 = vmul.f32 %v2747, %v3969
        %vm3971 = vcmp.eq.f32.partialorder %v2747, inf
        %v3972 = vsel %vm3971, %v2747, %v3970
        %vm3973 = vcmp.eq.f32.partialorder %v2747, 0.0
        %v3974 = vand.u32 %v2747, 2147483648
        %v3975 = vsel %vm3973, %v3974, %v3972
        %v3976 = vrsqrt.pop %v2748
        %v3977 = vmul.f32 %v3976, %v2748
        %v3978 = vmul.f32 %v3977, %v3976
        %v3979 = vmul.f32 0.5, %v3978
        %v3980 = vsub.f32 1.5, %v3979
        %v3981 = vmul.f32 %v3976, %v3980
        %v3982 = vmul.f32 %v2748, %v3981
        %vm3983 = vcmp.eq.f32.partialorder %v2748, inf
        %v3984 = vsel %vm3983, %v2748, %v3982
        %vm3985 = vcmp.eq.f32.partialorder %v2748, 0.0
        %v3986 = vand.u32 %v2748, 2147483648
        %v3987 = vsel %vm3985, %v3986, %v3984
        %v3988 = vrsqrt.pop %v2749
        %v3989 = vmul.f32 %v3988, %v2749
        %v3990 = vmul.f32 %v3989, %v3988
        %v3991 = vmul.f32 0.5, %v3990
        %v3992 = vsub.f32 1.5, %v3991
        %v3993 = vmul.f32 %v3988, %v3992
        %v3994 = vmul.f32 %v2749, %v3993
        %vm3995 = vcmp.eq.f32.partialorder %v2749, inf
        %v3996 = vsel %vm3995, %v2749, %v3994
        %vm3997 = vcmp.eq.f32.partialorder %v2749, 0.0
        %v3998 = vand.u32 %v2749, 2147483648
        %v3999 = vsel %vm3997, %v3998, %v3996
        %v4000 = vrsqrt.pop %v2750
        %v4001 = vmul.f32 %v4000, %v2750
        %v4002 = vmul.f32 %v4001, %v4000
        %v4003 = vmul.f32 0.5, %v4002
        %v4004 = vsub.f32 1.5, %v4003
        %v4005 = vmul.f32 %v4000, %v4004
        %v4006 = vmul.f32 %v2750, %v4005
        %vm4007 = vcmp.eq.f32.partialorder %v2750, inf
        %v4008 = vsel %vm4007, %v2750, %v4006
        %vm4009 = vcmp.eq.f32.partialorder %v2750, 0.0
        %v4010 = vand.u32 %v2750, 2147483648
        %v4011 = vsel %vm4009, %v4010, %v4008
        %v4012 = vrsqrt.pop %v2751
        %v4013 = vmul.f32 %v4012, %v2751
        %v4014 = vmul.f32 %v4013, %v4012
        %v4015 = vmul.f32 0.5, %v4014
        %v4016 = vsub.f32 1.5, %v4015
        %v4017 = vmul.f32 %v4012, %v4016
        %v4018 = vmul.f32 %v2751, %v4017
        %vm4019 = vcmp.eq.f32.partialorder %v2751, inf
        %v4020 = vsel %vm4019, %v2751, %v4018
        %vm4021 = vcmp.eq.f32.partialorder %v2751, 0.0
        %v4022 = vand.u32 %v2751, 2147483648
        %v4023 = vsel %vm4021, %v4022, %v4020
        %v4024 = vrsqrt.pop %v2752
        %v4025 = vmul.f32 %v4024, %v2752
        %v4026 = vmul.f32 %v4025, %v4024
        %v4027 = vmul.f32 0.5, %v4026
        %v4028 = vsub.f32 1.5, %v4027
        %v4029 = vmul.f32 %v4024, %v4028
        %v4030 = vmul.f32 %v2752, %v4029
        %vm4031 = vcmp.eq.f32.partialorder %v2752, inf
        %v4032 = vsel %vm4031, %v2752, %v4030
        %vm4033 = vcmp.eq.f32.partialorder %v2752, 0.0
        %v4034 = vand.u32 %v2752, 2147483648
        %v4035 = vsel %vm4033, %v4034, %v4032
        %v4036 = vrsqrt.pop %v2753
        %v4037 = vmul.f32 %v4036, %v2753
        %v4038 = vmul.f32 %v4037, %v4036
        %v4039 = vmul.f32 0.5, %v4038
        %v4040 = vsub.f32 1.5, %v4039
        %v4041 = vmul.f32 %v4036, %v4040
        %v4042 = vmul.f32 %v2753, %v4041
        %vm4043 = vcmp.eq.f32.partialorder %v2753, inf
        %v4044 = vsel %vm4043, %v2753, %v4042
        %vm4045 = vcmp.eq.f32.partialorder %v2753, 0.0
        %v4046 = vand.u32 %v2753, 2147483648
        %v4047 = vsel %vm4045, %v4046, %v4044
        %v4048 = vrsqrt.pop %v2754
        %v4049 = vmul.f32 %v4048, %v2754
        %v4050 = vmul.f32 %v4049, %v4048
        %v4051 = vmul.f32 0.5, %v4050
        %v4052 = vsub.f32 1.5, %v4051
        %v4053 = vmul.f32 %v4048, %v4052
        %v4054 = vmul.f32 %v2754, %v4053
        %vm4055 = vcmp.eq.f32.partialorder %v2754, inf
        %v4056 = vsel %vm4055, %v2754, %v4054
        %vm4057 = vcmp.eq.f32.partialorder %v2754, 0.0
        %v4058 = vand.u32 %v2754, 2147483648
        %v4059 = vsel %vm4057, %v4058, %v4056
        %v4060 = vrsqrt.pop %v2755
        %v4061 = vmul.f32 %v4060, %v2755
        %v4062 = vmul.f32 %v4061, %v4060
        %v4063 = vmul.f32 0.5, %v4062
        %v4064 = vsub.f32 1.5, %v4063
        %v4065 = vmul.f32 %v4060, %v4064
        %v4066 = vmul.f32 %v2755, %v4065
        %vm4067 = vcmp.eq.f32.partialorder %v2755, inf
        %v4068 = vsel %vm4067, %v2755, %v4066
        %vm4069 = vcmp.eq.f32.partialorder %v2755, 0.0
        %v4070 = vand.u32 %v2755, 2147483648
        %v4071 = vsel %vm4069, %v4070, %v4068
        %v4072 = vrsqrt.pop %v2756
        %v4073 = vmul.f32 %v4072, %v2756
        %v4074 = vmul.f32 %v4073, %v4072
        %v4075 = vmul.f32 0.5, %v4074
        %v4076 = vsub.f32 1.5, %v4075
        %v4077 = vmul.f32 %v4072, %v4076
        %v4078 = vmul.f32 %v2756, %v4077
        %vm4079 = vcmp.eq.f32.partialorder %v2756, inf
        %v4080 = vsel %vm4079, %v2756, %v4078
        %vm4081 = vcmp.eq.f32.partialorder %v2756, 0.0
        %v4082 = vand.u32 %v2756, 2147483648
        %v4083 = vsel %vm4081, %v4082, %v4080
        %v4084 = vrsqrt.pop %v2757
        %v4085 = vmul.f32 %v4084, %v2757
        %v4086 = vmul.f32 %v4085, %v4084
        %v4087 = vmul.f32 0.5, %v4086
        %v4088 = vsub.f32 1.5, %v4087
        %v4089 = vmul.f32 %v4084, %v4088
        %v4090 = vmul.f32 %v2757, %v4089
        %vm4091 = vcmp.eq.f32.partialorder %v2757, inf
        %v4092 = vsel %vm4091, %v2757, %v4090
        %vm4093 = vcmp.eq.f32.partialorder %v2757, 0.0
        %v4094 = vand.u32 %v2757, 2147483648
        %v4095 = vsel %vm4093, %v4094, %v4092
        %v4096 = vrsqrt.pop %v2758
        %v4097 = vmul.f32 %v4096, %v2758
        %v4098 = vmul.f32 %v4097, %v4096
        %v4099 = vmul.f32 0.5, %v4098
        %v4100 = vsub.f32 1.5, %v4099
        %v4101 = vmul.f32 %v4096, %v4100
        %v4102 = vmul.f32 %v2758, %v4101
        %vm4103 = vcmp.eq.f32.partialorder %v2758, inf
        %v4104 = vsel %vm4103, %v2758, %v4102
        %vm4105 = vcmp.eq.f32.partialorder %v2758, 0.0
        %v4106 = vand.u32 %v2758, 2147483648
        %v4107 = vsel %vm4105, %v4106, %v4104
        %v4108 = vrsqrt.pop %v2759
        %v4109 = vmul.f32 %v4108, %v2759
        %v4110 = vmul.f32 %v4109, %v4108
        %v4111 = vmul.f32 0.5, %v4110
        %v4112 = vsub.f32 1.5, %v4111
        %v4113 = vmul.f32 %v4108, %v4112
        %v4114 = vmul.f32 %v2759, %v4113
        %vm4115 = vcmp.eq.f32.partialorder %v2759, inf
        %v4116 = vsel %vm4115, %v2759, %v4114
        %vm4117 = vcmp.eq.f32.partialorder %v2759, 0.0
        %v4118 = vand.u32 %v2759, 2147483648
        %v4119 = vsel %vm4117, %v4118, %v4116
        %v4120 = vrsqrt.pop %v2760
        %v4121 = vmul.f32 %v4120, %v2760
        %v4122 = vmul.f32 %v4121, %v4120
        %v4123 = vmul.f32 0.5, %v4122
        %v4124 = vsub.f32 1.5, %v4123
        %v4125 = vmul.f32 %v4120, %v4124
        %v4126 = vmul.f32 %v2760, %v4125
        %vm4127 = vcmp.eq.f32.partialorder %v2760, inf
        %v4128 = vsel %vm4127, %v2760, %v4126
        %vm4129 = vcmp.eq.f32.partialorder %v2760, 0.0
        %v4130 = vand.u32 %v2760, 2147483648
        %v4131 = vsel %vm4129, %v4130, %v4128
        %v4132 = vrsqrt.pop %v2761
        %v4133 = vmul.f32 %v4132, %v2761
        %v4134 = vmul.f32 %v4133, %v4132
        %v4135 = vmul.f32 0.5, %v4134
        %v4136 = vsub.f32 1.5, %v4135
        %v4137 = vmul.f32 %v4132, %v4136
        %v4138 = vmul.f32 %v2761, %v4137
        %vm4139 = vcmp.eq.f32.partialorder %v2761, inf
        %v4140 = vsel %vm4139, %v2761, %v4138
        %vm4141 = vcmp.eq.f32.partialorder %v2761, 0.0
        %v4142 = vand.u32 %v2761, 2147483648
        %v4143 = vsel %vm4141, %v4142, %v4140
        %v4144 = vrsqrt.pop %v2762
        %v4145 = vmul.f32 %v4144, %v2762
        %v4146 = vmul.f32 %v4145, %v4144
        %v4147 = vmul.f32 0.5, %v4146
        %v4148 = vsub.f32 1.5, %v4147
        %v4149 = vmul.f32 %v4144, %v4148
        %v4150 = vmul.f32 %v2762, %v4149
        %vm4151 = vcmp.eq.f32.partialorder %v2762, inf
        %v4152 = vsel %vm4151, %v2762, %v4150
        %vm4153 = vcmp.eq.f32.partialorder %v2762, 0.0
        %v4154 = vand.u32 %v2762, 2147483648
        %v4155 = vsel %vm4153, %v4154, %v4152
        %v4156 = vrsqrt.pop %v2763
        %v4157 = vmul.f32 %v4156, %v2763
        %v4158 = vmul.f32 %v4157, %v4156
        %v4159 = vmul.f32 0.5, %v4158
        %v4160 = vsub.f32 1.5, %v4159
        %v4161 = vmul.f32 %v4156, %v4160
        %v4162 = vmul.f32 %v2763, %v4161
        %vm4163 = vcmp.eq.f32.partialorder %v2763, inf
        %v4164 = vsel %vm4163, %v2763, %v4162
        %vm4165 = vcmp.eq.f32.partialorder %v2763, 0.0
        %v4166 = vand.u32 %v2763, 2147483648
        %v4167 = vsel %vm4165, %v4166, %v4164
        %v4168 = vrsqrt.pop %v2764
        %v4169 = vmul.f32 %v4168, %v2764
        %v4170 = vmul.f32 %v4169, %v4168
        %v4171 = vmul.f32 0.5, %v4170
        %v4172 = vsub.f32 1.5, %v4171
        %v4173 = vmul.f32 %v4168, %v4172
        %v4174 = vmul.f32 %v2764, %v4173
        %vm4175 = vcmp.eq.f32.partialorder %v2764, inf
        %v4176 = vsel %vm4175, %v2764, %v4174
        %vm4177 = vcmp.eq.f32.partialorder %v2764, 0.0
        %v4178 = vand.u32 %v2764, 2147483648
        %v4179 = vsel %vm4177, %v4178, %v4176
        %v4180 = vrsqrt.pop %v2765
        %v4181 = vmul.f32 %v4180, %v2765
        %v4182 = vmul.f32 %v4181, %v4180
        %v4183 = vmul.f32 0.5, %v4182
        %v4184 = vsub.f32 1.5, %v4183
        %v4185 = vmul.f32 %v4180, %v4184
        %v4186 = vmul.f32 %v2765, %v4185
        %vm4187 = vcmp.eq.f32.partialorder %v2765, inf
        %v4188 = vsel %vm4187, %v2765, %v4186
        %vm4189 = vcmp.eq.f32.partialorder %v2765, 0.0
        %v4190 = vand.u32 %v2765, 2147483648
        %v4191 = vsel %vm4189, %v4190, %v4188
        %v4192 = vrsqrt.pop %v2766
        %v4193 = vmul.f32 %v4192, %v2766
        %v4194 = vmul.f32 %v4193, %v4192
        %v4195 = vmul.f32 0.5, %v4194
        %v4196 = vsub.f32 1.5, %v4195
        %v4197 = vmul.f32 %v4192, %v4196
        %v4198 = vmul.f32 %v2766, %v4197
        %vm4199 = vcmp.eq.f32.partialorder %v2766, inf
        %v4200 = vsel %vm4199, %v2766, %v4198
        %vm4201 = vcmp.eq.f32.partialorder %v2766, 0.0
        %v4202 = vand.u32 %v2766, 2147483648
        %v4203 = vsel %vm4201, %v4202, %v4200
        %v4204 = vrsqrt.pop %v2767
        %v4205 = vmul.f32 %v4204, %v2767
        %v4206 = vmul.f32 %v4205, %v4204
        %v4207 = vmul.f32 0.5, %v4206
        %v4208 = vsub.f32 1.5, %v4207
        %v4209 = vmul.f32 %v4204, %v4208
        %v4210 = vmul.f32 %v2767, %v4209
        %vm4211 = vcmp.eq.f32.partialorder %v2767, inf
        %v4212 = vsel %vm4211, %v2767, %v4210
        %vm4213 = vcmp.eq.f32.partialorder %v2767, 0.0
        %v4214 = vand.u32 %v2767, 2147483648
        %v4215 = vsel %vm4213, %v4214, %v4212
        %v4216 = vrsqrt.pop %v2768
        %v4217 = vmul.f32 %v4216, %v2768
        %v4218 = vmul.f32 %v4217, %v4216
        %v4219 = vmul.f32 0.5, %v4218
        %v4220 = vsub.f32 1.5, %v4219
        %v4221 = vmul.f32 %v4216, %v4220
        %v4222 = vmul.f32 %v2768, %v4221
        %vm4223 = vcmp.eq.f32.partialorder %v2768, inf
        %v4224 = vsel %vm4223, %v2768, %v4222
        %vm4225 = vcmp.eq.f32.partialorder %v2768, 0.0
        %v4226 = vand.u32 %v2768, 2147483648
        %v4227 = vsel %vm4225, %v4226, %v4224
        %v4228 = vrsqrt.pop %v2769
        %v4229 = vmul.f32 %v4228, %v2769
        %v4230 = vmul.f32 %v4229, %v4228
        %v4231 = vmul.f32 0.5, %v4230
        %v4232 = vsub.f32 1.5, %v4231
        %v4233 = vmul.f32 %v4228, %v4232
        %v4234 = vmul.f32 %v2769, %v4233
        %vm4235 = vcmp.eq.f32.partialorder %v2769, inf
        %v4236 = vsel %vm4235, %v2769, %v4234
        %vm4237 = vcmp.eq.f32.partialorder %v2769, 0.0
        %v4238 = vand.u32 %v2769, 2147483648
        %v4239 = vsel %vm4237, %v4238, %v4236
        %v4240 = vrsqrt.pop %v2770
        %v4241 = vmul.f32 %v4240, %v2770
        %v4242 = vmul.f32 %v4241, %v4240
        %v4243 = vmul.f32 0.5, %v4242
        %v4244 = vsub.f32 1.5, %v4243
        %v4245 = vmul.f32 %v4240, %v4244
        %v4246 = vmul.f32 %v2770, %v4245
        %vm4247 = vcmp.eq.f32.partialorder %v2770, inf
        %v4248 = vsel %vm4247, %v2770, %v4246
        %vm4249 = vcmp.eq.f32.partialorder %v2770, 0.0
        %v4250 = vand.u32 %v2770, 2147483648
        %v4251 = vsel %vm4249, %v4250, %v4248
        %v4252 = vrsqrt.pop %v2771
        %v4253 = vmul.f32 %v4252, %v2771
        %v4254 = vmul.f32 %v4253, %v4252
        %v4255 = vmul.f32 0.5, %v4254
        %v4256 = vsub.f32 1.5, %v4255
        %v4257 = vmul.f32 %v4252, %v4256
        %v4258 = vmul.f32 %v2771, %v4257
        %vm4259 = vcmp.eq.f32.partialorder %v2771, inf
        %v4260 = vsel %vm4259, %v2771, %v4258
        %vm4261 = vcmp.eq.f32.partialorder %v2771, 0.0
        %v4262 = vand.u32 %v2771, 2147483648
        %v4263 = vsel %vm4261, %v4262, %v4260
        %v4264 = vrsqrt.pop %v2772
        %v4265 = vmul.f32 %v4264, %v2772
        %v4266 = vmul.f32 %v4265, %v4264
        %v4267 = vmul.f32 0.5, %v4266
        %v4268 = vsub.f32 1.5, %v4267
        %v4269 = vmul.f32 %v4264, %v4268
        %v4270 = vmul.f32 %v2772, %v4269
        %vm4271 = vcmp.eq.f32.partialorder %v2772, inf
        %v4272 = vsel %vm4271, %v2772, %v4270
        %vm4273 = vcmp.eq.f32.partialorder %v2772, 0.0
        %v4274 = vand.u32 %v2772, 2147483648
        %v4275 = vsel %vm4273, %v4274, %v4272
        %v4276 = vrsqrt.pop %v2773
        %v4277 = vmul.f32 %v4276, %v2773
        %v4278 = vmul.f32 %v4277, %v4276
        %v4279 = vmul.f32 0.5, %v4278
        %v4280 = vsub.f32 1.5, %v4279
        %v4281 = vmul.f32 %v4276, %v4280
        %v4282 = vmul.f32 %v2773, %v4281
        %vm4283 = vcmp.eq.f32.partialorder %v2773, inf
        %v4284 = vsel %vm4283, %v2773, %v4282
        %vm4285 = vcmp.eq.f32.partialorder %v2773, 0.0
        %v4286 = vand.u32 %v2773, 2147483648
        %v4287 = vsel %vm4285, %v4286, %v4284
        %v4288 = vrsqrt.pop %v2774
        %v4289 = vmul.f32 %v4288, %v2774
        %v4290 = vmul.f32 %v4289, %v4288
        %v4291 = vmul.f32 0.5, %v4290
        %v4292 = vsub.f32 1.5, %v4291
        %v4293 = vmul.f32 %v4288, %v4292
        %v4294 = vmul.f32 %v2774, %v4293
        %vm4295 = vcmp.eq.f32.partialorder %v2774, inf
        %v4296 = vsel %vm4295, %v2774, %v4294
        %vm4297 = vcmp.eq.f32.partialorder %v2774, 0.0
        %v4298 = vand.u32 %v2774, 2147483648
        %v4299 = vsel %vm4297, %v4298, %v4296
        %v4300 = vrsqrt.pop %v2775
        %v4301 = vmul.f32 %v4300, %v2775
        %v4302 = vmul.f32 %v4301, %v4300
        %v4303 = vmul.f32 0.5, %v4302
        %v4304 = vsub.f32 1.5, %v4303
        %v4305 = vmul.f32 %v4300, %v4304
        %v4306 = vmul.f32 %v2775, %v4305
        %vm4307 = vcmp.eq.f32.partialorder %v2775, inf
        %v4308 = vsel %vm4307, %v2775, %v4306
        %vm4309 = vcmp.eq.f32.partialorder %v2775, 0.0
        %v4310 = vand.u32 %v2775, 2147483648
        %v4311 = vsel %vm4309, %v4310, %v4308
        %v4312 = vpack.c.bf16 %v2811, %v2787
        %v4313 = vpack.c.bf16 %v2823, %v2799
        %v4314 = vpack.c.bf16 %v2859, %v2835
        %v4315 = vpack.c.bf16 %v2871, %v2847
        %v4316 = vpack.c.bf16 %v2907, %v2883
        %v4317 = vpack.c.bf16 %v2919, %v2895
        %v4318 = vpack.c.bf16 %v2955, %v2931
        %v4319 = vpack.c.bf16 %v2967, %v2943
        %v4320 = vpack.c.bf16 %v3003, %v2979
        %v4321 = vpack.c.bf16 %v3015, %v2991
        %v4322 = vpack.c.bf16 %v3051, %v3027
        %v4323 = vpack.c.bf16 %v3063, %v3039
        %v4324 = vpack.c.bf16 %v3099, %v3075
        %v4325 = vpack.c.bf16 %v3111, %v3087
        %v4326 = vpack.c.bf16 %v3147, %v3123
        %v4327 = vpack.c.bf16 %v3159, %v3135
        %v4328 = vpack.c.bf16 %v3195, %v3171
        %v4329 = vpack.c.bf16 %v3207, %v3183
        %v4330 = vpack.c.bf16 %v3243, %v3219
        %v4331 = vpack.c.bf16 %v3255, %v3231
        %v4332 = vpack.c.bf16 %v3291, %v3267
        %v4333 = vpack.c.bf16 %v3303, %v3279
        %v4334 = vpack.c.bf16 %v3339, %v3315
        %v4335 = vpack.c.bf16 %v3351, %v3327
        %v4336 = vpack.c.bf16 %v3387, %v3363
        %v4337 = vpack.c.bf16 %v3399, %v3375
        %v4338 = vpack.c.bf16 %v3435, %v3411
        %v4339 = vpack.c.bf16 %v3447, %v3423
        %v4340 = vpack.c.bf16 %v3483, %v3459
        %v4341 = vpack.c.bf16 %v3495, %v3471
        %v4342 = vpack.c.bf16 %v3531, %v3507
        %v4343 = vpack.c.bf16 %v3543, %v3519
        %v4344 = vpack.c.bf16 %v3579, %v3555
        %v4345 = vpack.c.bf16 %v3591, %v3567
        %v4346 = vpack.c.bf16 %v3627, %v3603
        %v4347 = vpack.c.bf16 %v3639, %v3615
        %v4348 = vpack.c.bf16 %v3675, %v3651
        %v4349 = vpack.c.bf16 %v3687, %v3663
        %v4350 = vpack.c.bf16 %v3723, %v3699
        %v4351 = vpack.c.bf16 %v3735, %v3711
        %v4352 = vpack.c.bf16 %v3771, %v3747
        %v4353 = vpack.c.bf16 %v3783, %v3759
        %v4354 = vpack.c.bf16 %v3819, %v3795
        %v4355 = vpack.c.bf16 %v3831, %v3807
        %v4356 = vpack.c.bf16 %v3867, %v3843
        %v4357 = vpack.c.bf16 %v3879, %v3855
        %v4358 = vpack.c.bf16 %v3915, %v3891
        %v4359 = vpack.c.bf16 %v3927, %v3903
        %v4360 = vpack.c.bf16 %v3963, %v3939
        %v4361 = vpack.c.bf16 %v3975, %v3951
        %v4362 = vpack.c.bf16 %v4011, %v3987
        %v4363 = vpack.c.bf16 %v4023, %v3999
        %v4364 = vpack.c.bf16 %v4059, %v4035
        %v4365 = vpack.c.bf16 %v4071, %v4047
        %v4366 = vpack.c.bf16 %v4107, %v4083
        %v4367 = vpack.c.bf16 %v4119, %v4095
        %v4368 = vpack.c.bf16 %v4155, %v4131
        %v4369 = vpack.c.bf16 %v4167, %v4143
        %v4370 = vpack.c.bf16 %v4203, %v4179
        %v4371 = vpack.c.bf16 %v4215, %v4191
        %v4372 = vpack.c.bf16 %v4251, %v4227
        %v4373 = vpack.c.bf16 %v4263, %v4239
        %v4374 = vpack.c.bf16 %v4299, %v4275
        %v4375 = vpack.c.bf16 %v4311, %v4287
        %v4376 = vld [vmem:[#allocation7] sm:$0xf]
        %v4377 = vld [vmem:[#allocation7 + $0x4] sm:$0xf]
        %v4378 = vld [vmem:[#allocation7 + $0x8] sm:$0xf]
        %v4379 = vld [vmem:[#allocation7 + $0xc] sm:$0xf]
        %v4380 = vld [vmem:[#allocation7 + $0x10] sm:$0xf]
        %v4381 = vld [vmem:[#allocation7 + $0x14] sm:$0xf]
        %v4382 = vld [vmem:[#allocation7 + $0x18] sm:$0xf]
        %v4383 = vld [vmem:[#allocation7 + $0x1c] sm:$0xf]
        %v4384 = vld [vmem:[#allocation7 + $0x20] sm:$0xf]
        %v4385 = vld [vmem:[#allocation7 + $0x24] sm:$0xf]
        %v4386 = vld [vmem:[#allocation7 + $0x28] sm:$0xf]
        %v4387 = vld [vmem:[#allocation7 + $0x2c] sm:$0xf]
        %v4388 = vld [vmem:[#allocation7 + $0x30] sm:$0xf]
        %v4389 = vld [vmem:[#allocation7 + $0x34] sm:$0xf]
        %v4390 = vld [vmem:[#allocation7 + $0x38] sm:$0xf]
        %v4391 = vld [vmem:[#allocation7 + $0x3c] sm:$0xf]
        %v4392 = vld [vmem:[#allocation7 + $0x40] sm:$0xf]
        %v4393 = vld [vmem:[#allocation7 + $0x44] sm:$0xf]
        %v4394 = vld [vmem:[#allocation7 + $0x48] sm:$0xf]
        %v4395 = vld [vmem:[#allocation7 + $0x4c] sm:$0xf]
        %v4396 = vld [vmem:[#allocation7 + $0x50] sm:$0xf]
        %v4397 = vld [vmem:[#allocation7 + $0x54] sm:$0xf]
        %v4398 = vld [vmem:[#allocation7 + $0x58] sm:$0xf]
        %v4399 = vld [vmem:[#allocation7 + $0x5c] sm:$0xf]
        %v4400 = vld [vmem:[#allocation7 + $0x60] sm:$0xf]
        %v4401 = vld [vmem:[#allocation7 + $0x64] sm:$0xf]
        %v4402 = vld [vmem:[#allocation7 + $0x68] sm:$0xf]
        %v4403 = vld [vmem:[#allocation7 + $0x6c] sm:$0xf]
        %v4404 = vld [vmem:[#allocation7 + $0x70] sm:$0xf]
        %v4405 = vld [vmem:[#allocation7 + $0x74] sm:$0xf]
        %v4406 = vld [vmem:[#allocation7 + $0x78] sm:$0xf]
        %v4407 = vld [vmem:[#allocation7 + $0x7c] sm:$0xf]
        %v4440 = vunpack.c.l.b16 %v4376
        %v4441 = vunpack.c.l.b16 %v4377
        %v4442 = vunpack.c.l.b16 %v4378
        %v4443 = vunpack.c.l.b16 %v4379
        %v4444 = vunpack.c.l.b16 %v4380
        %v4445 = vunpack.c.l.b16 %v4381
        %v4446 = vunpack.c.l.b16 %v4382
        %v4447 = vunpack.c.l.b16 %v4383
        %v4448 = vunpack.c.l.b16 %v4384
        %v4449 = vunpack.c.l.b16 %v4385
        %v4450 = vunpack.c.l.b16 %v4386
        %v4451 = vunpack.c.l.b16 %v4387
        %v4452 = vunpack.c.l.b16 %v4388
        %v4453 = vunpack.c.l.b16 %v4389
        %v4454 = vunpack.c.l.b16 %v4390
        %v4455 = vunpack.c.l.b16 %v4391
        %v4456 = vunpack.c.l.b16 %v4392
        %v4457 = vunpack.c.l.b16 %v4393
        %v4458 = vunpack.c.l.b16 %v4394
        %v4459 = vunpack.c.l.b16 %v4395
        %v4460 = vunpack.c.l.b16 %v4396
        %v4461 = vunpack.c.l.b16 %v4397
        %v4462 = vunpack.c.l.b16 %v4398
        %v4463 = vunpack.c.l.b16 %v4399
        %v4464 = vunpack.c.l.b16 %v4400
        %v4465 = vunpack.c.l.b16 %v4401
        %v4466 = vunpack.c.l.b16 %v4402
        %v4467 = vunpack.c.l.b16 %v4403
        %v4468 = vunpack.c.l.b16 %v4404
        %v4469 = vunpack.c.l.b16 %v4405
        %v4470 = vunpack.c.l.b16 %v4406
        %v4471 = vunpack.c.l.b16 %v4407
        %v4472 = vpack.c.b16 %v4441, %v4440
        %v4473 = vpack.c.b16 %v4443, %v4442
        %v4474 = vpack.c.b16 %v4445, %v4444
        %v4475 = vpack.c.b16 %v4447, %v4446
        %v4476 = vpack.c.b16 %v4449, %v4448
        %v4477 = vpack.c.b16 %v4451, %v4450
        %v4478 = vpack.c.b16 %v4453, %v4452
        %v4479 = vpack.c.b16 %v4455, %v4454
        %v4480 = vpack.c.b16 %v4457, %v4456
        %v4481 = vpack.c.b16 %v4459, %v4458
        %v4482 = vpack.c.b16 %v4461, %v4460
        %v4483 = vpack.c.b16 %v4463, %v4462
        %v4484 = vpack.c.b16 %v4465, %v4464
        %v4485 = vpack.c.b16 %v4467, %v4466
        %v4486 = vpack.c.b16 %v4469, %v4468
        %v4487 = vpack.c.b16 %v4471, %v4470
        %4504 = vmatpush.bf16.msra.mxu0 %v4479
        %4505 = vmatpush.bf16.msra.mxu0 %v4478
        %4506 = vmatpush.bf16.msra.mxu0 %v4477
        %4507 = vmatpush.bf16.msra.mxu0 %v4476
        %4508 = vmatpush.bf16.msra.mxu0 %v4475
        %4509 = vmatpush.bf16.msra.mxu0 %v4474
        %4510 = vmatpush.bf16.msra.mxu0 %v4473
        %4511 = vmatpush.bf16.msra.mxu0 %v4472
        %4512 = vmatmul.bf16.gmra.mxu0 %v4312
        %v4513 = vpop.f32.mrf.mxu0
        %v4514 = vadd.f32 0.0, %v4513
        %v4515 = vpop.f32.mrf.mxu0
        %v4516 = vadd.f32 0.0, %v4515
        %4517 = vmatmul.bf16.gmra.mxu0 %v4314
        %v4518 = vpop.f32.mrf.mxu0
        %v4519 = vadd.f32 0.0, %v4518
        %v4520 = vpop.f32.mrf.mxu0
        %v4521 = vadd.f32 0.0, %v4520
        %4522 = vmatmul.bf16.gmra.mxu0 %v4316
        %v4523 = vpop.f32.mrf.mxu0
        %v4524 = vadd.f32 0.0, %v4523
        %v4525 = vpop.f32.mrf.mxu0
        %v4526 = vadd.f32 0.0, %v4525
        %4527 = vmatmul.bf16.gmra.mxu0 %v4318
        %v4528 = vpop.f32.mrf.mxu0
        %v4529 = vadd.f32 0.0, %v4528
        %v4530 = vpop.f32.mrf.mxu0
        %v4531 = vadd.f32 0.0, %v4530
        %4532 = vmatmul.bf16.gmra.mxu0 %v4320
        %v4533 = vpop.f32.mrf.mxu0
        %v4534 = vadd.f32 0.0, %v4533
        %v4535 = vpop.f32.mrf.mxu0
        %v4536 = vadd.f32 0.0, %v4535
        %4537 = vmatmul.bf16.gmra.mxu0 %v4322
        %v4538 = vpop.f32.mrf.mxu0
        %v4539 = vadd.f32 0.0, %v4538
        %v4540 = vpop.f32.mrf.mxu0
        %v4541 = vadd.f32 0.0, %v4540
        %4542 = vmatmul.bf16.gmra.mxu0 %v4324
        %v4543 = vpop.f32.mrf.mxu0
        %v4544 = vadd.f32 0.0, %v4543
        %v4545 = vpop.f32.mrf.mxu0
        %v4546 = vadd.f32 0.0, %v4545
        %4547 = vmatmul.bf16.gmra.mxu0 %v4326
        %v4548 = vpop.f32.mrf.mxu0
        %v4549 = vadd.f32 0.0, %v4548
        %v4550 = vpop.f32.mrf.mxu0
        %v4551 = vadd.f32 0.0, %v4550
        %4552 = vmatmul.bf16.gmra.mxu0 %v4328
        %v4553 = vpop.f32.mrf.mxu0
        %v4554 = vadd.f32 0.0, %v4553
        %v4555 = vpop.f32.mrf.mxu0
        %v4556 = vadd.f32 0.0, %v4555
        %4557 = vmatmul.bf16.gmra.mxu0 %v4330
        %v4558 = vpop.f32.mrf.mxu0
        %v4559 = vadd.f32 0.0, %v4558
        %v4560 = vpop.f32.mrf.mxu0
        %v4561 = vadd.f32 0.0, %v4560
        %4562 = vmatmul.bf16.gmra.mxu0 %v4332
        %v4563 = vpop.f32.mrf.mxu0
        %v4564 = vadd.f32 0.0, %v4563
        %v4565 = vpop.f32.mrf.mxu0
        %v4566 = vadd.f32 0.0, %v4565
        %4567 = vmatmul.bf16.gmra.mxu0 %v4334
        %v4568 = vpop.f32.mrf.mxu0
        %v4569 = vadd.f32 0.0, %v4568
        %v4570 = vpop.f32.mrf.mxu0
        %v4571 = vadd.f32 0.0, %v4570
        %4572 = vmatmul.bf16.gmra.mxu0 %v4336
        %v4573 = vpop.f32.mrf.mxu0
        %v4574 = vadd.f32 0.0, %v4573
        %v4575 = vpop.f32.mrf.mxu0
        %v4576 = vadd.f32 0.0, %v4575
        %4577 = vmatmul.bf16.gmra.mxu0 %v4338
        %v4578 = vpop.f32.mrf.mxu0
        %v4579 = vadd.f32 0.0, %v4578
        %v4580 = vpop.f32.mrf.mxu0
        %v4581 = vadd.f32 0.0, %v4580
        %4582 = vmatmul.bf16.gmra.mxu0 %v4340
        %v4583 = vpop.f32.mrf.mxu0
        %v4584 = vadd.f32 0.0, %v4583
        %v4585 = vpop.f32.mrf.mxu0
        %v4586 = vadd.f32 0.0, %v4585
        %4587 = vmatmul.bf16.gmra.mxu0 %v4342
        %v4588 = vpop.f32.mrf.mxu0
        %v4589 = vadd.f32 0.0, %v4588
        %v4590 = vpop.f32.mrf.mxu0
        %v4591 = vadd.f32 0.0, %v4590
        %4592 = vmatmul.bf16.gmra.mxu0 %v4344
        %v4593 = vpop.f32.mrf.mxu0
        %v4594 = vadd.f32 0.0, %v4593
        %v4595 = vpop.f32.mrf.mxu0
        %v4596 = vadd.f32 0.0, %v4595
        %4597 = vmatmul.bf16.gmra.mxu0 %v4346
        %v4598 = vpop.f32.mrf.mxu0
        %v4599 = vadd.f32 0.0, %v4598
        %v4600 = vpop.f32.mrf.mxu0
        %v4601 = vadd.f32 0.0, %v4600
        %4602 = vmatmul.bf16.gmra.mxu0 %v4348
        %v4603 = vpop.f32.mrf.mxu0
        %v4604 = vadd.f32 0.0, %v4603
        %v4605 = vpop.f32.mrf.mxu0
        %v4606 = vadd.f32 0.0, %v4605
        %4607 = vmatmul.bf16.gmra.mxu0 %v4350
        %v4608 = vpop.f32.mrf.mxu0
        %v4609 = vadd.f32 0.0, %v4608
        %v4610 = vpop.f32.mrf.mxu0
        %v4611 = vadd.f32 0.0, %v4610
        %4612 = vmatmul.bf16.gmra.mxu0 %v4352
        %v4613 = vpop.f32.mrf.mxu0
        %v4614 = vadd.f32 0.0, %v4613
        %v4615 = vpop.f32.mrf.mxu0
        %v4616 = vadd.f32 0.0, %v4615
        %4617 = vmatmul.bf16.gmra.mxu0 %v4354
        %v4618 = vpop.f32.mrf.mxu0
        %v4619 = vadd.f32 0.0, %v4618
        %v4620 = vpop.f32.mrf.mxu0
        %v4621 = vadd.f32 0.0, %v4620
        %4622 = vmatmul.bf16.gmra.mxu0 %v4356
        %v4623 = vpop.f32.mrf.mxu0
        %v4624 = vadd.f32 0.0, %v4623
        %v4625 = vpop.f32.mrf.mxu0
        %v4626 = vadd.f32 0.0, %v4625
        %4627 = vmatmul.bf16.gmra.mxu0 %v4358
        %v4628 = vpop.f32.mrf.mxu0
        %v4629 = vadd.f32 0.0, %v4628
        %v4630 = vpop.f32.mrf.mxu0
        %v4631 = vadd.f32 0.0, %v4630
        %4632 = vmatmul.bf16.gmra.mxu0 %v4360
        %v4633 = vpop.f32.mrf.mxu0
        %v4634 = vadd.f32 0.0, %v4633
        %v4635 = vpop.f32.mrf.mxu0
        %v4636 = vadd.f32 0.0, %v4635
        %4637 = vmatmul.bf16.gmra.mxu0 %v4362
        %v4638 = vpop.f32.mrf.mxu0
        %v4639 = vadd.f32 0.0, %v4638
        %v4640 = vpop.f32.mrf.mxu0
        %v4641 = vadd.f32 0.0, %v4640
        %4642 = vmatmul.bf16.gmra.mxu0 %v4364
        %v4643 = vpop.f32.mrf.mxu0
        %v4644 = vadd.f32 0.0, %v4643
        %v4645 = vpop.f32.mrf.mxu0
        %v4646 = vadd.f32 0.0, %v4645
        %4647 = vmatmul.bf16.gmra.mxu0 %v4366
        %v4648 = vpop.f32.mrf.mxu0
        %v4649 = vadd.f32 0.0, %v4648
        %v4650 = vpop.f32.mrf.mxu0
        %v4651 = vadd.f32 0.0, %v4650
        %4652 = vmatmul.bf16.gmra.mxu0 %v4368
        %v4653 = vpop.f32.mrf.mxu0
        %v4654 = vadd.f32 0.0, %v4653
        %v4655 = vpop.f32.mrf.mxu0
        %v4656 = vadd.f32 0.0, %v4655
        %4657 = vmatmul.bf16.gmra.mxu0 %v4370
        %v4658 = vpop.f32.mrf.mxu0
        %v4659 = vadd.f32 0.0, %v4658
        %v4660 = vpop.f32.mrf.mxu0
        %v4661 = vadd.f32 0.0, %v4660
        %4662 = vmatmul.bf16.gmra.mxu0 %v4372
        %v4663 = vpop.f32.mrf.mxu0
        %v4664 = vadd.f32 0.0, %v4663
        %v4665 = vpop.f32.mrf.mxu0
        %v4666 = vadd.f32 0.0, %v4665
        %4667 = vmatmul.bf16.gmra.mxu0 %v4374
        %v4668 = vpop.f32.mrf.mxu0
        %v4669 = vadd.f32 0.0, %v4668
        %v4670 = vpop.f32.mrf.mxu0
        %v4671 = vadd.f32 0.0, %v4670
        %4672 = vdwg.mxu0
        %4673 = vmatpush.bf16.msra.mxu0 %v4487
        %4674 = vmatpush.bf16.msra.mxu0 %v4486
        %4675 = vmatpush.bf16.msra.mxu0 %v4485
        %4676 = vmatpush.bf16.msra.mxu0 %v4484
        %4677 = vmatpush.bf16.msra.mxu0 %v4483
        %4678 = vmatpush.bf16.msra.mxu0 %v4482
        %4679 = vmatpush.bf16.msra.mxu0 %v4481
        %4680 = vmatpush.bf16.msra.mxu0 %v4480
        %4681 = vmatmul.bf16.gmra.mxu0 %v4313
        %v4682 = vpop.f32.mrf.mxu0
        %v4683 = vadd.f32 %v4514, %v4682
        %v4684 = vpop.f32.mrf.mxu0
        %v4685 = vadd.f32 %v4516, %v4684
        %4686 = vmatmul.bf16.gmra.mxu0 %v4315
        %v4687 = vpop.f32.mrf.mxu0
        %v4688 = vadd.f32 %v4519, %v4687
        %v4689 = vpop.f32.mrf.mxu0
        %v4690 = vadd.f32 %v4521, %v4689
        %4691 = vmatmul.bf16.gmra.mxu0 %v4317
        %v4692 = vpop.f32.mrf.mxu0
        %v4693 = vadd.f32 %v4524, %v4692
        %v4694 = vpop.f32.mrf.mxu0
        %v4695 = vadd.f32 %v4526, %v4694
        %4696 = vmatmul.bf16.gmra.mxu0 %v4319
        %v4697 = vpop.f32.mrf.mxu0
        %v4698 = vadd.f32 %v4529, %v4697
        %v4699 = vpop.f32.mrf.mxu0
        %v4700 = vadd.f32 %v4531, %v4699
        %4701 = vmatmul.bf16.gmra.mxu0 %v4321
        %v4702 = vpop.f32.mrf.mxu0
        %v4703 = vadd.f32 %v4534, %v4702
        %v4704 = vpop.f32.mrf.mxu0
        %v4705 = vadd.f32 %v4536, %v4704
        %4706 = vmatmul.bf16.gmra.mxu0 %v4323
        %v4707 = vpop.f32.mrf.mxu0
        %v4708 = vadd.f32 %v4539, %v4707
        %v4709 = vpop.f32.mrf.mxu0
        %v4710 = vadd.f32 %v4541, %v4709
        %4711 = vmatmul.bf16.gmra.mxu0 %v4325
        %v4712 = vpop.f32.mrf.mxu0
        %v4713 = vadd.f32 %v4544, %v4712
        %v4714 = vpop.f32.mrf.mxu0
        %v4715 = vadd.f32 %v4546, %v4714
        %4716 = vmatmul.bf16.gmra.mxu0 %v4327
        %v4717 = vpop.f32.mrf.mxu0
        %v4718 = vadd.f32 %v4549, %v4717
        %v4719 = vpop.f32.mrf.mxu0
        %v4720 = vadd.f32 %v4551, %v4719
        %4721 = vmatmul.bf16.gmra.mxu0 %v4329
        %v4722 = vpop.f32.mrf.mxu0
        %v4723 = vadd.f32 %v4554, %v4722
        %v4724 = vpop.f32.mrf.mxu0
        %v4725 = vadd.f32 %v4556, %v4724
        %4726 = vmatmul.bf16.gmra.mxu0 %v4331
        %v4727 = vpop.f32.mrf.mxu0
        %v4728 = vadd.f32 %v4559, %v4727
        %v4729 = vpop.f32.mrf.mxu0
        %v4730 = vadd.f32 %v4561, %v4729
        %4731 = vmatmul.bf16.gmra.mxu0 %v4333
        %v4732 = vpop.f32.mrf.mxu0
        %v4733 = vadd.f32 %v4564, %v4732
        %v4734 = vpop.f32.mrf.mxu0
        %v4735 = vadd.f32 %v4566, %v4734
        %4736 = vmatmul.bf16.gmra.mxu0 %v4335
        %v4737 = vpop.f32.mrf.mxu0
        %v4738 = vadd.f32 %v4569, %v4737
        %v4739 = vpop.f32.mrf.mxu0
        %v4740 = vadd.f32 %v4571, %v4739
        %4741 = vmatmul.bf16.gmra.mxu0 %v4337
        %v4742 = vpop.f32.mrf.mxu0
        %v4743 = vadd.f32 %v4574, %v4742
        %v4744 = vpop.f32.mrf.mxu0
        %v4745 = vadd.f32 %v4576, %v4744
        %4746 = vmatmul.bf16.gmra.mxu0 %v4339
        %v4747 = vpop.f32.mrf.mxu0
        %v4748 = vadd.f32 %v4579, %v4747
        %v4749 = vpop.f32.mrf.mxu0
        %v4750 = vadd.f32 %v4581, %v4749
        %4751 = vmatmul.bf16.gmra.mxu0 %v4341
        %v4752 = vpop.f32.mrf.mxu0
        %v4753 = vadd.f32 %v4584, %v4752
        %v4754 = vpop.f32.mrf.mxu0
        %v4755 = vadd.f32 %v4586, %v4754
        %4756 = vmatmul.bf16.gmra.mxu0 %v4343
        %v4757 = vpop.f32.mrf.mxu0
        %v4758 = vadd.f32 %v4589, %v4757
        %v4759 = vpop.f32.mrf.mxu0
        %v4760 = vadd.f32 %v4591, %v4759
        %4761 = vmatmul.bf16.gmra.mxu0 %v4345
        %v4762 = vpop.f32.mrf.mxu0
        %v4763 = vadd.f32 %v4594, %v4762
        %v4764 = vpop.f32.mrf.mxu0
        %v4765 = vadd.f32 %v4596, %v4764
        %4766 = vmatmul.bf16.gmra.mxu0 %v4347
        %v4767 = vpop.f32.mrf.mxu0
        %v4768 = vadd.f32 %v4599, %v4767
        %v4769 = vpop.f32.mrf.mxu0
        %v4770 = vadd.f32 %v4601, %v4769
        %4771 = vmatmul.bf16.gmra.mxu0 %v4349
        %v4772 = vpop.f32.mrf.mxu0
        %v4773 = vadd.f32 %v4604, %v4772
        %v4774 = vpop.f32.mrf.mxu0
        %v4775 = vadd.f32 %v4606, %v4774
        %4776 = vmatmul.bf16.gmra.mxu0 %v4351
        %v4777 = vpop.f32.mrf.mxu0
        %v4778 = vadd.f32 %v4609, %v4777
        %v4779 = vpop.f32.mrf.mxu0
        %v4780 = vadd.f32 %v4611, %v4779
        %4781 = vmatmul.bf16.gmra.mxu0 %v4353
        %v4782 = vpop.f32.mrf.mxu0
        %v4783 = vadd.f32 %v4614, %v4782
        %v4784 = vpop.f32.mrf.mxu0
        %v4785 = vadd.f32 %v4616, %v4784
        %4786 = vmatmul.bf16.gmra.mxu0 %v4355
        %v4787 = vpop.f32.mrf.mxu0
        %v4788 = vadd.f32 %v4619, %v4787
        %v4789 = vpop.f32.mrf.mxu0
        %v4790 = vadd.f32 %v4621, %v4789
        %4791 = vmatmul.bf16.gmra.mxu0 %v4357
        %v4792 = vpop.f32.mrf.mxu0
        %v4793 = vadd.f32 %v4624, %v4792
        %v4794 = vpop.f32.mrf.mxu0
        %v4795 = vadd.f32 %v4626, %v4794
        %4796 = vmatmul.bf16.gmra.mxu0 %v4359
        %v4797 = vpop.f32.mrf.mxu0
        %v4798 = vadd.f32 %v4629, %v4797
        %v4799 = vpop.f32.mrf.mxu0
        %v4800 = vadd.f32 %v4631, %v4799
        %4801 = vmatmul.bf16.gmra.mxu0 %v4361
        %v4802 = vpop.f32.mrf.mxu0
        %v4803 = vadd.f32 %v4634, %v4802
        %v4804 = vpop.f32.mrf.mxu0
        %v4805 = vadd.f32 %v4636, %v4804
        %4806 = vmatmul.bf16.gmra.mxu0 %v4363
        %v4807 = vpop.f32.mrf.mxu0
        %v4808 = vadd.f32 %v4639, %v4807
        %v4809 = vpop.f32.mrf.mxu0
        %v4810 = vadd.f32 %v4641, %v4809
        %4811 = vmatmul.bf16.gmra.mxu0 %v4365
        %v4812 = vpop.f32.mrf.mxu0
        %v4813 = vadd.f32 %v4644, %v4812
        %v4814 = vpop.f32.mrf.mxu0
        %v4815 = vadd.f32 %v4646, %v4814
        %4816 = vmatmul.bf16.gmra.mxu0 %v4367
        %v4817 = vpop.f32.mrf.mxu0
        %v4818 = vadd.f32 %v4649, %v4817
        %v4819 = vpop.f32.mrf.mxu0
        %v4820 = vadd.f32 %v4651, %v4819
        %4821 = vmatmul.bf16.gmra.mxu0 %v4369
        %v4822 = vpop.f32.mrf.mxu0
        %v4823 = vadd.f32 %v4654, %v4822
        %v4824 = vpop.f32.mrf.mxu0
        %v4825 = vadd.f32 %v4656, %v4824
        %4826 = vmatmul.bf16.gmra.mxu0 %v4371
        %v4827 = vpop.f32.mrf.mxu0
        %v4828 = vadd.f32 %v4659, %v4827
        %v4829 = vpop.f32.mrf.mxu0
        %v4830 = vadd.f32 %v4661, %v4829
        %4831 = vmatmul.bf16.gmra.mxu0 %v4373
        %v4832 = vpop.f32.mrf.mxu0
        %v4833 = vadd.f32 %v4664, %v4832
        %v4834 = vpop.f32.mrf.mxu0
        %v4835 = vadd.f32 %v4666, %v4834
        %4836 = vmatmul.bf16.gmra.mxu0 %v4375
        %v4837 = vpop.f32.mrf.mxu0
        %v4838 = vadd.f32 %v4669, %v4837
        %v4839 = vpop.f32.mrf.mxu0
        %v4840 = vadd.f32 %v4671, %v4839
        %4841 = vdwg.mxu0
        %v4842 = vmax.f32 %v4683, 1e-07
        %v4843 = vmax.f32 %v4685, 1e-07
        %v4844 = vmax.f32 %v4688, 1e-07
        %v4845 = vmax.f32 %v4690, 1e-07
        %v4846 = vmax.f32 %v4693, 1e-07
        %v4847 = vmax.f32 %v4695, 1e-07
        %v4848 = vmax.f32 %v4698, 1e-07
        %v4849 = vmax.f32 %v4700, 1e-07
        %v4850 = vmax.f32 %v4703, 1e-07
        %v4851 = vmax.f32 %v4705, 1e-07
        %v4852 = vmax.f32 %v4708, 1e-07
        %v4853 = vmax.f32 %v4710, 1e-07
        %v4854 = vmax.f32 %v4713, 1e-07
        %v4855 = vmax.f32 %v4715, 1e-07
        %v4856 = vmax.f32 %v4718, 1e-07
        %v4857 = vmax.f32 %v4720, 1e-07
        %v4858 = vmax.f32 %v4723, 1e-07
        %v4859 = vmax.f32 %v4725, 1e-07
        %v4860 = vmax.f32 %v4728, 1e-07
        %v4861 = vmax.f32 %v4730, 1e-07
        %v4862 = vmax.f32 %v4733, 1e-07
        %v4863 = vmax.f32 %v4735, 1e-07
        %v4864 = vmax.f32 %v4738, 1e-07
        %v4865 = vmax.f32 %v4740, 1e-07
        %v4866 = vmax.f32 %v4743, 1e-07
        %v4867 = vmax.f32 %v4745, 1e-07
        %v4868 = vmax.f32 %v4748, 1e-07
        %v4869 = vmax.f32 %v4750, 1e-07
        %v4870 = vmax.f32 %v4753, 1e-07
        %v4871 = vmax.f32 %v4755, 1e-07
        %v4872 = vmax.f32 %v4758, 1e-07
        %v4873 = vmax.f32 %v4760, 1e-07
        %v4874 = vmax.f32 %v4763, 1e-07
        %v4875 = vmax.f32 %v4765, 1e-07
        %v4876 = vmax.f32 %v4768, 1e-07
        %v4877 = vmax.f32 %v4770, 1e-07
        %v4878 = vmax.f32 %v4773, 1e-07
        %v4879 = vmax.f32 %v4775, 1e-07
        %v4880 = vmax.f32 %v4778, 1e-07
        %v4881 = vmax.f32 %v4780, 1e-07
        %v4882 = vmax.f32 %v4783, 1e-07
        %v4883 = vmax.f32 %v4785, 1e-07
        %v4884 = vmax.f32 %v4788, 1e-07
        %v4885 = vmax.f32 %v4790, 1e-07
        %v4886 = vmax.f32 %v4793, 1e-07
        %v4887 = vmax.f32 %v4795, 1e-07
        %v4888 = vmax.f32 %v4798, 1e-07
        %v4889 = vmax.f32 %v4800, 1e-07
        %v4890 = vmax.f32 %v4803, 1e-07
        %v4891 = vmax.f32 %v4805, 1e-07
        %v4892 = vmax.f32 %v4808, 1e-07
        %v4893 = vmax.f32 %v4810, 1e-07
        %v4894 = vmax.f32 %v4813, 1e-07
        %v4895 = vmax.f32 %v4815, 1e-07
        %v4896 = vmax.f32 %v4818, 1e-07
        %v4897 = vmax.f32 %v4820, 1e-07
        %v4898 = vmax.f32 %v4823, 1e-07
        %v4899 = vmax.f32 %v4825, 1e-07
        %v4900 = vmax.f32 %v4828, 1e-07
        %v4901 = vmax.f32 %v4830, 1e-07
        %v4902 = vmax.f32 %v4833, 1e-07
        %v4903 = vmax.f32 %v4835, 1e-07
        %v4904 = vmax.f32 %v4838, 1e-07
        %v4905 = vmax.f32 %v4840, 1e-07
        %v4906 = vlog2.pop %v4842
        %v4907 = vmul.f32 %v4906, 0.6931472
        %v4908 = vlog2.pop %v4843
        %v4909 = vmul.f32 %v4908, 0.6931472
        %v4910 = vlog2.pop %v4844
        %v4911 = vmul.f32 %v4910, 0.6931472
        %v4912 = vlog2.pop %v4845
        %v4913 = vmul.f32 %v4912, 0.6931472
        %v4914 = vlog2.pop %v4846
        %v4915 = vmul.f32 %v4914, 0.6931472
        %v4916 = vlog2.pop %v4847
        %v4917 = vmul.f32 %v4916, 0.6931472
        %v4918 = vlog2.pop %v4848
        %v4919 = vmul.f32 %v4918, 0.6931472
        %v4920 = vlog2.pop %v4849
        %v4921 = vmul.f32 %v4920, 0.6931472
        %v4922 = vlog2.pop %v4850
        %v4923 = vmul.f32 %v4922, 0.6931472
        %v4924 = vlog2.pop %v4851
        %v4925 = vmul.f32 %v4924, 0.6931472
        %v4926 = vlog2.pop %v4852
        %v4927 = vmul.f32 %v4926, 0.6931472
        %v4928 = vlog2.pop %v4853
        %v4929 = vmul.f32 %v4928, 0.6931472
        %v4930 = vlog2.pop %v4854
        %v4931 = vmul.f32 %v4930, 0.6931472
        %v4932 = vlog2.pop %v4855
        %v4933 = vmul.f32 %v4932, 0.6931472
        %v4934 = vlog2.pop %v4856
        %v4935 = vmul.f32 %v4934, 0.6931472
        %v4936 = vlog2.pop %v4857
        %v4937 = vmul.f32 %v4936, 0.6931472
        %v4938 = vlog2.pop %v4858
        %v4939 = vmul.f32 %v4938, 0.6931472
        %v4940 = vlog2.pop %v4859
        %v4941 = vmul.f32 %v4940, 0.6931472
        %v4942 = vlog2.pop %v4860
        %v4943 = vmul.f32 %v4942, 0.6931472
        %v4944 = vlog2.pop %v4861
        %v4945 = vmul.f32 %v4944, 0.6931472
        %v4946 = vlog2.pop %v4862
        %v4947 = vmul.f32 %v4946, 0.6931472
        %v4948 = vlog2.pop %v4863
        %v4949 = vmul.f32 %v4948, 0.6931472
        %v4950 = vlog2.pop %v4864
        %v4951 = vmul.f32 %v4950, 0.6931472
        %v4952 = vlog2.pop %v4865
        %v4953 = vmul.f32 %v4952, 0.6931472
        %v4954 = vlog2.pop %v4866
        %v4955 = vmul.f32 %v4954, 0.6931472
        %v4956 = vlog2.pop %v4867
        %v4957 = vmul.f32 %v4956, 0.6931472
        %v4958 = vlog2.pop %v4868
        %v4959 = vmul.f32 %v4958, 0.6931472
        %v4960 = vlog2.pop %v4869
        %v4961 = vmul.f32 %v4960, 0.6931472
        %v4962 = vlog2.pop %v4870
        %v4963 = vmul.f32 %v4962, 0.6931472
        %v4964 = vlog2.pop %v4871
        %v4965 = vmul.f32 %v4964, 0.6931472
        %v4966 = vlog2.pop %v4872
        %v4967 = vmul.f32 %v4966, 0.6931472
        %v4968 = vlog2.pop %v4873
        %v4969 = vmul.f32 %v4968, 0.6931472
        %v4970 = vlog2.pop %v4874
        %v4971 = vmul.f32 %v4970, 0.6931472
        %v4972 = vlog2.pop %v4875
        %v4973 = vmul.f32 %v4972, 0.6931472
        %v4974 = vlog2.pop %v4876
        %v4975 = vmul.f32 %v4974, 0.6931472
        %v4976 = vlog2.pop %v4877
        %v4977 = vmul.f32 %v4976, 0.6931472
        %v4978 = vlog2.pop %v4878
        %v4979 = vmul.f32 %v4978, 0.6931472
        %v4980 = vlog2.pop %v4879
        %v4981 = vmul.f32 %v4980, 0.6931472
        %v4982 = vlog2.pop %v4880
        %v4983 = vmul.f32 %v4982, 0.6931472
        %v4984 = vlog2.pop %v4881
        %v4985 = vmul.f32 %v4984, 0.6931472
        %v4986 = vlog2.pop %v4882
        %v4987 = vmul.f32 %v4986, 0.6931472
        %v4988 = vlog2.pop %v4883
        %v4989 = vmul.f32 %v4988, 0.6931472
        %v4990 = vlog2.pop %v4884
        %v4991 = vmul.f32 %v4990, 0.6931472
        %v4992 = vlog2.pop %v4885
        %v4993 = vmul.f32 %v4992, 0.6931472
        %v4994 = vlog2.pop %v4886
        %v4995 = vmul.f32 %v4994, 0.6931472
        %v4996 = vlog2.pop %v4887
        %v4997 = vmul.f32 %v4996, 0.6931472
        %v4998 = vlog2.pop %v4888
        %v4999 = vmul.f32 %v4998, 0.6931472
        %v5000 = vlog2.pop %v4889
        %v5001 = vmul.f32 %v5000, 0.6931472
        %v5002 = vlog2.pop %v4890
        %v5003 = vmul.f32 %v5002, 0.6931472
        %v5004 = vlog2.pop %v4891
        %v5005 = vmul.f32 %v5004, 0.6931472
        %v5006 = vlog2.pop %v4892
        %v5007 = vmul.f32 %v5006, 0.6931472
        %v5008 = vlog2.pop %v4893
        %v5009 = vmul.f32 %v5008, 0.6931472
        %v5010 = vlog2.pop %v4894
        %v5011 = vmul.f32 %v5010, 0.6931472
        %v5012 = vlog2.pop %v4895
        %v5013 = vmul.f32 %v5012, 0.6931472
        %v5014 = vlog2.pop %v4896
        %v5015 = vmul.f32 %v5014, 0.6931472
        %v5016 = vlog2.pop %v4897
        %v5017 = vmul.f32 %v5016, 0.6931472
        %v5018 = vlog2.pop %v4898
        %v5019 = vmul.f32 %v5018, 0.6931472
        %v5020 = vlog2.pop %v4899
        %v5021 = vmul.f32 %v5020, 0.6931472
        %v5022 = vlog2.pop %v4900
        %v5023 = vmul.f32 %v5022, 0.6931472
        %v5024 = vlog2.pop %v4901
        %v5025 = vmul.f32 %v5024, 0.6931472
        %v5026 = vlog2.pop %v4902
        %v5027 = vmul.f32 %v5026, 0.6931472
        %v5028 = vlog2.pop %v4903
        %v5029 = vmul.f32 %v5028, 0.6931472
        %v5030 = vlog2.pop %v4904
        %v5031 = vmul.f32 %v5030, 0.6931472
        %v5032 = vlog2.pop %v4905
        %v5033 = vmul.f32 %v5032, 0.6931472
        %v5034 = vsub.f32 %v4971, %v4907
        %v5035 = vsub.f32 %v4973, %v4909
        %v5036 = vsub.f32 %v4975, %v4911
        %v5037 = vsub.f32 %v4977, %v4913
        %v5038 = vsub.f32 %v4979, %v4915
        %v5039 = vsub.f32 %v4981, %v4917
        %v5040 = vsub.f32 %v4983, %v4919
        %v5041 = vsub.f32 %v4985, %v4921
        %v5042 = vsub.f32 %v4987, %v4923
        %v5043 = vsub.f32 %v4989, %v4925
        %v5044 = vsub.f32 %v4991, %v4927
        %v5045 = vsub.f32 %v4993, %v4929
        %v5046 = vsub.f32 %v4995, %v4931
        %v5047 = vsub.f32 %v4997, %v4933
        %v5048 = vsub.f32 %v4999, %v4935
        %v5049 = vsub.f32 %v5001, %v4937
        %v5050 = vsub.f32 %v5003, %v4939
        %v5051 = vsub.f32 %v5005, %v4941
        %v5052 = vsub.f32 %v5007, %v4943
        %v5053 = vsub.f32 %v5009, %v4945
        %v5054 = vsub.f32 %v5011, %v4947
        %v5055 = vsub.f32 %v5013, %v4949
        %v5056 = vsub.f32 %v5015, %v4951
        %v5057 = vsub.f32 %v5017, %v4953
        %v5058 = vsub.f32 %v5019, %v4955
        %v5059 = vsub.f32 %v5021, %v4957
        %v5060 = vsub.f32 %v5023, %v4959
        %v5061 = vsub.f32 %v5025, %v4961
        %v5062 = vsub.f32 %v5027, %v4963
        %v5063 = vsub.f32 %v5029, %v4965
        %v5064 = vsub.f32 %v5031, %v4967
        %v5065 = vsub.f32 %v5033, %v4969
        %v5066 = vand.u32 2147483647, %v5034
        %v5067 = vand.u32 2147483647, %v5035
        %v5068 = vand.u32 2147483647, %v5036
        %v5069 = vand.u32 2147483647, %v5037
        %v5070 = vand.u32 2147483647, %v5038
        %v5071 = vand.u32 2147483647, %v5039
        %v5072 = vand.u32 2147483647, %v5040
        %v5073 = vand.u32 2147483647, %v5041
        %v5074 = vand.u32 2147483647, %v5042
        %v5075 = vand.u32 2147483647, %v5043
        %v5076 = vand.u32 2147483647, %v5044
        %v5077 = vand.u32 2147483647, %v5045
        %v5078 = vand.u32 2147483647, %v5046
        %v5079 = vand.u32 2147483647, %v5047
        %v5080 = vand.u32 2147483647, %v5048
        %v5081 = vand.u32 2147483647, %v5049
        %v5082 = vand.u32 2147483647, %v5050
        %v5083 = vand.u32 2147483647, %v5051
        %v5084 = vand.u32 2147483647, %v5052
        %v5085 = vand.u32 2147483647, %v5053
        %v5086 = vand.u32 2147483647, %v5054
        %v5087 = vand.u32 2147483647, %v5055
        %v5088 = vand.u32 2147483647, %v5056
        %v5089 = vand.u32 2147483647, %v5057
        %v5090 = vand.u32 2147483647, %v5058
        %v5091 = vand.u32 2147483647, %v5059
        %v5092 = vand.u32 2147483647, %v5060
        %v5093 = vand.u32 2147483647, %v5061
        %v5094 = vand.u32 2147483647, %v5062
        %v5095 = vand.u32 2147483647, %v5063
        %v5096 = vand.u32 2147483647, %v5064
        %v5097 = vand.u32 2147483647, %v5065
        %v5098 = vld [vmem:[%s264] sm:$0xff]
        %v5099 = vadd.f32 %v5066, %v5067
        %v5100 = vadd.f32 %v5099, %v5068
        %v5101 = vadd.f32 %v5100, %v5069
        %v5102 = vadd.f32 %v5101, %v5070
        %v5103 = vadd.f32 %v5102, %v5071
        %v5104 = vadd.f32 %v5103, %v5072
        %v5105 = vadd.f32 %v5104, %v5073
        %v5106 = vadd.f32 %v5105, %v5074
        %v5107 = vadd.f32 %v5106, %v5075
        %v5108 = vadd.f32 %v5107, %v5076
        %v5109 = vadd.f32 %v5108, %v5077
        %v5110 = vadd.f32 %v5109, %v5078
        %v5111 = vadd.f32 %v5110, %v5079
        %v5112 = vadd.f32 %v5111, %v5080
        %v5113 = vadd.f32 %v5112, %v5081
        %v5114 = vadd.f32 %v5113, %v5082
        %v5115 = vadd.f32 %v5114, %v5083
        %v5116 = vadd.f32 %v5115, %v5084
        %v5117 = vadd.f32 %v5116, %v5085
        %v5118 = vadd.f32 %v5117, %v5086
        %v5119 = vadd.f32 %v5118, %v5087
        %v5120 = vadd.f32 %v5119, %v5088
        %v5121 = vadd.f32 %v5120, %v5089
        %v5122 = vadd.f32 %v5121, %v5090
        %v5123 = vadd.f32 %v5122, %v5091
        %v5124 = vadd.f32 %v5123, %v5092
        %v5125 = vadd.f32 %v5124, %v5093
        %v5126 = vadd.f32 %v5125, %v5094
        %v5127 = vadd.f32 %v5126, %v5095
        %v5128 = vadd.f32 %v5127, %v5096
        %v5129 = vadd.f32 %v5128, %v5097
        %v5130 = vadd.f32 %v5098, %v5129
        %5131 = vst [vmem:[%s264] sm:$0xff] %v5130
        %s5132 = sand.u32 %s111, 1
        %s5133 = scalar_lea.sflag [#allocation4], %s5132
        %s5134 = sand.u32 %s111, 1
        %s5135 = smul.addr %s5134, 8
        %s5136 = scalar_lea.vmem [#allocation8], %s5135
        // Predicated region
        $region49: #{tpu_custom_call.1} parent=31 // pred_check
          %p5137 = pneg %p121
        $region50: #{tpu_custom_call.1} parent=31 // pred_check_branch
          %5139 = sbr.rel (%p5137) target = $region52
        $region51: #{tpu_custom_call.1} parent=31 // pred_region
          %5141 = vsyncadd %s5133, 0
          %s5142 = smul.addr %s25, 8
          %s5143 = scalar_lea.hbm %s3, %s5142
          %s5145 = sshll.u32 %s5136, 4
          %s5146 = int_to_ptr.vmem [resolvable:$true] %s5145
          %s5147 = sshll.u32 %s5143, 4
          %s5148 = int_to_ptr.hbm [resolvable:$true] %s5147
          %5150 = dma.vmem_to_hbm [thread:$0]  %s5146, 128, %s5148, %s5133
        $region52: #{tpu_custom_call.1} parent=31 // pred_fallthru
          _
      $region32: #{tpu_custom_call.1} parent=5 // pred_fallthru
        _
      %p5151 = scmp.le.s32.totalorder 2, %s16
      // Predicated region
      $region53: #{tpu_custom_call.1} parent=5 // pred_check
        %p5152 = pneg %p5151
      $region54: #{tpu_custom_call.1} parent=5 // pred_check_branch
        %5154 = sbr.rel (%p5152) target = $region56
      $region55: #{tpu_custom_call.1} parent=5 // pred_region
        %s5155 = ssub.s32 %s16, 2
        // Predicated region
        $region57: #{tpu_custom_call.1} parent=55 // pred_check
          %p5156 = pneg %p127
        $region58: #{tpu_custom_call.1} parent=55 // pred_check_branch
          %5158 = sbr.rel (%p5156) target = $region60
        $region59: #{tpu_custom_call.1} parent=55 // pred_region
          %s5159 = sand.u32 %s112, 1
          %s5160 = scalar_lea.sflag [#allocation4], %s5159
          %s5161 = sand.u32 %s112, 1
          %s5162 = smul.addr %s5161, 8
          %s5163 = scalar_lea.vmem [#allocation8], %s5162
          %5165 = dma.done %s5160, 128
        $region60: #{tpu_custom_call.1} parent=55 // pred_fallthru
          _
      $region56: #{tpu_custom_call.1} parent=5 // pred_fallthru
        _
    $region6: #{tpu_custom_call.1} parent=1 // loop_footer
      %s20 = sadd.s32 1, %s16
    $region7: #{tpu_custom_call.1} parent=1 // loop_footer_branch
      %15 = sbr.rel target = $region3
    $region8: #{tpu_custom_call.1} parent=1 // loop_exit
      _
    %5166 = vsyncpa [#allocation3], 1
    %s5167 = scalar_lea.sflag [#allocation3], 1
    %5168 = vsyncpa %s5167, 1
    %5169 = vsyncpa [#allocation6], 1
    %5170 = vsyncpa [#allocation4], 1
    %s5171 = scalar_lea.sflag [#allocation4], 1
    %5172 = vsyncpa %s5171, 1

</llo_original>
